<compile_context>
chip_gen: v7x
topology: tpu7x:2x2x1
jax: 0.10.0
libtpu: 0.0.40
codegen_flags: <defaults>
</compile_context>

<pallas_src>
import numpy as np
import jax
import jax.numpy as jnp
from jax import lax
from jax.experimental import pallas as pl
from jax.experimental.pallas import tpu as pltpu

EPS = 1e-6        # LayerNorm eps (norm_layer = partial(nn.LayerNorm, eps=1e-6))
LAMBDA = 0.01     # AFNO sparsity_threshold (softshrink lambda)


def _round_up(v, m):
    return (v + m - 1) // m * m


def _softshrink(x, lam):
    return jnp.where(x > lam, x - lam, jnp.where(x < -lam, x + lam, jnp.zeros_like(x)))


def _gelu_tanh(x):
    # TODO(synk): torch nn.GELU defaults to exact erf; the tanh approximation
    # (EUP-friendly) differs by <~1e-3 abs, acceptable for f32/bf16 inference.
    c = 0.7978845608028654
    return 0.5 * x * (1.0 + jnp.tanh(c * (x + 0.044715 * x * x * x)))


def fftnet_kernel(x_ref, pos_ref, frt_ref, fit_ref, crt_ref, cit_ref,
                  n1g_ref, n1b_ref, w1_ref, b1_ref, w2_ref, b2_ref,
                  n2g_ref, n2b_ref, fc1w_ref, fc1b_ref, fc2w_ref, fc2b_ref,
                  nfg_ref, nfb_ref, out_ref):
    f32 = jnp.float32
    mdt = frt_ref.dtype                       # matmul operand dtype (bfloat16)
    TB, C, Np = x_ref.shape                   # channel-major block
    Kp = frt_ref.shape[1]
    depth = n1g_ref.shape[0]
    R = TB * C                                # stacked row count

    def ln(x2d, g, b):
        # LayerNorm over channels; channel-major => stats are a sublane reduce.
        x3 = x2d.reshape(TB, C, Np)
        mu = jnp.mean(x3, axis=1, keepdims=True)
        xc = x3 - mu
        var = jnp.mean(xc * xc, axis=1, keepdims=True)
        y = xc * lax.rsqrt(var + EPS) * g[None] + b[None]
        return y.reshape(R, Np)

    # x = x + pos_embed (pos_drop = identity).  rows = b*C + c, lanes = sequence.
    x = (x_ref[...] + pos_ref[...]).reshape(R, Np)

    def block(d, x):
        residual = x
        xn = ln(x, n1g_ref[d], n1b_ref[d])
        xn_b = xn.astype(mdt)                 # cast once for both rfft matmuls

        # ---- AFNO1D filter (num_blocks=1) ----
        # rfft along sequence: two wide matmuls (all TB*C rows, Kp output lanes).
        zr = jnp.dot(xn_b, frt_ref[...], preferred_element_type=f32)   # (R, Kp)
        zi = jnp.dot(xn_b, fit_ref[...], preferred_element_type=f32)   # (R, Kp)

        # Complex 2-layer MLP: per batch row, rows are stacked [real C | imag C];
        # weights are block-diagonal over the TB batch rows (built host-side),
        # so each MLP layer is a single MXU call with Kp lanes and only cheap
        # sublane-group concats/slices (all groups are multiples of 8 rows).
        s = jnp.concatenate([zr.reshape(TB, C, Kp), zi.reshape(TB, C, Kp)],
                            axis=1).reshape(TB * 2 * C, Kp)
        o1 = jnp.maximum(
            jnp.dot(w1_ref[d], s.astype(mdt), preferred_element_type=f32)
            + b1_ref[d], 0.0)
        o2 = _softshrink(
            jnp.dot(w2_ref[d], o1.astype(mdt), preferred_element_type=f32)
            + b2_ref[d], LAMBDA)
        o23 = o2.reshape(TB, 2 * C, Kp)
        o2r = o23[:, :C].reshape(R, Kp)
        o2i = o23[:, C:].reshape(R, Kp)

        # irfft: two wide matmuls back to Np lanes.
        y = (jnp.dot(o2r.astype(mdt), crt_ref[...], preferred_element_type=f32)
             + jnp.dot(o2i.astype(mdt), cit_ref[...], preferred_element_type=f32))

        x = y + xn + residual                 # AFNO residual + double_skip, fused
        residual = x

        # ---- token MLP (contraction over channels = rows; block-diag weights) ----
        xn2 = ln(x, n2g_ref[d], n2b_ref[d]).astype(mdt)
        h = _gelu_tanh(jnp.dot(fc1w_ref[d], xn2, preferred_element_type=f32)
                       + fc1b_ref[d])
        m = (jnp.dot(fc2w_ref[d], h.astype(mdt), preferred_element_type=f32)
             + fc2b_ref[d])
        return m + residual

    # fori_loop (not a static unroll) bounds live ranges / VMEM pressure.
    x = lax.fori_loop(0, depth, block, x)
    out_ref[...] = ln(x, nfg_ref[...], nfb_ref[...]).reshape(TB, C, Np)


def build_dft_matrices(N, Np, Kp, dtype=jnp.bfloat16):
    """Channel-major DFT operators for torch.fft.rfft/irfft with norm='ortho':
         Z_re = X @ Frt,  Z_im = X @ Fit        (X is (rows, Np))
         y    = Z_re @ Crt + Z_im @ Cit
    Padded rows/cols are zero, so padded sequence positions (n >= N) and padded
    frequencies (k >= K) never contaminate real outputs."""
    K = N // 2 + 1
    scale = 1.0 / np.sqrt(N)
    ang = 2.0 * np.pi * np.outer(np.arange(N), np.arange(K)) / N      # (N, K)
    w = np.full(K, 2.0)
    w[0] = 1.0
    if N % 2 == 0:
        w[-1] = 1.0                                                   # Nyquist once
    frt = np.zeros((Np, Kp), np.float32); frt[:N, :K] = scale * np.cos(ang)
    fit = np.zeros((Np, Kp), np.float32); fit[:N, :K] = -scale * np.sin(ang)
    crt = np.zeros((Kp, Np), np.float32); crt[:K, :N] = (scale * w[:, None]) * np.cos(ang.T)
    cit = np.zeros((Kp, Np), np.float32); cit[:K, :N] = -(scale * w[:, None]) * np.sin(ang.T)
    return tuple(jnp.asarray(a, dtype) for a in (frt, fit, crt, cit))


def _fuse_params(raw, tb, mdt=jnp.bfloat16):
    """Host-side fusion: complex-MLP weights for left-multiplication on
    [real; imag] rows, then block-diagonal replication over the tb batch rows."""
    f32 = jnp.float32

    def bd(w):                                # (depth, p, q) -> (depth, tb*p, tb*q)
        d, p, q = w.shape
        eye = jnp.eye(tb, dtype=w.dtype)
        return jnp.einsum('ab,dpq->dapbq', eye, w).reshape(d, tb * p, tb * q)

    def tile_bias(b):                         # (depth, p) -> (depth, tb*p, 1)
        d, p = b.shape
        return jnp.tile(b, (1, tb)).reshape(d, tb * p, 1).astype(f32)

    wT = lambda w: jnp.swapaxes(w, -1, -2)

    def cfuse(wr, wi):                        # [[wr^T, -wi^T], [wi^T, wr^T]]
        top = jnp.concatenate([wT(wr), -wT(wi)], axis=-1)
        bot = jnp.concatenate([wT(wi), wT(wr)], axis=-1)
        return jnp.concatenate([top, bot], axis=-2)               # (depth, 2C, 2C)

    w1f = bd(cfuse(raw['w1r'], raw['w1i'])).astype(mdt)
    w2f = bd(cfuse(raw['w2r'], raw['w2i'])).astype(mdt)
    b1f = tile_bias(jnp.concatenate([raw['b1r'], raw['b1i']], axis=-1))
    b2f = tile_bias(jnp.concatenate([raw['b2r'], raw['b2i']], axis=-1))

    fc1w = bd(wT(raw['fc1w'])).astype(mdt)    # (depth, tb*H, tb*C)
    fc2w = bd(wT(raw['fc2w'])).astype(mdt)    # (depth, tb*C, tb*H)
    fc1b = tile_bias(raw['fc1b'])
    fc2b = tile_bias(raw['fc2b'])

    lnp = lambda p: p.astype(f32)[..., None]  # (depth, C) -> (depth, C, 1)
    return [lnp(raw['n1g']), lnp(raw['n1b']), w1f, b1f, w2f, b2f,
            lnp(raw['n2g']), lnp(raw['n2b']), fc1w, fc1b, fc2w, fc2b,
            raw['nfg'].astype(f32)[:, None], raw['nfb'].astype(f32)[:, None]]


def _gen_cfg():
    kind = ""
    try:
        kind = jax.devices()[0].device_kind.lower()
    except Exception:
        pass
    if "v5 lite" in kind or "v5e" in kind or "v5lite" in kind:
        # 4x128x128 MXU: 128 stacked rows already saturate column width.
        return {"tb_target": 4, "vmem": 64 * 1024 * 1024, "even_steps": False}
    if "v7" in kind:
        # 2 TensorCores per chip, only 64 MiB physical VMEM.
        return {"tb_target": 8, "vmem": 40 * 1024 * 1024, "even_steps": True}
    if "v6" in kind or "trillium" in kind:
        return {"tb_target": 8, "vmem": 64 * 1024 * 1024, "even_steps": False}
    return {"tb_target": 8, "vmem": 48 * 1024 * 1024, "even_steps": False}


def _pick_tb(B, target, even_steps):
    cands = [t for t in range(min(B, target), 0, -1) if B % t == 0]
    if even_steps:
        even = [t for t in cands if (B // t) % 2 == 0]
        if even:
            return even[0]
    return cands[0]


def fftnet_forward(x, pos, raw_params, *, tb=None):
    """raw_params: dict of unfused per-layer weights (see __main__)."""
    B, N, C = x.shape
    depth = raw_params['n1g'].shape[0]
    H = raw_params['fc1w'].shape[-1]
    Np = _round_up(N, 8)
    K = N // 2 + 1
    Kp = _round_up(K, 8)

    cfg = _gen_cfg()
    if tb is None:
        tb = _pick_tb(B, cfg["tb_target"], cfg["even_steps"])

    # Channel-major (B, C, Np).  Padded positions / frequencies only ever hit
    # zero DFT rows/cols, so they never contaminate real lanes; they are
    # sliced off at the end.  Do not change padding without rechecking this.
    xt = jnp.transpose(x.astype(jnp.float32), (0, 2, 1))
    pt = jnp.transpose(pos.astype(jnp.float32), (0, 2, 1))
    x_cm = jnp.pad(xt, ((0, 0), (0, 0), (0, Np - N)))
    pos_cm = jnp.pad(pt, ((0, 0), (0, 0), (0, Np - N)))

    frt, fit, crt, cit = build_dft_matrices(N, Np, Kp, jnp.bfloat16)
    params = _fuse_params(raw_params, tb)
    inputs = [x_cm, pos_cm, frt, fit, crt, cit, *params]

    steps = B // tb
    R, R2, RH = tb * C, tb * 2 * C, tb * H
    flops = steps * depth * (4 * R * Np * Kp            # rfft (2 matmuls)
                             + 4 * R2 * R2 * Kp         # complex MLP (block-diag)
                             + 4 * R * Kp * Np          # irfft (2 matmuls)
                             + 4 * RH * R * Np)         # token MLP fc1 + fc2
    transcendentals = steps * depth * RH * Np
    bytes_accessed = int(sum(int(a.size) * a.dtype.itemsize for a in inputs)
                         + B * C * Np * 4)

    out_shape = jax.ShapeDtypeStruct((B, C, Np), jnp.float32)
    out_spec = pl.BlockSpec((tb, C, Np), lambda i: (i, 0, 0))

    def run(single_buffer_consts):
        in_specs = [pl.BlockSpec((tb, C, Np), lambda i: (i, 0, 0))]
        for a in inputs[1:]:
            idx = lambda i, nd=a.ndim: (0,) * nd
            if single_buffer_consts:
                # Grid-invariant inputs: no revolving buffers needed.
                in_specs.append(pl.BlockSpec(a.shape, idx,
                                             pipeline_mode=pl.Buffered(1)))
            else:
                in_specs.append(pl.BlockSpec(a.shape, idx))
        return pl.pallas_call(
            fftnet_kernel,
            out_shape=out_shape,
            grid_spec=pltpu.PrefetchScalarGridSpec(
                num_scalar_prefetch=0,
                grid=(steps,),
                in_specs=in_specs,
                out_specs=out_spec),
            compiler_params=pltpu.CompilerParams(
                dimension_semantics=("parallel",),
                vmem_limit_bytes=cfg["vmem"]),
            cost_estimate=pl.CostEstimate(flops=int(flops),
                                          transcendentals=int(transcendentals),
                                          bytes_accessed=bytes_accessed),
        )(*inputs)

    try:
        out = run(True)            # single-buffered constants
    except Exception:
        out = run(False)           # fallback: default double-buffering
    return jnp.transpose(out[:, :, :N], (0, 2, 1))


if __name__ == "__main__":
    # Small shapes consistent with the module (B, N, C); the real pos_embed uses
    # N=1085 -- we use N=16 for the synthetic test.
    B, N, C, depth = 2, 16, 32, 2
    H = int(C * 4.0)                                    # mlp_ratio = 4.0

    key = jax.random.PRNGKey(0)
    ks = iter(jax.random.split(key, 32))

    def rand(shape, std=0.02):
        return (std * jax.random.normal(next(ks), shape)).astype(jnp.float32)

    x = jax.random.normal(next(ks), (B, N, C), jnp.float32)
    pos = rand((1, N, C))                               # trunc_normal_(std=0.02) surrogate

    raw = dict(
        n1g=jnp.ones((depth, C), jnp.float32), n1b=jnp.zeros((depth, C), jnp.float32),
        w1r=rand((depth, C, C)), w1i=rand((depth, C, C)),      # AFNO w1[0], w1[1]
        b1r=rand((depth, C)), b1i=rand((depth, C)),            # AFNO b1[0], b1[1]
        w2r=rand((depth, C, C)), w2i=rand((depth, C, C)),      # AFNO w2[0], w2[1]
        b2r=rand((depth, C)), b2i=rand((depth, C)),            # AFNO b2[0], b2[1]
        n2g=jnp.ones((depth, C), jnp.float32), n2b=jnp.zeros((depth, C), jnp.float32),
        fc1w=rand((depth, C, H)), fc1b=jnp.zeros((depth, H), jnp.float32),
        fc2w=rand((depth, H, C)), fc2b=jnp.zeros((depth, C), jnp.float32),
        nfg=jnp.ones((C,), jnp.float32), nfb=jnp.zeros((C,), jnp.float32),
    )

    out = fftnet_forward(x, pos, raw)
    out = jax.block_until_ready(out)
    assert out.shape == (B, N, C) and bool(jnp.all(jnp.isfinite(out)))
    print("KERNEL_OK")
</pallas_src>

<mosaic_0001>
module attributes {stable_mosaic.version = 11 : i64} {
  func.func @fftnet_kernel(%arg0: i32, %arg1: memref<2x32x16xf32, #tpu.memory_space<vmem>>, %arg2: memref<1x32x16xf32, #tpu.memory_space<vmem>>, %arg3: memref<16x16xbf16, #tpu.memory_space<vmem>>, %arg4: memref<16x16xbf16, #tpu.memory_space<vmem>>, %arg5: memref<16x16xbf16, #tpu.memory_space<vmem>>, %arg6: memref<16x16xbf16, #tpu.memory_space<vmem>>, %arg7: memref<2x32x1xf32, #tpu.memory_space<vmem>>, %arg8: memref<2x32x1xf32, #tpu.memory_space<vmem>>, %arg9: memref<2x128x128xbf16, #tpu.memory_space<vmem>>, %arg10: memref<2x128x1xf32, #tpu.memory_space<vmem>>, %arg11: memref<2x128x128xbf16, #tpu.memory_space<vmem>>, %arg12: memref<2x128x1xf32, #tpu.memory_space<vmem>>, %arg13: memref<2x32x1xf32, #tpu.memory_space<vmem>>, %arg14: memref<2x32x1xf32, #tpu.memory_space<vmem>>, %arg15: memref<2x256x64xbf16, #tpu.memory_space<vmem>>, %arg16: memref<2x256x1xf32, #tpu.memory_space<vmem>>, %arg17: memref<2x64x256xbf16, #tpu.memory_space<vmem>>, %arg18: memref<2x64x1xf32, #tpu.memory_space<vmem>>, %arg19: memref<32x1xf32, #tpu.memory_space<vmem>>, %arg20: memref<32x1xf32, #tpu.memory_space<vmem>>, %arg21: memref<2x32x16xf32, #tpu.memory_space<vmem>>) attributes {dimension_semantics = [#tpu.dimension_semantics<parallel>], iteration_bounds = array<i64: 1>, scalar_prefetch = 0 : i64, scratch_operands = 0 : i64, tpu.core_type = #tpu.core_type<tc>, window_params = [{transform_indices = @transform_0, window_bounds = array<i64: 2, 32, 16>}, {pipeline_mode = #tpu.pipeline_mode<synchronous>, transform_indices = @transform_1, window_bounds = array<i64: 1, 32, 16>}, {pipeline_mode = #tpu.pipeline_mode<synchronous>, transform_indices = @transform_2, window_bounds = array<i64: 16, 16>}, {pipeline_mode = #tpu.pipeline_mode<synchronous>, transform_indices = @transform_3, window_bounds = array<i64: 16, 16>}, {pipeline_mode = #tpu.pipeline_mode<synchronous>, transform_indices = @transform_4, window_bounds = array<i64: 16, 16>}, {pipeline_mode = #tpu.pipeline_mode<synchronous>, transform_indices = @transform_5, window_bounds = array<i64: 16, 16>}, {pipeline_mode = #tpu.pipeline_mode<synchronous>, transform_indices = @transform_6, window_bounds = array<i64: 2, 32, 1>}, {pipeline_mode = #tpu.pipeline_mode<synchronous>, transform_indices = @transform_7, window_bounds = array<i64: 2, 32, 1>}, {pipeline_mode = #tpu.pipeline_mode<synchronous>, transform_indices = @transform_8, window_bounds = array<i64: 2, 128, 128>}, {pipeline_mode = #tpu.pipeline_mode<synchronous>, transform_indices = @transform_9, window_bounds = array<i64: 2, 128, 1>}, {pipeline_mode = #tpu.pipeline_mode<synchronous>, transform_indices = @transform_10, window_bounds = array<i64: 2, 128, 128>}, {pipeline_mode = #tpu.pipeline_mode<synchronous>, transform_indices = @transform_11, window_bounds = array<i64: 2, 128, 1>}, {pipeline_mode = #tpu.pipeline_mode<synchronous>, transform_indices = @transform_12, window_bounds = array<i64: 2, 32, 1>}, {pipeline_mode = #tpu.pipeline_mode<synchronous>, transform_indices = @transform_13, window_bounds = array<i64: 2, 32, 1>}, {pipeline_mode = #tpu.pipeline_mode<synchronous>, transform_indices = @transform_14, window_bounds = array<i64: 2, 256, 64>}, {pipeline_mode = #tpu.pipeline_mode<synchronous>, transform_indices = @transform_15, window_bounds = array<i64: 2, 256, 1>}, {pipeline_mode = #tpu.pipeline_mode<synchronous>, transform_indices = @transform_16, window_bounds = array<i64: 2, 64, 256>}, {pipeline_mode = #tpu.pipeline_mode<synchronous>, transform_indices = @transform_17, window_bounds = array<i64: 2, 64, 1>}, {pipeline_mode = #tpu.pipeline_mode<synchronous>, transform_indices = @transform_18, window_bounds = array<i64: 32, 1>}, {pipeline_mode = #tpu.pipeline_mode<synchronous>, transform_indices = @transform_19, window_bounds = array<i64: 32, 1>}, {transform_indices = @transform_20, window_bounds = array<i64: 2, 32, 16>}]} {
    %c0 = arith.constant 0 : index
    %c0_0 = arith.constant 0 : index
    %c0_1 = arith.constant 0 : index
    %0 = vector.load %arg1[%c0, %c0_0, %c0_1] : memref<2x32x16xf32, #tpu.memory_space<vmem>>, vector<2x32x16xf32>
    %c0_2 = arith.constant 0 : index
    %c0_3 = arith.constant 0 : index
    %c0_4 = arith.constant 0 : index
    %1 = vector.load %arg2[%c0_2, %c0_3, %c0_4] : memref<1x32x16xf32, #tpu.memory_space<vmem>>, vector<1x32x16xf32>
    %2 = vector.broadcast %1 : vector<1x32x16xf32> to vector<2x32x16xf32>
    %3 = arith.addf %0, %2 : vector<2x32x16xf32>
    %4 = vector.shape_cast %3 : vector<2x32x16xf32> to vector<64x16xf32>
    %c0_i32 = arith.constant 0 : i32
    %c2_i32 = arith.constant 2 : i32
    %5 = arith.addi %c0_i32, %c2_i32 : i32
    %c1_i32 = arith.constant 1 : i32
    %6 = scf.for %arg22 = %c0_i32 to %5 step %c1_i32 iter_args(%arg23 = %4) -> (vector<64x16xf32>)  : i32 {
      %35 = arith.index_cast %arg22 : i32 to index
      %c0_17 = arith.constant 0 : index
      %c0_18 = arith.constant 0 : index
      %36 = vector.load %arg7[%35, %c0_17, %c0_18] : memref<2x32x1xf32, #tpu.memory_space<vmem>>, vector<1x32x1xf32>
      %37 = vector.shape_cast %36 : vector<1x32x1xf32> to vector<32x1xf32>
      %38 = arith.index_cast %arg22 : i32 to index
      %c0_19 = arith.constant 0 : index
      %c0_20 = arith.constant 0 : index
      %39 = vector.load %arg8[%38, %c0_19, %c0_20] : memref<2x32x1xf32, #tpu.memory_space<vmem>>, vector<1x32x1xf32>
      %40 = vector.shape_cast %39 : vector<1x32x1xf32> to vector<32x1xf32>
      %41 = vector.shape_cast %arg23 : vector<64x16xf32> to vector<2x32x16xf32>
      %cst_21 = arith.constant dense<0.000000e+00> : vector<2x16xf32>
      %42 = vector.multi_reduction <add>, %41, %cst_21 [1] : vector<2x32x16xf32> to vector<2x16xf32>
      %43 = vector.shape_cast %42 : vector<2x16xf32> to vector<2x1x16xf32>
      %cst_22 = arith.constant 3.200000e+01 : f32
      %44 = vector.broadcast %cst_22 : f32 to vector<2x1x16xf32>
      %45 = arith.divf %43, %44 : vector<2x1x16xf32>
      %46 = vector.broadcast %45 : vector<2x1x16xf32> to vector<2x32x16xf32>
      %47 = arith.subf %41, %46 : vector<2x32x16xf32>
      %48 = arith.mulf %47, %47 : vector<2x32x16xf32>
      %cst_23 = arith.constant dense<0.000000e+00> : vector<2x16xf32>
      %49 = vector.multi_reduction <add>, %48, %cst_23 [1] : vector<2x32x16xf32> to vector<2x16xf32>
      %50 = vector.shape_cast %49 : vector<2x16xf32> to vector<2x1x16xf32>
      %cst_24 = arith.constant 3.200000e+01 : f32
      %51 = vector.broadcast %cst_24 : f32 to vector<2x1x16xf32>
      %52 = arith.divf %50, %51 : vector<2x1x16xf32>
      %cst_25 = arith.constant 9.99999997E-7 : f32
      %53 = vector.broadcast %cst_25 : f32 to vector<2x1x16xf32>
      %54 = arith.addf %52, %53 : vector<2x1x16xf32>
      %55 = math.rsqrt %54 : vector<2x1x16xf32>
      %56 = vector.broadcast %55 : vector<2x1x16xf32> to vector<2x32x16xf32>
      %57 = arith.mulf %47, %56 : vector<2x32x16xf32>
      %58 = vector.shape_cast %37 : vector<32x1xf32> to vector<1x32x1xf32>
      %59 = vector.broadcast %58 : vector<1x32x1xf32> to vector<2x32x16xf32>
      %60 = arith.mulf %57, %59 : vector<2x32x16xf32>
      %61 = vector.shape_cast %40 : vector<32x1xf32> to vector<1x32x1xf32>
      %62 = vector.broadcast %61 : vector<1x32x1xf32> to vector<2x32x16xf32>
      %63 = arith.addf %60, %62 : vector<2x32x16xf32>
      %64 = vector.shape_cast %63 : vector<2x32x16xf32> to vector<64x16xf32>
      %65 = arith.truncf %64 : vector<64x16xf32> to vector<64x16xbf16>
      %c0_26 = arith.constant 0 : index
      %c0_27 = arith.constant 0 : index
      %66 = vector.load %arg3[%c0_26, %c0_27] : memref<16x16xbf16, #tpu.memory_space<vmem>>, vector<16x16xbf16>
      %cst_28 = arith.constant dense<0.000000e+00> : vector<64x16xf32>
      %67 = tpu.matmul %65, %66, %cst_28 {dimension_numbers = #tpu.dot_dimension_numbers<[1], [0], [0], [1], [0, 0, 1, 1], [], []>} : vector<64x16xbf16>, vector<16x16xbf16>, vector<64x16xf32> -> vector<64x16xf32>
      %c0_29 = arith.constant 0 : index
      %c0_30 = arith.constant 0 : index
      %68 = vector.load %arg4[%c0_29, %c0_30] : memref<16x16xbf16, #tpu.memory_space<vmem>>, vector<16x16xbf16>
      %cst_31 = arith.constant dense<0.000000e+00> : vector<64x16xf32>
      %69 = tpu.matmul %65, %68, %cst_31 {dimension_numbers = #tpu.dot_dimension_numbers<[1], [0], [0], [1], [0, 0, 1, 1], [], []>} : vector<64x16xbf16>, vector<16x16xbf16>, vector<64x16xf32> -> vector<64x16xf32>
      %70 = vector.shape_cast %67 : vector<64x16xf32> to vector<2x32x16xf32>
      %71 = vector.shape_cast %69 : vector<64x16xf32> to vector<2x32x16xf32>
      %72 = tpu.concatenate %70, %71 in 1 : vector<2x32x16xf32>, vector<2x32x16xf32> -> vector<2x64x16xf32>
      %73 = vector.shape_cast %72 : vector<2x64x16xf32> to vector<128x16xf32>
      %74 = arith.index_cast %arg22 : i32 to index
      %c0_32 = arith.constant 0 : index
      %c0_33 = arith.constant 0 : index
      %75 = vector.load %arg9[%74, %c0_32, %c0_33] : memref<2x128x128xbf16, #tpu.memory_space<vmem>>, vector<1x128x128xbf16>
      %76 = vector.shape_cast %75 : vector<1x128x128xbf16> to vector<128x128xbf16>
      %77 = arith.truncf %73 : vector<128x16xf32> to vector<128x16xbf16>
      %cst_34 = arith.constant dense<0.000000e+00> : vector<128x16xf32>
      %78 = tpu.matmul %76, %77, %cst_34 {dimension_numbers = #tpu.dot_dimension_numbers<[1], [0], [0], [1], [0, 0, 1, 1], [], []>} : vector<128x128xbf16>, vector<128x16xbf16>, vector<128x16xf32> -> vector<128x16xf32>
      %79 = arith.index_cast %arg22 : i32 to index
      %c0_35 = arith.constant 0 : index
      %c0_36 = arith.constant 0 : index
      %80 = vector.load %arg10[%79, %c0_35, %c0_36] : memref<2x128x1xf32, #tpu.memory_space<vmem>>, vector<1x128x1xf32>
      %81 = vector.shape_cast %80 : vector<1x128x1xf32> to vector<128x1xf32>
      %82 = vector.broadcast %81 : vector<128x1xf32> to vector<128x16xf32>
      %83 = arith.addf %78, %82 : vector<128x16xf32>
      %cst_37 = arith.constant 0.000000e+00 : f32
      %84 = vector.broadcast %cst_37 : f32 to vector<128x16xf32>
      %85 = arith.maximumf %83, %84 : vector<128x16xf32>
      %86 = arith.index_cast %arg22 : i32 to index
      %c0_38 = arith.constant 0 : index
      %c0_39 = arith.constant 0 : index
      %87 = vector.load %arg11[%86, %c0_38, %c0_39] : memref<2x128x128xbf16, #tpu.memory_space<vmem>>, vector<1x128x128xbf16>
      %88 = vector.shape_cast %87 : vector<1x128x128xbf16> to vector<128x128xbf16>
      %89 = arith.truncf %85 : vector<128x16xf32> to vector<128x16xbf16>
      %cst_40 = arith.constant dense<0.000000e+00> : vector<128x16xf32>
      %90 = tpu.matmul %88, %89, %cst_40 {dimension_numbers = #tpu.dot_dimension_numbers<[1], [0], [0], [1], [0, 0, 1, 1], [], []>} : vector<128x128xbf16>, vector<128x16xbf16>, vector<128x16xf32> -> vector<128x16xf32>
      %91 = arith.index_cast %arg22 : i32 to index
      %c0_41 = arith.constant 0 : index
      %c0_42 = arith.constant 0 : index
      %92 = vector.load %arg12[%91, %c0_41, %c0_42] : memref<2x128x1xf32, #tpu.memory_space<vmem>>, vector<1x128x1xf32>
      %93 = vector.shape_cast %92 : vector<1x128x1xf32> to vector<128x1xf32>
      %94 = vector.broadcast %93 : vector<128x1xf32> to vector<128x16xf32>
      %95 = arith.addf %90, %94 : vector<128x16xf32>
      %cst_43 = arith.constant 0.00999999977 : f32
      %96 = vector.broadcast %cst_43 : f32 to vector<128x16xf32>
      %97 = arith.cmpf ogt, %95, %96 : vector<128x16xf32>
      %cst_44 = arith.constant 0.00999999977 : f32
      %98 = vector.broadcast %cst_44 : f32 to vector<128x16xf32>
      %99 = arith.subf %95, %98 : vector<128x16xf32>
      %cst_45 = arith.constant -0.00999999977 : f32
      %100 = vector.broadcast %cst_45 : f32 to vector<128x16xf32>
      %101 = arith.cmpf olt, %95, %100 : vector<128x16xf32>
      %cst_46 = arith.constant 0.00999999977 : f32
      %102 = vector.broadcast %cst_46 : f32 to vector<128x16xf32>
      %103 = arith.addf %95, %102 : vector<128x16xf32>
      %cst_47 = arith.constant 0.000000e+00 : f32
      %104 = vector.broadcast %cst_47 : f32 to vector<128x16xf32>
      %105 = arith.select %101, %103, %104 : vector<128x16xi1>, vector<128x16xf32>
      %106 = arith.select %97, %99, %105 : vector<128x16xi1>, vector<128x16xf32>
      %107 = vector.shape_cast %106 : vector<128x16xf32> to vector<2x64x16xf32>
      %108 = vector.extract_strided_slice %107 {offsets = [0, 0, 0], sizes = [2, 32, 16], strides = [1, 1, 1]} : vector<2x64x16xf32> to vector<2x32x16xf32>
      %109 = vector.shape_cast %108 : vector<2x32x16xf32> to vector<64x16xf32>
      %110 = vector.extract_strided_slice %107 {offsets = [0, 32, 0], sizes = [2, 32, 16], strides = [1, 1, 1]} : vector<2x64x16xf32> to vector<2x32x16xf32>
      %111 = vector.shape_cast %110 : vector<2x32x16xf32> to vector<64x16xf32>
      %112 = arith.truncf %109 : vector<64x16xf32> to vector<64x16xbf16>
      %c0_48 = arith.constant 0 : index
      %c0_49 = arith.constant 0 : index
      %113 = vector.load %arg5[%c0_48, %c0_49] : memref<16x16xbf16, #tpu.memory_space<vmem>>, vector<16x16xbf16>
      %cst_50 = arith.constant dense<0.000000e+00> : vector<64x16xf32>
      %114 = tpu.matmul %112, %113, %cst_50 {dimension_numbers = #tpu.dot_dimension_numbers<[1], [0], [0], [1], [0, 0, 1, 1], [], []>} : vector<64x16xbf16>, vector<16x16xbf16>, vector<64x16xf32> -> vector<64x16xf32>
      %115 = arith.truncf %111 : vector<64x16xf32> to vector<64x16xbf16>
      %c0_51 = arith.constant 0 : index
      %c0_52 = arith.constant 0 : index
      %116 = vector.load %arg6[%c0_51, %c0_52] : memref<16x16xbf16, #tpu.memory_space<vmem>>, vector<16x16xbf16>
      %cst_53 = arith.constant dense<0.000000e+00> : vector<64x16xf32>
      %117 = tpu.matmul %115, %116, %cst_53 {dimension_numbers = #tpu.dot_dimension_numbers<[1], [0], [0], [1], [0, 0, 1, 1], [], []>} : vector<64x16xbf16>, vector<16x16xbf16>, vector<64x16xf32> -> vector<64x16xf32>
      %118 = arith.addf %114, %117 : vector<64x16xf32>
      %119 = arith.addf %118, %64 : vector<64x16xf32>
      %120 = arith.addf %119, %arg23 : vector<64x16xf32>
      %121 = arith.index_cast %arg22 : i32 to index
      %c0_54 = arith.constant 0 : index
      %c0_55 = arith.constant 0 : index
      %122 = vector.load %arg13[%121, %c0_54, %c0_55] : memref<2x32x1xf32, #tpu.memory_space<vmem>>, vector<1x32x1xf32>
      %123 = vector.shape_cast %122 : vector<1x32x1xf32> to vector<32x1xf32>
      %124 = arith.index_cast %arg22 : i32 to index
      %c0_56 = arith.constant 0 : index
      %c0_57 = arith.constant 0 : index
      %125 = vector.load %arg14[%124, %c0_56, %c0_57] : memref<2x32x1xf32, #tpu.memory_space<vmem>>, vector<1x32x1xf32>
      %126 = vector.shape_cast %125 : vector<1x32x1xf32> to vector<32x1xf32>
      %127 = vector.shape_cast %120 : vector<64x16xf32> to vector<2x32x16xf32>
      %cst_58 = arith.constant dense<0.000000e+00> : vector<2x16xf32>
      %128 = vector.multi_reduction <add>, %127, %cst_58 [1] : vector<2x32x16xf32> to vector<2x16xf32>
      %129 = vector.shape_cast %128 : vector<2x16xf32> to vector<2x1x16xf32>
      %cst_59 = arith.constant 3.200000e+01 : f32
      %130 = vector.broadcast %cst_59 : f32 to vector<2x1x16xf32>
      %131 = arith.divf %129, %130 : vector<2x1x16xf32>
      %132 = vector.broadcast %131 : vector<2x1x16xf32> to vector<2x32x16xf32>
      %133 = arith.subf %127, %132 : vector<2x32x16xf32>
      %134 = arith.mulf %133, %133 : vector<2x32x16xf32>
      %cst_60 = arith.constant dense<0.000000e+00> : vector<2x16xf32>
      %135 = vector.multi_reduction <add>, %134, %cst_60 [1] : vector<2x32x16xf32> to vector<2x16xf32>
      %136 = vector.shape_cast %135 : vector<2x16xf32> to vector<2x1x16xf32>
      %cst_61 = arith.constant 3.200000e+01 : f32
      %137 = vector.broadcast %cst_61 : f32 to vector<2x1x16xf32>
      %138 = arith.divf %136, %137 : vector<2x1x16xf32>
      %cst_62 = arith.constant 9.99999997E-7 : f32
      %139 = vector.broadcast %cst_62 : f32 to vector<2x1x16xf32>
      %140 = arith.addf %138, %139 : vector<2x1x16xf32>
      %141 = math.rsqrt %140 : vector<2x1x16xf32>
      %142 = vector.broadcast %141 : vector<2x1x16xf32> to vector<2x32x16xf32>
      %143 = arith.mulf %133, %142 : vector<2x32x16xf32>
      %144 = vector.shape_cast %123 : vector<32x1xf32> to vector<1x32x1xf32>
      %145 = vector.broadcast %144 : vector<1x32x1xf32> to vector<2x32x16xf32>
      %146 = arith.mulf %143, %145 : vector<2x32x16xf32>
      %147 = vector.shape_cast %126 : vector<32x1xf32> to vector<1x32x1xf32>
      %148 = vector.broadcast %147 : vector<1x32x1xf32> to vector<2x32x16xf32>
      %149 = arith.addf %146, %148 : vector<2x32x16xf32>
      %150 = vector.shape_cast %149 : vector<2x32x16xf32> to vector<64x16xf32>
      %151 = arith.truncf %150 : vector<64x16xf32> to vector<64x16xbf16>
      %152 = arith.index_cast %arg22 : i32 to index
      %c0_63 = arith.constant 0 : index
      %c0_64 = arith.constant 0 : index
      %153 = vector.load %arg15[%152, %c0_63, %c0_64] : memref<2x256x64xbf16, #tpu.memory_space<vmem>>, vector<1x256x64xbf16>
      %154 = vector.shape_cast %153 : vector<1x256x64xbf16> to vector<256x64xbf16>
      %cst_65 = arith.constant dense<0.000000e+00> : vector<256x16xf32>
      %155 = tpu.matmul %154, %151, %cst_65 {dimension_numbers = #tpu.dot_dimension_numbers<[1], [0], [0], [1], [0, 0, 1, 1], [], []>} : vector<256x64xbf16>, vector<64x16xbf16>, vector<256x16xf32> -> vector<256x16xf32>
      %156 = arith.index_cast %arg22 : i32 to index
      %c0_66 = arith.constant 0 : index
      %c0_67 = arith.constant 0 : index
      %157 = vector.load %arg16[%156, %c0_66, %c0_67] : memref<2x256x1xf32, #tpu.memory_space<vmem>>, vector<1x256x1xf32>
      %158 = vector.shape_cast %157 : vector<1x256x1xf32> to vector<256x1xf32>
      %159 = vector.broadcast %158 : vector<256x1xf32> to vector<256x16xf32>
      %160 = arith.addf %155, %159 : vector<256x16xf32>
      %cst_68 = arith.constant 5.000000e-01 : f32
      %161 = vector.broadcast %cst_68 : f32 to vector<256x16xf32>
      %162 = arith.mulf %161, %160 : vector<256x16xf32>
      %cst_69 = arith.constant 4.471500e-02 : f32
      %163 = vector.broadcast %cst_69 : f32 to vector<256x16xf32>
      %164 = arith.mulf %163, %160 : vector<256x16xf32>
      %165 = arith.mulf %164, %160 : vector<256x16xf32>
      %166 = arith.mulf %165, %160 : vector<256x16xf32>
      %167 = arith.addf %160, %166 : vector<256x16xf32>
      %cst_70 = arith.constant 0.797884583 : f32
      %168 = vector.broadcast %cst_70 : f32 to vector<256x16xf32>
      %169 = arith.mulf %168, %167 : vector<256x16xf32>
      %170 = math.tanh %169 : vector<256x16xf32>
      %cst_71 = arith.constant 1.000000e+00 : f32
      %171 = vector.broadcast %cst_71 : f32 to vector<256x16xf32>
      %172 = arith.addf %171, %170 : vector<256x16xf32>
      %173 = arith.mulf %162, %172 : vector<256x16xf32>
      %174 = arith.index_cast %arg22 : i32 to index
      %c0_72 = arith.constant 0 : index
      %c0_73 = arith.constant 0 : index
      %175 = vector.load %arg17[%174, %c0_72, %c0_73] : memref<2x64x256xbf16, #tpu.memory_space<vmem>>, vector<1x64x256xbf16>
      %176 = vector.shape_cast %175 : vector<1x64x256xbf16> to vector<64x256xbf16>
      %177 = arith.truncf %173 : vector<256x16xf32> to vector<256x16xbf16>
      %cst_74 = arith.constant dense<0.000000e+00> : vector<64x16xf32>
      %178 = tpu.matmul %176, %177, %cst_74 {dimension_numbers = #tpu.dot_dimension_numbers<[1], [0], [0], [1], [0, 0, 1, 1], [], []>} : vector<64x256xbf16>, vector<256x16xbf16>, vector<64x16xf32> -> vector<64x16xf32>
      %179 = arith.index_cast %arg22 : i32 to index
      %c0_75 = arith.constant 0 : index
      %c0_76 = arith.constant 0 : index
      %180 = vector.load %arg18[%179, %c0_75, %c0_76] : memref<2x64x1xf32, #tpu.memory_space<vmem>>, vector<1x64x1xf32>
      %181 = vector.shape_cast %180 : vector<1x64x1xf32> to vector<64x1xf32>
      %182 = vector.broadcast %181 : vector<64x1xf32> to vector<64x16xf32>
      %183 = arith.addf %178, %182 : vector<64x16xf32>
      %184 = arith.addf %183, %120 : vector<64x16xf32>
      scf.yield %184 : vector<64x16xf32>
    }
    %c2_i32_5 = arith.constant 2 : i32
    %c0_6 = arith.constant 0 : index
    %c0_7 = arith.constant 0 : index
    %7 = vector.load %arg19[%c0_6, %c0_7] : memref<32x1xf32, #tpu.memory_space<vmem>>, vector<32x1xf32>
    %c0_8 = arith.constant 0 : index
    %c0_9 = arith.constant 0 : index
    %8 = vector.load %arg20[%c0_8, %c0_9] : memref<32x1xf32, #tpu.memory_space<vmem>>, vector<32x1xf32>
    %9 = vector.shape_cast %6 : vector<64x16xf32> to vector<2x32x16xf32>
    %cst = arith.constant dense<0.000000e+00> : vector<2x16xf32>
    %10 = vector.multi_reduction <add>, %9, %cst [1] : vector<2x32x16xf32> to vector<2x16xf32>
    %11 = vector.shape_cast %10 : vector<2x16xf32> to vector<2x1x16xf32>
    %cst_10 = arith.constant 3.200000e+01 : f32
    %12 = vector.broadcast %cst_10 : f32 to vector<2x1x16xf32>
    %13 = arith.divf %11, %12 : vector<2x1x16xf32>
    %14 = vector.broadcast %13 : vector<2x1x16xf32> to vector<2x32x16xf32>
    %15 = arith.subf %9, %14 : vector<2x32x16xf32>
    %16 = arith.mulf %15, %15 : vector<2x32x16xf32>
    %cst_11 = arith.constant dense<0.000000e+00> : vector<2x16xf32>
    %17 = vector.multi_reduction <add>, %16, %cst_11 [1] : vector<2x32x16xf32> to vector<2x16xf32>
    %18 = vector.shape_cast %17 : vector<2x16xf32> to vector<2x1x16xf32>
    %cst_12 = arith.constant 3.200000e+01 : f32
    %19 = vector.broadcast %cst_12 : f32 to vector<2x1x16xf32>
    %20 = arith.divf %18, %19 : vector<2x1x16xf32>
    %cst_13 = arith.constant 9.99999997E-7 : f32
    %21 = vector.broadcast %cst_13 : f32 to vector<2x1x16xf32>
    %22 = arith.addf %20, %21 : vector<2x1x16xf32>
    %23 = math.rsqrt %22 : vector<2x1x16xf32>
    %24 = vector.broadcast %23 : vector<2x1x16xf32> to vector<2x32x16xf32>
    %25 = arith.mulf %15, %24 : vector<2x32x16xf32>
    %26 = vector.shape_cast %7 : vector<32x1xf32> to vector<1x32x1xf32>
    %27 = vector.broadcast %26 : vector<1x32x1xf32> to vector<2x32x16xf32>
    %28 = arith.mulf %25, %27 : vector<2x32x16xf32>
    %29 = vector.shape_cast %8 : vector<32x1xf32> to vector<1x32x1xf32>
    %30 = vector.broadcast %29 : vector<1x32x1xf32> to vector<2x32x16xf32>
    %31 = arith.addf %28, %30 : vector<2x32x16xf32>
    %32 = vector.shape_cast %31 : vector<2x32x16xf32> to vector<64x16xf32>
    %33 = vector.shape_cast %32 : vector<64x16xf32> to vector<2x32x16xf32>
    %c0_14 = arith.constant 0 : index
    %c0_15 = arith.constant 0 : index
    %c0_16 = arith.constant 0 : index
    %34 = vector.load %arg21[%c0_14, %c0_15, %c0_16] : memref<2x32x16xf32, #tpu.memory_space<vmem>>, vector<2x32x16xf32>
    tpu.vector_store %arg21[%c0_14, %c0_15, %c0_16], %33 {strides = array<i32>} : memref<2x32x16xf32, #tpu.memory_space<vmem>>, vector<2x32x16xf32>,
    return
  }
  func.func @transform_0(%arg0: i32) -> (i32, i32, i32) {
    %c0_i32 = arith.constant 0 : i32
    %c0_i32_0 = arith.constant 0 : i32
    %c0_i32_1 = arith.constant 0 : i32
    return %arg0, %c0_i32, %c0_i32_0 : i32, i32, i32
  }
  func.func @transform_1(%arg0: i32) -> (i32, i32, i32) {
    %c0_i32 = arith.constant 0 : i32
    %c0_i32_0 = arith.constant 0 : i32
    %c0_i32_1 = arith.constant 0 : i32
    %c0_i32_2 = arith.constant 0 : i32
    return %c0_i32, %c0_i32_0, %c0_i32_1 : i32, i32, i32
  }
  func.func @transform_2(%arg0: i32) -> (i32, i32) {
    %c0_i32 = arith.constant 0 : i32
    %c0_i32_0 = arith.constant 0 : i32
    %c0_i32_1 = arith.constant 0 : i32
    return %c0_i32, %c0_i32_0 : i32, i32
  }
  func.func @transform_3(%arg0: i32) -> (i32, i32) {
    %c0_i32 = arith.constant 0 : i32
    %c0_i32_0 = arith.constant 0 : i32
    %c0_i32_1 = arith.constant 0 : i32
    return %c0_i32, %c0_i32_0 : i32, i32
  }
  func.func @transform_4(%arg0: i32) -> (i32, i32) {
    %c0_i32 = arith.constant 0 : i32
    %c0_i32_0 = arith.constant 0 : i32
    %c0_i32_1 = arith.constant 0 : i32
    return %c0_i32, %c0_i32_0 : i32, i32
  }
  func.func @transform_5(%arg0: i32) -> (i32, i32) {
    %c0_i32 = arith.constant 0 : i32
    %c0_i32_0 = arith.constant 0 : i32
    %c0_i32_1 = arith.constant 0 : i32
    return %c0_i32, %c0_i32_0 : i32, i32
  }
  func.func @transform_6(%arg0: i32) -> (i32, i32, i32) {
    %c0_i32 = arith.constant 0 : i32
    %c0_i32_0 = arith.constant 0 : i32
    %c0_i32_1 = arith.constant 0 : i32
    %c0_i32_2 = arith.constant 0 : i32
    return %c0_i32, %c0_i32_0, %c0_i32_1 : i32, i32, i32
  }
  func.func @transform_7(%arg0: i32) -> (i32, i32, i32) {
    %c0_i32 = arith.constant 0 : i32
    %c0_i32_0 = arith.constant 0 : i32
    %c0_i32_1 = arith.constant 0 : i32
    %c0_i32_2 = arith.constant 0 : i32
    return %c0_i32, %c0_i32_0, %c0_i32_1 : i32, i32, i32
  }
  func.func @transform_8(%arg0: i32) -> (i32, i32, i32) {
    %c0_i32 = arith.constant 0 : i32
    %c0_i32_0 = arith.constant 0 : i32
    %c0_i32_1 = arith.constant 0 : i32
    %c0_i32_2 = arith.constant 0 : i32
    return %c0_i32, %c0_i32_0, %c0_i32_1 : i32, i32, i32
  }
  func.func @transform_9(%arg0: i32) -> (i32, i32, i32) {
    %c0_i32 = arith.constant 0 : i32
    %c0_i32_0 = arith.constant 0 : i32
    %c0_i32_1 = arith.constant 0 : i32
    %c0_i32_2 = arith.constant 0 : i32
    return %c0_i32, %c0_i32_0, %c0_i32_1 : i32, i32, i32
  }
  func.func @transform_10(%arg0: i32) -> (i32, i32, i32) {
    %c0_i32 = arith.constant 0 : i32
    %c0_i32_0 = arith.constant 0 : i32
    %c0_i32_1 = arith.constant 0 : i32
    %c0_i32_2 = arith.constant 0 : i32
    return %c0_i32, %c0_i32_0, %c0_i32_1 : i32, i32, i32
  }
  func.func @transform_11(%arg0: i32) -> (i32, i32, i32) {
    %c0_i32 = arith.constant 0 : i32
    %c0_i32_0 = arith.constant 0 : i32
    %c0_i32_1 = arith.constant 0 : i32
    %c0_i32_2 = arith.constant 0 : i32
    return %c0_i32, %c0_i32_0, %c0_i32_1 : i32, i32, i32
  }
  func.func @transform_12(%arg0: i32) -> (i32, i32, i32) {
    %c0_i32 = arith.constant 0 : i32
    %c0_i32_0 = arith.constant 0 : i32
    %c0_i32_1 = arith.constant 0 : i32
    %c0_i32_2 = arith.constant 0 : i32
    return %c0_i32, %c0_i32_0, %c0_i32_1 : i32, i32, i32
  }
  func.func @transform_13(%arg0: i32) -> (i32, i32, i32) {
    %c0_i32 = arith.constant 0 : i32
    %c0_i32_0 = arith.constant 0 : i32
    %c0_i32_1 = arith.constant 0 : i32
    %c0_i32_2 = arith.constant 0 : i32
    return %c0_i32, %c0_i32_0, %c0_i32_1 : i32, i32, i32
  }
  func.func @transform_14(%arg0: i32) -> (i32, i32, i32) {
    %c0_i32 = arith.constant 0 : i32
    %c0_i32_0 = arith.constant 0 : i32
    %c0_i32_1 = arith.constant 0 : i32
    %c0_i32_2 = arith.constant 0 : i32
    return %c0_i32, %c0_i32_0, %c0_i32_1 : i32, i32, i32
  }
  func.func @transform_15(%arg0: i32) -> (i32, i32, i32) {
    %c0_i32 = arith.constant 0 : i32
    %c0_i32_0 = arith.constant 0 : i32
    %c0_i32_1 = arith.constant 0 : i32
    %c0_i32_2 = arith.constant 0 : i32
    return %c0_i32, %c0_i32_0, %c0_i32_1 : i32, i32, i32
  }
  func.func @transform_16(%arg0: i32) -> (i32, i32, i32) {
    %c0_i32 = arith.constant 0 : i32
    %c0_i32_0 = arith.constant 0 : i32
    %c0_i32_1 = arith.constant 0 : i32
    %c0_i32_2 = arith.constant 0 : i32
    return %c0_i32, %c0_i32_0, %c0_i32_1 : i32, i32, i32
  }
  func.func @transform_17(%arg0: i32) -> (i32, i32, i32) {
    %c0_i32 = arith.constant 0 : i32
    %c0_i32_0 = arith.constant 0 : i32
    %c0_i32_1 = arith.constant 0 : i32
    %c0_i32_2 = arith.constant 0 : i32
    return %c0_i32, %c0_i32_0, %c0_i32_1 : i32, i32, i32
  }
  func.func @transform_18(%arg0: i32) -> (i32, i32) {
    %c0_i32 = arith.constant 0 : i32
    %c0_i32_0 = arith.constant 0 : i32
    %c0_i32_1 = arith.constant 0 : i32
    return %c0_i32, %c0_i32_0 : i32, i32
  }
  func.func @transform_19(%arg0: i32) -> (i32, i32) {
    %c0_i32 = arith.constant 0 : i32
    %c0_i32_0 = arith.constant 0 : i32
    %c0_i32_1 = arith.constant 0 : i32
    return %c0_i32, %c0_i32_0 : i32, i32
  }
  func.func @transform_20(%arg0: i32) -> (i32, i32, i32) {
    %c0_i32 = arith.constant 0 : i32
    %c0_i32_0 = arith.constant 0 : i32
    %c0_i32_1 = arith.constant 0 : i32
    return %arg0, %c0_i32, %c0_i32_0 : i32, i32, i32
  }
}

module attributes {stable_mosaic.version = 11 : i64} {
  func.func @fftnet_kernel(%arg0: i32, %arg1: memref<2x32x16xf32, #tpu.memory_space<vmem>>, %arg2: memref<1x32x16xf32, #tpu.memory_space<vmem>>, %arg3: memref<16x16xbf16, #tpu.memory_space<vmem>>, %arg4: memref<16x16xbf16, #tpu.memory_space<vmem>>, %arg5: memref<16x16xbf16, #tpu.memory_space<vmem>>, %arg6: memref<16x16xbf16, #tpu.memory_space<vmem>>, %arg7: memref<2x32x1xf32, #tpu.memory_space<vmem>>, %arg8: memref<2x32x1xf32, #tpu.memory_space<vmem>>, %arg9: memref<2x128x128xbf16, #tpu.memory_space<vmem>>, %arg10: memref<2x128x1xf32, #tpu.memory_space<vmem>>, %arg11: memref<2x128x128xbf16, #tpu.memory_space<vmem>>, %arg12: memref<2x128x1xf32, #tpu.memory_space<vmem>>, %arg13: memref<2x32x1xf32, #tpu.memory_space<vmem>>, %arg14: memref<2x32x1xf32, #tpu.memory_space<vmem>>, %arg15: memref<2x256x64xbf16, #tpu.memory_space<vmem>>, %arg16: memref<2x256x1xf32, #tpu.memory_space<vmem>>, %arg17: memref<2x64x256xbf16, #tpu.memory_space<vmem>>, %arg18: memref<2x64x1xf32, #tpu.memory_space<vmem>>, %arg19: memref<32x1xf32, #tpu.memory_space<vmem>>, %arg20: memref<32x1xf32, #tpu.memory_space<vmem>>, %arg21: memref<2x32x16xf32, #tpu.memory_space<vmem>>) attributes {dimension_semantics = [#tpu.dimension_semantics<parallel>], iteration_bounds = array<i64: 1>, scalar_prefetch = 0 : i64, scratch_operands = 0 : i64, tpu.core_type = #tpu.core_type<tc>, window_params = [{transform_indices = @transform_0, window_bounds = array<i64: 2, 32, 16>}, {pipeline_mode = #tpu.pipeline_mode<synchronous>, transform_indices = @transform_1, window_bounds = array<i64: 1, 32, 16>}, {pipeline_mode = #tpu.pipeline_mode<synchronous>, transform_indices = @transform_2, window_bounds = array<i64: 16, 16>}, {pipeline_mode = #tpu.pipeline_mode<synchronous>, transform_indices = @transform_3, window_bounds = array<i64: 16, 16>}, {pipeline_mode = #tpu.pipeline_mode<synchronous>, transform_indices = @transform_4, window_bounds = array<i64: 16, 16>}, {pipeline_mode = #tpu.pipeline_mode<synchronous>, transform_indices = @transform_5, window_bounds = array<i64: 16, 16>}, {pipeline_mode = #tpu.pipeline_mode<synchronous>, transform_indices = @transform_6, window_bounds = array<i64: 2, 32, 1>}, {pipeline_mode = #tpu.pipeline_mode<synchronous>, transform_indices = @transform_7, window_bounds = array<i64: 2, 32, 1>}, {pipeline_mode = #tpu.pipeline_mode<synchronous>, transform_indices = @transform_8, window_bounds = array<i64: 2, 128, 128>}, {pipeline_mode = #tpu.pipeline_mode<synchronous>, transform_indices = @transform_9, window_bounds = array<i64: 2, 128, 1>}, {pipeline_mode = #tpu.pipeline_mode<synchronous>, transform_indices = @transform_10, window_bounds = array<i64: 2, 128, 128>}, {pipeline_mode = #tpu.pipeline_mode<synchronous>, transform_indices = @transform_11, window_bounds = array<i64: 2, 128, 1>}, {pipeline_mode = #tpu.pipeline_mode<synchronous>, transform_indices = @transform_12, window_bounds = array<i64: 2, 32, 1>}, {pipeline_mode = #tpu.pipeline_mode<synchronous>, transform_indices = @transform_13, window_bounds = array<i64: 2, 32, 1>}, {pipeline_mode = #tpu.pipeline_mode<synchronous>, transform_indices = @transform_14, window_bounds = array<i64: 2, 256, 64>}, {pipeline_mode = #tpu.pipeline_mode<synchronous>, transform_indices = @transform_15, window_bounds = array<i64: 2, 256, 1>}, {pipeline_mode = #tpu.pipeline_mode<synchronous>, transform_indices = @transform_16, window_bounds = array<i64: 2, 64, 256>}, {pipeline_mode = #tpu.pipeline_mode<synchronous>, transform_indices = @transform_17, window_bounds = array<i64: 2, 64, 1>}, {pipeline_mode = #tpu.pipeline_mode<synchronous>, transform_indices = @transform_18, window_bounds = array<i64: 32, 1>}, {pipeline_mode = #tpu.pipeline_mode<synchronous>, transform_indices = @transform_19, window_bounds = array<i64: 32, 1>}, {transform_indices = @transform_20, window_bounds = array<i64: 2, 32, 16>}]} {
    %c0 = arith.constant 0 : index
    %c0_0 = arith.constant 0 : index
    %c0_1 = arith.constant 0 : index
    %0 = vector.load %arg1[%c0, %c0_0, %c0_1] : memref<2x32x16xf32, #tpu.memory_space<vmem>>, vector<2x32x16xf32>
    %c0_2 = arith.constant 0 : index
    %c0_3 = arith.constant 0 : index
    %c0_4 = arith.constant 0 : index
    %1 = vector.load %arg2[%c0_2, %c0_3, %c0_4] : memref<1x32x16xf32, #tpu.memory_space<vmem>>, vector<1x32x16xf32>
    %2 = vector.broadcast %1 : vector<1x32x16xf32> to vector<2x32x16xf32>
    %3 = arith.addf %0, %2 : vector<2x32x16xf32>
    %4 = vector.shape_cast %3 : vector<2x32x16xf32> to vector<64x16xf32>
    %c0_i32 = arith.constant 0 : i32
    %c2_i32 = arith.constant 2 : i32
    %5 = arith.addi %c0_i32, %c2_i32 : i32
    %c1_i32 = arith.constant 1 : i32
    %6 = scf.for %arg22 = %c0_i32 to %5 step %c1_i32 iter_args(%arg23 = %4) -> (vector<64x16xf32>)  : i32 {
      %35 = arith.index_cast %arg22 : i32 to index
      %c0_17 = arith.constant 0 : index
      %c0_18 = arith.constant 0 : index
      %36 = vector.load %arg7[%35, %c0_17, %c0_18] : memref<2x32x1xf32, #tpu.memory_space<vmem>>, vector<1x32x1xf32>
      %37 = vector.shape_cast %36 : vector<1x32x1xf32> to vector<32x1xf32>
      %38 = arith.index_cast %arg22 : i32 to index
      %c0_19 = arith.constant 0 : index
      %c0_20 = arith.constant 0 : index
      %39 = vector.load %arg8[%38, %c0_19, %c0_20] : memref<2x32x1xf32, #tpu.memory_space<vmem>>, vector<1x32x1xf32>
      %40 = vector.shape_cast %39 : vector<1x32x1xf32> to vector<32x1xf32>
      %41 = vector.shape_cast %arg23 : vector<64x16xf32> to vector<2x32x16xf32>
      %cst_21 = arith.constant dense<0.000000e+00> : vector<2x16xf32>
      %42 = vector.multi_reduction <add>, %41, %cst_21 [1] : vector<2x32x16xf32> to vector<2x16xf32>
      %43 = vector.shape_cast %42 : vector<2x16xf32> to vector<2x1x16xf32>
      %cst_22 = arith.constant 3.200000e+01 : f32
      %44 = vector.broadcast %cst_22 : f32 to vector<2x1x16xf32>
      %45 = arith.divf %43, %44 : vector<2x1x16xf32>
      %46 = vector.broadcast %45 : vector<2x1x16xf32> to vector<2x32x16xf32>
      %47 = arith.subf %41, %46 : vector<2x32x16xf32>
      %48 = arith.mulf %47, %47 : vector<2x32x16xf32>
      %cst_23 = arith.constant dense<0.000000e+00> : vector<2x16xf32>
      %49 = vector.multi_reduction <add>, %48, %cst_23 [1] : vector<2x32x16xf32> to vector<2x16xf32>
      %50 = vector.shape_cast %49 : vector<2x16xf32> to vector<2x1x16xf32>
      %cst_24 = arith.constant 3.200000e+01 : f32
      %51 = vector.broadcast %cst_24 : f32 to vector<2x1x16xf32>
      %52 = arith.divf %50, %51 : vector<2x1x16xf32>
      %cst_25 = arith.constant 9.99999997E-7 : f32
      %53 = vector.broadcast %cst_25 : f32 to vector<2x1x16xf32>
      %54 = arith.addf %52, %53 : vector<2x1x16xf32>
      %55 = math.rsqrt %54 : vector<2x1x16xf32>
      %56 = vector.broadcast %55 : vector<2x1x16xf32> to vector<2x32x16xf32>
      %57 = arith.mulf %47, %56 : vector<2x32x16xf32>
      %58 = vector.shape_cast %37 : vector<32x1xf32> to vector<1x32x1xf32>
      %59 = vector.broadcast %58 : vector<1x32x1xf32> to vector<2x32x16xf32>
      %60 = arith.mulf %57, %59 : vector<2x32x16xf32>
      %61 = vector.shape_cast %40 : vector<32x1xf32> to vector<1x32x1xf32>
      %62 = vector.broadcast %61 : vector<1x32x1xf32> to vector<2x32x16xf32>
      %63 = arith.addf %60, %62 : vector<2x32x16xf32>
      %64 = vector.shape_cast %63 : vector<2x32x16xf32> to vector<64x16xf32>
      %65 = arith.truncf %64 : vector<64x16xf32> to vector<64x16xbf16>
      %c0_26 = arith.constant 0 : index
      %c0_27 = arith.constant 0 : index
      %66 = vector.load %arg3[%c0_26, %c0_27] : memref<16x16xbf16, #tpu.memory_space<vmem>>, vector<16x16xbf16>
      %cst_28 = arith.constant dense<0.000000e+00> : vector<64x16xf32>
      %67 = tpu.matmul %65, %66, %cst_28 {dimension_numbers = #tpu.dot_dimension_numbers<[1], [0], [0], [1], [0, 0, 1, 1], [], []>} : vector<64x16xbf16>, vector<16x16xbf16>, vector<64x16xf32> -> vector<64x16xf32>
      %c0_29 = arith.constant 0 : index
      %c0_30 = arith.constant 0 : index
      %68 = vector.load %arg4[%c0_29, %c0_30] : memref<16x16xbf16, #tpu.memory_space<vmem>>, vector<16x16xbf16>
      %cst_31 = arith.constant dense<0.000000e+00> : vector<64x16xf32>
      %69 = tpu.matmul %65, %68, %cst_31 {dimension_numbers = #tpu.dot_dimension_numbers<[1], [0], [0], [1], [0, 0, 1, 1], [], []>} : vector<64x16xbf16>, vector<16x16xbf16>, vector<64x16xf32> -> vector<64x16xf32>
      %70 = vector.shape_cast %67 : vector<64x16xf32> to vector<2x32x16xf32>
      %71 = vector.shape_cast %69 : vector<64x16xf32> to vector<2x32x16xf32>
      %72 = tpu.concatenate %70, %71 in 1 : vector<2x32x16xf32>, vector<2x32x16xf32> -> vector<2x64x16xf32>
      %73 = vector.shape_cast %72 : vector<2x64x16xf32> to vector<128x16xf32>
      %74 = arith.index_cast %arg22 : i32 to index
      %c0_32 = arith.constant 0 : index
      %c0_33 = arith.constant 0 : index
      %75 = vector.load %arg9[%74, %c0_32, %c0_33] : memref<2x128x128xbf16, #tpu.memory_space<vmem>>, vector<1x128x128xbf16>
      %76 = vector.shape_cast %75 : vector<1x128x128xbf16> to vector<128x128xbf16>
      %77 = arith.truncf %73 : vector<128x16xf32> to vector<128x16xbf16>
      %cst_34 = arith.constant dense<0.000000e+00> : vector<128x16xf32>
      %78 = tpu.matmul %76, %77, %cst_34 {dimension_numbers = #tpu.dot_dimension_numbers<[1], [0], [0], [1], [0, 0, 1, 1], [], []>} : vector<128x128xbf16>, vector<128x16xbf16>, vector<128x16xf32> -> vector<128x16xf32>
      %79 = arith.index_cast %arg22 : i32 to index
      %c0_35 = arith.constant 0 : index
      %c0_36 = arith.constant 0 : index
      %80 = vector.load %arg10[%79, %c0_35, %c0_36] : memref<2x128x1xf32, #tpu.memory_space<vmem>>, vector<1x128x1xf32>
      %81 = vector.shape_cast %80 : vector<1x128x1xf32> to vector<128x1xf32>
      %82 = vector.broadcast %81 : vector<128x1xf32> to vector<128x16xf32>
      %83 = arith.addf %78, %82 : vector<128x16xf32>
      %cst_37 = arith.constant 0.000000e+00 : f32
      %84 = vector.broadcast %cst_37 : f32 to vector<128x16xf32>
      %85 = arith.maximumf %83, %84 : vector<128x16xf32>
      %86 = arith.index_cast %arg22 : i32 to index
      %c0_38 = arith.constant 0 : index
      %c0_39 = arith.constant 0 : index
      %87 = vector.load %arg11[%86, %c0_38, %c0_39] : memref<2x128x128xbf16, #tpu.memory_space<vmem>>, vector<1x128x128xbf16>
      %88 = vector.shape_cast %87 : vector<1x128x128xbf16> to vector<128x128xbf16>
      %89 = arith.truncf %85 : vector<128x16xf32> to vector<128x16xbf16>
      %cst_40 = arith.constant dense<0.000000e+00> : vector<128x16xf32>
      %90 = tpu.matmul %88, %89, %cst_40 {dimension_numbers = #tpu.dot_dimension_numbers<[1], [0], [0], [1], [0, 0, 1, 1], [], []>} : vector<128x128xbf16>, vector<128x16xbf16>, vector<128x16xf32> -> vector<128x16xf32>
      %91 = arith.index_cast %arg22 : i32 to index
      %c0_41 = arith.constant 0 : index
      %c0_42 = arith.constant 0 : index
      %92 = vector.load %arg12[%91, %c0_41, %c0_42] : memref<2x128x1xf32, #tpu.memory_space<vmem>>, vector<1x128x1xf32>
      %93 = vector.shape_cast %92 : vector<1x128x1xf32> to vector<128x1xf32>
      %94 = vector.broadcast %93 : vector<128x1xf32> to vector<128x16xf32>
      %95 = arith.addf %90, %94 : vector<128x16xf32>
      %cst_43 = arith.constant 0.00999999977 : f32
      %96 = vector.broadcast %cst_43 : f32 to vector<128x16xf32>
      %97 = arith.cmpf ogt, %95, %96 : vector<128x16xf32>
      %cst_44 = arith.constant 0.00999999977 : f32
      %98 = vector.broadcast %cst_44 : f32 to vector<128x16xf32>
      %99 = arith.subf %95, %98 : vector<128x16xf32>
      %cst_45 = arith.constant -0.00999999977 : f32
      %100 = vector.broadcast %cst_45 : f32 to vector<128x16xf32>
      %101 = arith.cmpf olt, %95, %100 : vector<128x16xf32>
      %cst_46 = arith.constant 0.00999999977 : f32
      %102 = vector.broadcast %cst_46 : f32 to vector<128x16xf32>
      %103 = arith.addf %95, %102 : vector<128x16xf32>
      %cst_47 = arith.constant 0.000000e+00 : f32
      %104 = vector.broadcast %cst_47 : f32 to vector<128x16xf32>
      %105 = arith.select %101, %103, %104 : vector<128x16xi1>, vector<128x16xf32>
      %106 = arith.select %97, %99, %105 : vector<128x16xi1>, vector<128x16xf32>
      %107 = vector.shape_cast %106 : vector<128x16xf32> to vector<2x64x16xf32>
      %108 = vector.extract_strided_slice %107 {offsets = [0, 0, 0], sizes = [2, 32, 16], strides = [1, 1, 1]} : vector<2x64x16xf32> to vector<2x32x16xf32>
      %109 = vector.shape_cast %108 : vector<2x32x16xf32> to vector<64x16xf32>
      %110 = vector.extract_strided_slice %107 {offsets = [0, 32, 0], sizes = [2, 32, 16], strides = [1, 1, 1]} : vector<2x64x16xf32> to vector<2x32x16xf32>
      %111 = vector.shape_cast %110 : vector<2x32x16xf32> to vector<64x16xf32>
      %112 = arith.truncf %109 : vector<64x16xf32> to vector<64x16xbf16>
      %c0_48 = arith.constant 0 : index
      %c0_49 = arith.constant 0 : index
      %113 = vector.load %arg5[%c0_48, %c0_49] : memref<16x16xbf16, #tpu.memory_space<vmem>>, vector<16x16xbf16>
      %cst_50 = arith.constant dense<0.000000e+00> : vector<64x16xf32>
      %114 = tpu.matmul %112, %113, %cst_50 {dimension_numbers = #tpu.dot_dimension_numbers<[1], [0], [0], [1], [0, 0, 1, 1], [], []>} : vector<64x16xbf16>, vector<16x16xbf16>, vector<64x16xf32> -> vector<64x16xf32>
      %115 = arith.truncf %111 : vector<64x16xf32> to vector<64x16xbf16>
      %c0_51 = arith.constant 0 : index
      %c0_52 = arith.constant 0 : index
      %116 = vector.load %arg6[%c0_51, %c0_52] : memref<16x16xbf16, #tpu.memory_space<vmem>>, vector<16x16xbf16>
      %cst_53 = arith.constant dense<0.000000e+00> : vector<64x16xf32>
      %117 = tpu.matmul %115, %116, %cst_53 {dimension_numbers = #tpu.dot_dimension_numbers<[1], [0], [0], [1], [0, 0, 1, 1], [], []>} : vector<64x16xbf16>, vector<16x16xbf16>, vector<64x16xf32> -> vector<64x16xf32>
      %118 = arith.addf %114, %117 : vector<64x16xf32>
      %119 = arith.addf %118, %64 : vector<64x16xf32>
      %120 = arith.addf %119, %arg23 : vector<64x16xf32>
      %121 = arith.index_cast %arg22 : i32 to index
      %c0_54 = arith.constant 0 : index
      %c0_55 = arith.constant 0 : index
      %122 = vector.load %arg13[%121, %c0_54, %c0_55] : memref<2x32x1xf32, #tpu.memory_space<vmem>>, vector<1x32x1xf32>
      %123 = vector.shape_cast %122 : vector<1x32x1xf32> to vector<32x1xf32>
      %124 = arith.index_cast %arg22 : i32 to index
      %c0_56 = arith.constant 0 : index
      %c0_57 = arith.constant 0 : index
      %125 = vector.load %arg14[%124, %c0_56, %c0_57] : memref<2x32x1xf32, #tpu.memory_space<vmem>>, vector<1x32x1xf32>
      %126 = vector.shape_cast %125 : vector<1x32x1xf32> to vector<32x1xf32>
      %127 = vector.shape_cast %120 : vector<64x16xf32> to vector<2x32x16xf32>
      %cst_58 = arith.constant dense<0.000000e+00> : vector<2x16xf32>
      %128 = vector.multi_reduction <add>, %127, %cst_58 [1] : vector<2x32x16xf32> to vector<2x16xf32>
      %129 = vector.shape_cast %128 : vector<2x16xf32> to vector<2x1x16xf32>
      %cst_59 = arith.constant 3.200000e+01 : f32
      %130 = vector.broadcast %cst_59 : f32 to vector<2x1x16xf32>
      %131 = arith.divf %129, %130 : vector<2x1x16xf32>
      %132 = vector.broadcast %131 : vector<2x1x16xf32> to vector<2x32x16xf32>
      %133 = arith.subf %127, %132 : vector<2x32x16xf32>
      %134 = arith.mulf %133, %133 : vector<2x32x16xf32>
      %cst_60 = arith.constant dense<0.000000e+00> : vector<2x16xf32>
      %135 = vector.multi_reduction <add>, %134, %cst_60 [1] : vector<2x32x16xf32> to vector<2x16xf32>
      %136 = vector.shape_cast %135 : vector<2x16xf32> to vector<2x1x16xf32>
      %cst_61 = arith.constant 3.200000e+01 : f32
      %137 = vector.broadcast %cst_61 : f32 to vector<2x1x16xf32>
      %138 = arith.divf %136, %137 : vector<2x1x16xf32>
      %cst_62 = arith.constant 9.99999997E-7 : f32
      %139 = vector.broadcast %cst_62 : f32 to vector<2x1x16xf32>
      %140 = arith.addf %138, %139 : vector<2x1x16xf32>
      %141 = math.rsqrt %140 : vector<2x1x16xf32>
      %142 = vector.broadcast %141 : vector<2x1x16xf32> to vector<2x32x16xf32>
      %143 = arith.mulf %133, %142 : vector<2x32x16xf32>
      %144 = vector.shape_cast %123 : vector<32x1xf32> to vector<1x32x1xf32>
      %145 = vector.broadcast %144 : vector<1x32x1xf32> to vector<2x32x16xf32>
      %146 = arith.mulf %143, %145 : vector<2x32x16xf32>
      %147 = vector.shape_cast %126 : vector<32x1xf32> to vector<1x32x1xf32>
      %148 = vector.broadcast %147 : vector<1x32x1xf32> to vector<2x32x16xf32>
      %149 = arith.addf %146, %148 : vector<2x32x16xf32>
      %150 = vector.shape_cast %149 : vector<2x32x16xf32> to vector<64x16xf32>
      %151 = arith.truncf %150 : vector<64x16xf32> to vector<64x16xbf16>
      %152 = arith.index_cast %arg22 : i32 to index
      %c0_63 = arith.constant 0 : index
      %c0_64 = arith.constant 0 : index
      %153 = vector.load %arg15[%152, %c0_63, %c0_64] : memref<2x256x64xbf16, #tpu.memory_space<vmem>>, vector<1x256x64xbf16>
      %154 = vector.shape_cast %153 : vector<1x256x64xbf16> to vector<256x64xbf16>
      %cst_65 = arith.constant dense<0.000000e+00> : vector<256x16xf32>
      %155 = tpu.matmul %154, %151, %cst_65 {dimension_numbers = #tpu.dot_dimension_numbers<[1], [0], [0], [1], [0, 0, 1, 1], [], []>} : vector<256x64xbf16>, vector<64x16xbf16>, vector<256x16xf32> -> vector<256x16xf32>
      %156 = arith.index_cast %arg22 : i32 to index
      %c0_66 = arith.constant 0 : index
      %c0_67 = arith.constant 0 : index
      %157 = vector.load %arg16[%156, %c0_66, %c0_67] : memref<2x256x1xf32, #tpu.memory_space<vmem>>, vector<1x256x1xf32>
      %158 = vector.shape_cast %157 : vector<1x256x1xf32> to vector<256x1xf32>
      %159 = vector.broadcast %158 : vector<256x1xf32> to vector<256x16xf32>
      %160 = arith.addf %155, %159 : vector<256x16xf32>
      %cst_68 = arith.constant 5.000000e-01 : f32
      %161 = vector.broadcast %cst_68 : f32 to vector<256x16xf32>
      %162 = arith.mulf %161, %160 : vector<256x16xf32>
      %cst_69 = arith.constant 4.471500e-02 : f32
      %163 = vector.broadcast %cst_69 : f32 to vector<256x16xf32>
      %164 = arith.mulf %163, %160 : vector<256x16xf32>
      %165 = arith.mulf %164, %160 : vector<256x16xf32>
      %166 = arith.mulf %165, %160 : vector<256x16xf32>
      %167 = arith.addf %160, %166 : vector<256x16xf32>
      %cst_70 = arith.constant 0.797884583 : f32
      %168 = vector.broadcast %cst_70 : f32 to vector<256x16xf32>
      %169 = arith.mulf %168, %167 : vector<256x16xf32>
      %170 = math.tanh %169 : vector<256x16xf32>
      %cst_71 = arith.constant 1.000000e+00 : f32
      %171 = vector.broadcast %cst_71 : f32 to vector<256x16xf32>
      %172 = arith.addf %171, %170 : vector<256x16xf32>
      %173 = arith.mulf %162, %172 : vector<256x16xf32>
      %174 = arith.index_cast %arg22 : i32 to index
      %c0_72 = arith.constant 0 : index
      %c0_73 = arith.constant 0 : index
      %175 = vector.load %arg17[%174, %c0_72, %c0_73] : memref<2x64x256xbf16, #tpu.memory_space<vmem>>, vector<1x64x256xbf16>
      %176 = vector.shape_cast %175 : vector<1x64x256xbf16> to vector<64x256xbf16>
      %177 = arith.truncf %173 : vector<256x16xf32> to vector<256x16xbf16>
      %cst_74 = arith.constant dense<0.000000e+00> : vector<64x16xf32>
      %178 = tpu.matmul %176, %177, %cst_74 {dimension_numbers = #tpu.dot_dimension_numbers<[1], [0], [0], [1], [0, 0, 1, 1], [], []>} : vector<64x256xbf16>, vector<256x16xbf16>, vector<64x16xf32> -> vector<64x16xf32>
      %179 = arith.index_cast %arg22 : i32 to index
      %c0_75 = arith.constant 0 : index
      %c0_76 = arith.constant 0 : index
      %180 = vector.load %arg18[%179, %c0_75, %c0_76] : memref<2x64x1xf32, #tpu.memory_space<vmem>>, vector<1x64x1xf32>
      %181 = vector.shape_cast %180 : vector<1x64x1xf32> to vector<64x1xf32>
      %182 = vector.broadcast %181 : vector<64x1xf32> to vector<64x16xf32>
      %183 = arith.addf %178, %182 : vector<64x16xf32>
      %184 = arith.addf %183, %120 : vector<64x16xf32>
      scf.yield %184 : vector<64x16xf32>
    }
    %c2_i32_5 = arith.constant 2 : i32
    %c0_6 = arith.constant 0 : index
    %c0_7 = arith.constant 0 : index
    %7 = vector.load %arg19[%c0_6, %c0_7] : memref<32x1xf32, #tpu.memory_space<vmem>>, vector<32x1xf32>
    %c0_8 = arith.constant 0 : index
    %c0_9 = arith.constant 0 : index
    %8 = vector.load %arg20[%c0_8, %c0_9] : memref<32x1xf32, #tpu.memory_space<vmem>>, vector<32x1xf32>
    %9 = vector.shape_cast %6 : vector<64x16xf32> to vector<2x32x16xf32>
    %cst = arith.constant dense<0.000000e+00> : vector<2x16xf32>
    %10 = vector.multi_reduction <add>, %9, %cst [1] : vector<2x32x16xf32> to vector<2x16xf32>
    %11 = vector.shape_cast %10 : vector<2x16xf32> to vector<2x1x16xf32>
    %cst_10 = arith.constant 3.200000e+01 : f32
    %12 = vector.broadcast %cst_10 : f32 to vector<2x1x16xf32>
    %13 = arith.divf %11, %12 : vector<2x1x16xf32>
    %14 = vector.broadcast %13 : vector<2x1x16xf32> to vector<2x32x16xf32>
    %15 = arith.subf %9, %14 : vector<2x32x16xf32>
    %16 = arith.mulf %15, %15 : vector<2x32x16xf32>
    %cst_11 = arith.constant dense<0.000000e+00> : vector<2x16xf32>
    %17 = vector.multi_reduction <add>, %16, %cst_11 [1] : vector<2x32x16xf32> to vector<2x16xf32>
    %18 = vector.shape_cast %17 : vector<2x16xf32> to vector<2x1x16xf32>
    %cst_12 = arith.constant 3.200000e+01 : f32
    %19 = vector.broadcast %cst_12 : f32 to vector<2x1x16xf32>
    %20 = arith.divf %18, %19 : vector<2x1x16xf32>
    %cst_13 = arith.constant 9.99999997E-7 : f32
    %21 = vector.broadcast %cst_13 : f32 to vector<2x1x16xf32>
    %22 = arith.addf %20, %21 : vector<2x1x16xf32>
    %23 = math.rsqrt %22 : vector<2x1x16xf32>
    %24 = vector.broadcast %23 : vector<2x1x16xf32> to vector<2x32x16xf32>
    %25 = arith.mulf %15, %24 : vector<2x32x16xf32>
    %26 = vector.shape_cast %7 : vector<32x1xf32> to vector<1x32x1xf32>
    %27 = vector.broadcast %26 : vector<1x32x1xf32> to vector<2x32x16xf32>
    %28 = arith.mulf %25, %27 : vector<2x32x16xf32>
    %29 = vector.shape_cast %8 : vector<32x1xf32> to vector<1x32x1xf32>
    %30 = vector.broadcast %29 : vector<1x32x1xf32> to vector<2x32x16xf32>
    %31 = arith.addf %28, %30 : vector<2x32x16xf32>
    %32 = vector.shape_cast %31 : vector<2x32x16xf32> to vector<64x16xf32>
    %33 = vector.shape_cast %32 : vector<64x16xf32> to vector<2x32x16xf32>
    %c0_14 = arith.constant 0 : index
    %c0_15 = arith.constant 0 : index
    %c0_16 = arith.constant 0 : index
    %34 = vector.load %arg21[%c0_14, %c0_15, %c0_16] : memref<2x32x16xf32, #tpu.memory_space<vmem>>, vector<2x32x16xf32>
    tpu.vector_store %arg21[%c0_14, %c0_15, %c0_16], %33 {strides = array<i32>} : memref<2x32x16xf32, #tpu.memory_space<vmem>>, vector<2x32x16xf32>,
    return
  }
  func.func @transform_0(%arg0: i32) -> (i32, i32, i32) {
    %c0_i32 = arith.constant 0 : i32
    %c0_i32_0 = arith.constant 0 : i32
    %c0_i32_1 = arith.constant 0 : i32
    return %arg0, %c0_i32, %c0_i32_0 : i32, i32, i32
  }
  func.func @transform_1(%arg0: i32) -> (i32, i32, i32) {
    %c0_i32 = arith.constant 0 : i32
    %c0_i32_0 = arith.constant 0 : i32
    %c0_i32_1 = arith.constant 0 : i32
    %c0_i32_2 = arith.constant 0 : i32
    return %c0_i32, %c0_i32_0, %c0_i32_1 : i32, i32, i32
  }
  func.func @transform_2(%arg0: i32) -> (i32, i32) {
    %c0_i32 = arith.constant 0 : i32
    %c0_i32_0 = arith.constant 0 : i32
    %c0_i32_1 = arith.constant 0 : i32
    return %c0_i32, %c0_i32_0 : i32, i32
  }
  func.func @transform_3(%arg0: i32) -> (i32, i32) {
    %c0_i32 = arith.constant 0 : i32
    %c0_i32_0 = arith.constant 0 : i32
    %c0_i32_1 = arith.constant 0 : i32
    return %c0_i32, %c0_i32_0 : i32, i32
  }
  func.func @transform_4(%arg0: i32) -> (i32, i32) {
    %c0_i32 = arith.constant 0 : i32
    %c0_i32_0 = arith.constant 0 : i32
    %c0_i32_1 = arith.constant 0 : i32
    return %c0_i32, %c0_i32_0 : i32, i32
  }
  func.func @transform_5(%arg0: i32) -> (i32, i32) {
    %c0_i32 = arith.constant 0 : i32
    %c0_i32_0 = arith.constant 0 : i32
    %c0_i32_1 = arith.constant 0 : i32
    return %c0_i32, %c0_i32_0 : i32, i32
  }
  func.func @transform_6(%arg0: i32) -> (i32, i32, i32) {
    %c0_i32 = arith.constant 0 : i32
    %c0_i32_0 = arith.constant 0 : i32
    %c0_i32_1 = arith.constant 0 : i32
    %c0_i32_2 = arith.constant 0 : i32
    return %c0_i32, %c0_i32_0, %c0_i32_1 : i32, i32, i32
  }
  func.func @transform_7(%arg0: i32) -> (i32, i32, i32) {
    %c0_i32 = arith.constant 0 : i32
    %c0_i32_0 = arith.constant 0 : i32
    %c0_i32_1 = arith.constant 0 : i32
    %c0_i32_2 = arith.constant 0 : i32
    return %c0_i32, %c0_i32_0, %c0_i32_1 : i32, i32, i32
  }
  func.func @transform_8(%arg0: i32) -> (i32, i32, i32) {
    %c0_i32 = arith.constant 0 : i32
    %c0_i32_0 = arith.constant 0 : i32
    %c0_i32_1 = arith.constant 0 : i32
    %c0_i32_2 = arith.constant 0 : i32
    return %c0_i32, %c0_i32_0, %c0_i32_1 : i32, i32, i32
  }
  func.func @transform_9(%arg0: i32) -> (i32, i32, i32) {
    %c0_i32 = arith.constant 0 : i32
    %c0_i32_0 = arith.constant 0 : i32
    %c0_i32_1 = arith.constant 0 : i32
    %c0_i32_2 = arith.constant 0 : i32
    return %c0_i32, %c0_i32_0, %c0_i32_1 : i32, i32, i32
  }
  func.func @transform_10(%arg0: i32) -> (i32, i32, i32) {
    %c0_i32 = arith.constant 0 : i32
    %c0_i32_0 = arith.constant 0 : i32
    %c0_i32_1 = arith.constant 0 : i32
    %c0_i32_2 = arith.constant 0 : i32
    return %c0_i32, %c0_i32_0, %c0_i32_1 : i32, i32, i32
  }
  func.func @transform_11(%arg0: i32) -> (i32, i32, i32) {
    %c0_i32 = arith.constant 0 : i32
    %c0_i32_0 = arith.constant 0 : i32
    %c0_i32_1 = arith.constant 0 : i32
    %c0_i32_2 = arith.constant 0 : i32
    return %c0_i32, %c0_i32_0, %c0_i32_1 : i32, i32, i32
  }
  func.func @transform_12(%arg0: i32) -> (i32, i32, i32) {
    %c0_i32 = arith.constant 0 : i32
    %c0_i32_0 = arith.constant 0 : i32
    %c0_i32_1 = arith.constant 0 : i32
    %c0_i32_2 = arith.constant 0 : i32
    return %c0_i32, %c0_i32_0, %c0_i32_1 : i32, i32, i32
  }
  func.func @transform_13(%arg0: i32) -> (i32, i32, i32) {
    %c0_i32 = arith.constant 0 : i32
    %c0_i32_0 = arith.constant 0 : i32
    %c0_i32_1 = arith.constant 0 : i32
    %c0_i32_2 = arith.constant 0 : i32
    return %c0_i32, %c0_i32_0, %c0_i32_1 : i32, i32, i32
  }
  func.func @transform_14(%arg0: i32) -> (i32, i32, i32) {
    %c0_i32 = arith.constant 0 : i32
    %c0_i32_0 = arith.constant 0 : i32
    %c0_i32_1 = arith.constant 0 : i32
    %c0_i32_2 = arith.constant 0 : i32
    return %c0_i32, %c0_i32_0, %c0_i32_1 : i32, i32, i32
  }
  func.func @transform_15(%arg0: i32) -> (i32, i32, i32) {
    %c0_i32 = arith.constant 0 : i32
    %c0_i32_0 = arith.constant 0 : i32
    %c0_i32_1 = arith.constant 0 : i32
    %c0_i32_2 = arith.constant 0 : i32
    return %c0_i32, %c0_i32_0, %c0_i32_1 : i32, i32, i32
  }
  func.func @transform_16(%arg0: i32) -> (i32, i32, i32) {
    %c0_i32 = arith.constant 0 : i32
    %c0_i32_0 = arith.constant 0 : i32
    %c0_i32_1 = arith.constant 0 : i32
    %c0_i32_2 = arith.constant 0 : i32
    return %c0_i32, %c0_i32_0, %c0_i32_1 : i32, i32, i32
  }
  func.func @transform_17(%arg0: i32) -> (i32, i32, i32) {
    %c0_i32 = arith.constant 0 : i32
    %c0_i32_0 = arith.constant 0 : i32
    %c0_i32_1 = arith.constant 0 : i32
    %c0_i32_2 = arith.constant 0 : i32
    return %c0_i32, %c0_i32_0, %c0_i32_1 : i32, i32, i32
  }
  func.func @transform_18(%arg0: i32) -> (i32, i32) {
    %c0_i32 = arith.constant 0 : i32
    %c0_i32_0 = arith.constant 0 : i32
    %c0_i32_1 = arith.constant 0 : i32
    return %c0_i32, %c0_i32_0 : i32, i32
  }
  func.func @transform_19(%arg0: i32) -> (i32, i32) {
    %c0_i32 = arith.constant 0 : i32
    %c0_i32_0 = arith.constant 0 : i32
    %c0_i32_1 = arith.constant 0 : i32
    return %c0_i32, %c0_i32_0 : i32, i32
  }
  func.func @transform_20(%arg0: i32) -> (i32, i32, i32) {
    %c0_i32 = arith.constant 0 : i32
    %c0_i32_0 = arith.constant 0 : i32
    %c0_i32_1 = arith.constant 0 : i32
    return %arg0, %c0_i32, %c0_i32_0 : i32, i32, i32
  }
}

</mosaic_0001>

<llo_original>
// kernel: tpu_custom_call.1
$region0: #{tpu_custom_call.1}
  #allocation0 [shape = 'u32[]', space=smem, size = 0x4, offset = 0x4, fixed_abs, tag = 'smem constant byte address 0x4 - core index']
  #allocation1 [shape = 'u32[144,128]{1,0:T(1,128)}', space=vmem, size = 0x12000, scoped, tag = 'internal scratch']
  %s0 = inlined_call_operand.vmem [shape: f32[2,32,16], index: 0, kind: input, shape index: {}]
  %s1 = inlined_call_operand.vmem [shape: f32[1,32,16], index: 1, kind: input, shape index: {}]
  %s2 = inlined_call_operand.vmem [shape: bf16[16,16], index: 2, kind: input, shape index: {}]
  %s3 = inlined_call_operand.vmem [shape: bf16[16,16], index: 3, kind: input, shape index: {}]
  %s4 = inlined_call_operand.vmem [shape: bf16[16,16], index: 4, kind: input, shape index: {}]
  %s5 = inlined_call_operand.vmem [shape: bf16[16,16], index: 5, kind: input, shape index: {}]
  %s6 = inlined_call_operand.vmem [shape: f32[2,32,1], index: 6, kind: input, shape index: {}]
  %s7 = inlined_call_operand.vmem [shape: f32[2,32,1], index: 7, kind: input, shape index: {}]
  %s8 = inlined_call_operand.vmem [shape: bf16[2,128,128], index: 8, kind: input, shape index: {}]
  %s9 = inlined_call_operand.vmem [shape: f32[2,128,1], index: 9, kind: input, shape index: {}]
  %s10 = inlined_call_operand.vmem [shape: bf16[2,128,128], index: 10, kind: input, shape index: {}]
  %s11 = inlined_call_operand.vmem [shape: f32[2,128,1], index: 11, kind: input, shape index: {}]
  %s12 = inlined_call_operand.vmem [shape: f32[2,32,1], index: 12, kind: input, shape index: {}]
  %s13 = inlined_call_operand.vmem [shape: f32[2,32,1], index: 13, kind: input, shape index: {}]
  %s14 = inlined_call_operand.vmem [shape: bf16[2,256,64], index: 14, kind: input, shape index: {}]
  %s15 = inlined_call_operand.vmem [shape: f32[2,256,1], index: 15, kind: input, shape index: {}]
  %s16 = inlined_call_operand.vmem [shape: bf16[2,64,256], index: 16, kind: input, shape index: {}]
  %s17 = inlined_call_operand.vmem [shape: f32[2,64,1], index: 17, kind: input, shape index: {}]
  %s18 = inlined_call_operand.vmem [shape: f32[32,1], index: 18, kind: input, shape index: {}]
  %s19 = inlined_call_operand.vmem [shape: f32[32,1], index: 19, kind: input, shape index: {}]
  %s20 = inlined_call_operand.vmem [shape: f32[2,32,16], index: 20, kind: output, shape index: {}]
  %s21 = sld [smem:[#allocation0]]
  $region97: #{tpu_custom_call.1} parent=0
    _
  %s23 = ssub.s32 1, %s21
  %s24 = scalar_select 0, %s23, %s21
  // Predicated region
  $region2: #{tpu_custom_call.1} parent=0 // pred_check
    _
  $region3: #{tpu_custom_call.1} parent=0 // pred_check_branch
    %26 = sbr.rel (0) target = $region5
  $region4: #{tpu_custom_call.1} parent=0 // pred_region
    _
  $region5: #{tpu_custom_call.1} parent=0 // pred_fallthru
    _
  // Predicated region
  $region6: #{tpu_custom_call.1} parent=0 // pred_check
    _
  $region7: #{tpu_custom_call.1} parent=0 // pred_check_branch
    %28 = sbr.rel (0) target = $region9
  $region8: #{tpu_custom_call.1} parent=0 // pred_region
    _
  $region9: #{tpu_custom_call.1} parent=0 // pred_fallthru
    _
  // Predicated region
  $region10: #{tpu_custom_call.1} parent=0 // pred_check
    _
  $region11: #{tpu_custom_call.1} parent=0 // pred_check_branch
    %30 = sbr.rel (0) target = $region13
  $region12: #{tpu_custom_call.1} parent=0 // pred_region
    _
  $region13: #{tpu_custom_call.1} parent=0 // pred_fallthru
    _
  // Predicated region
  $region14: #{tpu_custom_call.1} parent=0 // pred_check
    _
  $region15: #{tpu_custom_call.1} parent=0 // pred_check_branch
    %32 = sbr.rel (0) target = $region17
  $region16: #{tpu_custom_call.1} parent=0 // pred_region
    _
  $region17: #{tpu_custom_call.1} parent=0 // pred_fallthru
    _
  // Predicated region
  $region18: #{tpu_custom_call.1} parent=0 // pred_check
    _
  $region19: #{tpu_custom_call.1} parent=0 // pred_check_branch
    %34 = sbr.rel (0) target = $region21
  $region20: #{tpu_custom_call.1} parent=0 // pred_region
    _
  $region21: #{tpu_custom_call.1} parent=0 // pred_fallthru
    _
  // Predicated region
  $region22: #{tpu_custom_call.1} parent=0 // pred_check
    _
  $region23: #{tpu_custom_call.1} parent=0 // pred_check_branch
    %36 = sbr.rel (0) target = $region25
  $region24: #{tpu_custom_call.1} parent=0 // pred_region
    _
  $region25: #{tpu_custom_call.1} parent=0 // pred_fallthru
    _
  // Predicated region
  $region26: #{tpu_custom_call.1} parent=0 // pred_check
    _
  $region27: #{tpu_custom_call.1} parent=0 // pred_check_branch
    %38 = sbr.rel (0) target = $region29
  $region28: #{tpu_custom_call.1} parent=0 // pred_region
    _
  $region29: #{tpu_custom_call.1} parent=0 // pred_fallthru
    _
  // Predicated region
  $region30: #{tpu_custom_call.1} parent=0 // pred_check
    _
  $region31: #{tpu_custom_call.1} parent=0 // pred_check_branch
    %40 = sbr.rel (0) target = $region33
  $region32: #{tpu_custom_call.1} parent=0 // pred_region
    _
  $region33: #{tpu_custom_call.1} parent=0 // pred_fallthru
    _
  // Predicated region
  $region34: #{tpu_custom_call.1} parent=0 // pred_check
    _
  $region35: #{tpu_custom_call.1} parent=0 // pred_check_branch
    %42 = sbr.rel (0) target = $region37
  $region36: #{tpu_custom_call.1} parent=0 // pred_region
    _
  $region37: #{tpu_custom_call.1} parent=0 // pred_fallthru
    _
  // Predicated region
  $region38: #{tpu_custom_call.1} parent=0 // pred_check
    _
  $region39: #{tpu_custom_call.1} parent=0 // pred_check_branch
    %44 = sbr.rel (0) target = $region41
  $region40: #{tpu_custom_call.1} parent=0 // pred_region
    _
  $region41: #{tpu_custom_call.1} parent=0 // pred_fallthru
    _
  // Predicated region
  $region42: #{tpu_custom_call.1} parent=0 // pred_check
    _
  $region43: #{tpu_custom_call.1} parent=0 // pred_check_branch
    %46 = sbr.rel (0) target = $region45
  $region44: #{tpu_custom_call.1} parent=0 // pred_region
    _
  $region45: #{tpu_custom_call.1} parent=0 // pred_fallthru
    _
  // Predicated region
  $region46: #{tpu_custom_call.1} parent=0 // pred_check
    _
  $region47: #{tpu_custom_call.1} parent=0 // pred_check_branch
    %48 = sbr.rel (0) target = $region49
  $region48: #{tpu_custom_call.1} parent=0 // pred_region
    _
  $region49: #{tpu_custom_call.1} parent=0 // pred_fallthru
    _
  // Predicated region
  $region50: #{tpu_custom_call.1} parent=0 // pred_check
    _
  $region51: #{tpu_custom_call.1} parent=0 // pred_check_branch
    %50 = sbr.rel (0) target = $region53
  $region52: #{tpu_custom_call.1} parent=0 // pred_region
    _
  $region53: #{tpu_custom_call.1} parent=0 // pred_fallthru
    _
  // Predicated region
  $region54: #{tpu_custom_call.1} parent=0 // pred_check
    _
  $region55: #{tpu_custom_call.1} parent=0 // pred_check_branch
    %52 = sbr.rel (0) target = $region57
  $region56: #{tpu_custom_call.1} parent=0 // pred_region
    _
  $region57: #{tpu_custom_call.1} parent=0 // pred_fallthru
    _
  // Predicated region
  $region58: #{tpu_custom_call.1} parent=0 // pred_check
    _
  $region59: #{tpu_custom_call.1} parent=0 // pred_check_branch
    %54 = sbr.rel (0) target = $region61
  $region60: #{tpu_custom_call.1} parent=0 // pred_region
    _
  $region61: #{tpu_custom_call.1} parent=0 // pred_fallthru
    _
  // Predicated region
  $region62: #{tpu_custom_call.1} parent=0 // pred_check
    _
  $region63: #{tpu_custom_call.1} parent=0 // pred_check_branch
    %56 = sbr.rel (0) target = $region65
  $region64: #{tpu_custom_call.1} parent=0 // pred_region
    _
  $region65: #{tpu_custom_call.1} parent=0 // pred_fallthru
    _
  // Predicated region
  $region66: #{tpu_custom_call.1} parent=0 // pred_check
    _
  $region67: #{tpu_custom_call.1} parent=0 // pred_check_branch
    %58 = sbr.rel (0) target = $region69
  $region68: #{tpu_custom_call.1} parent=0 // pred_region
    _
  $region69: #{tpu_custom_call.1} parent=0 // pred_fallthru
    _
  // Predicated region
  $region70: #{tpu_custom_call.1} parent=0 // pred_check
    _
  $region71: #{tpu_custom_call.1} parent=0 // pred_check_branch
    %60 = sbr.rel (0) target = $region73
  $region72: #{tpu_custom_call.1} parent=0 // pred_region
    _
  $region73: #{tpu_custom_call.1} parent=0 // pred_fallthru
    _
  // Predicated region
  $region74: #{tpu_custom_call.1} parent=0 // pred_check
    _
  $region75: #{tpu_custom_call.1} parent=0 // pred_check_branch
    %62 = sbr.rel (0) target = $region77
  $region76: #{tpu_custom_call.1} parent=0 // pred_region
    _
  $region77: #{tpu_custom_call.1} parent=0 // pred_fallthru
    _
  // Predicated region
  $region78: #{tpu_custom_call.1} parent=0 // pred_check
    _
  $region79: #{tpu_custom_call.1} parent=0 // pred_check_branch
    %64 = sbr.rel (0) target = $region81
  $region80: #{tpu_custom_call.1} parent=0 // pred_region
    _
  $region81: #{tpu_custom_call.1} parent=0 // pred_fallthru
    _
  %v66 = vld [vmem:[%s0] sm:$0xff]
  %v67 = vld [vmem:[%s0 + $0x8] sm:$0xff]
  %v68 = vld [vmem:[%s0 + $0x10] sm:$0xff]
  %v69 = vld [vmem:[%s0 + $0x18] sm:$0xff]
  %v70 = vld [vmem:[%s0 + $0x20] sm:$0xff]
  %v71 = vld [vmem:[%s0 + $0x28] sm:$0xff]
  %v72 = vld [vmem:[%s0 + $0x30] sm:$0xff]
  %v73 = vld [vmem:[%s0 + $0x38] sm:$0xff]
  %v74 = vld [vmem:[%s1] sm:$0xff]
  %v75 = vld [vmem:[%s1 + $0x8] sm:$0xff]
  %v76 = vld [vmem:[%s1 + $0x10] sm:$0xff]
  %v77 = vld [vmem:[%s1 + $0x18] sm:$0xff]
  %v78 = vadd.f32 %v66, %v74
  %v79 = vadd.f32 %v67, %v75
  %v80 = vadd.f32 %v68, %v76
  %v81 = vadd.f32 %v69, %v77
  %v82 = vadd.f32 %v70, %v74
  %v83 = vadd.f32 %v71, %v75
  %v84 = vadd.f32 %v72, %v76
  %v85 = vadd.f32 %v73, %v77
  loop: start=0, step=1, limit=2
  $region82: #{tpu_custom_call.1} parent=0 // loop_pre_header
    _
  $region83: #{tpu_custom_call.1} parent=0 // loop_header
    %s87 = sphi 0, %s91
    %p88 = scmp.ge.s32.totalorder %s87, 2
    %v92 = vphi %v78, %v2400
    %v93 = vphi %v79, %v2401
    %v94 = vphi %v80, %v2402
    %v95 = vphi %v81, %v2403
    %v96 = vphi %v82, %v2404
    %v97 = vphi %v83, %v2405
    %v98 = vphi %v84, %v2406
    %v99 = vphi %v85, %v2407
  $region84: #{tpu_custom_call.1} parent=0 // loop_header_branch
    %90 = sbr.rel (%p88) target = $region88
  $region85: #{tpu_custom_call.1} parent=0 // loop_body
    %s100 = smul.u32 %s87, 32
    %s101 = scalar_lea.vmem %s6, %s100
    %v102 = vld [vmem:[%s101] sm:$0xff]
    %v103 = vld [vmem:[%s101 + $0x8] sm:$0xff]
    %v104 = vld [vmem:[%s101 + $0x10] sm:$0xff]
    %v105 = vld [vmem:[%s101 + $0x18] sm:$0xff]
    %s106 = scalar_lea.vmem %s7, %s100
    %v107 = vld [vmem:[%s106] sm:$0xff]
    %v108 = vld [vmem:[%s106 + $0x8] sm:$0xff]
    %v109 = vld [vmem:[%s106 + $0x10] sm:$0xff]
    %v110 = vld [vmem:[%s106 + $0x18] sm:$0xff]
    %vm111 = vcmask 130048
    %v112 = vsel %vm111, %v92, 0.0
    %v113 = vsel %vm111, %v93, 0.0
    %v114 = vadd.f32 %v112, %v113
    %v115 = vsel %vm111, %v94, 0.0
    %v116 = vadd.f32 %v114, %v115
    %v117 = vsel %vm111, %v95, 0.0
    %v118 = vadd.f32 %v116, %v117
    %v119 = vrot.slane %v118, 4
    %v120 = vadd.f32 %v118, %v119
    %v121 = vrot.slane %v120, 2
    %v122 = vadd.f32 %v120, %v121
    %v123 = vrot.slane %v122, 1
    %v124 = vadd.f32 %v122, %v123
    %v125 = vsel %vm111, %v96, 0.0
    %v126 = vsel %vm111, %v97, 0.0
    %v127 = vadd.f32 %v125, %v126
    %v128 = vsel %vm111, %v98, 0.0
    %v129 = vadd.f32 %v127, %v128
    %v130 = vsel %vm111, %v99, 0.0
    %v131 = vadd.f32 %v129, %v130
    %v132 = vrot.slane %v131, 4
    %v133 = vadd.f32 %v131, %v132
    %v134 = vrot.slane %v133, 2
    %v135 = vadd.f32 %v133, %v134
    %v136 = vrot.slane %v135, 1
    %v137 = vadd.f32 %v135, %v136
    %v138 = vrcp.pop 32.0
    %v139 = vmul.f32 %v124, %v138
    %v140 = vmul.f32 %v137, %v138
    %v141 = vsub.f32 %v92, %v139
    %v142 = vsub.f32 %v93, %v139
    %v143 = vsub.f32 %v94, %v139
    %v144 = vsub.f32 %v95, %v139
    %v145 = vsub.f32 %v96, %v140
    %v146 = vsub.f32 %v97, %v140
    %v147 = vsub.f32 %v98, %v140
    %v148 = vsub.f32 %v99, %v140
    %v149 = vmul.f32 %v141, %v141
    %v150 = vmul.f32 %v142, %v142
    %v151 = vmul.f32 %v143, %v143
    %v152 = vmul.f32 %v144, %v144
    %v153 = vmul.f32 %v145, %v145
    %v154 = vmul.f32 %v146, %v146
    %v155 = vmul.f32 %v147, %v147
    %v156 = vmul.f32 %v148, %v148
    %v157 = vsel %vm111, %v149, 0.0
    %v158 = vsel %vm111, %v150, 0.0
    %v159 = vadd.f32 %v157, %v158
    %v160 = vsel %vm111, %v151, 0.0
    %v161 = vadd.f32 %v159, %v160
    %v162 = vsel %vm111, %v152, 0.0
    %v163 = vadd.f32 %v161, %v162
    %v164 = vrot.slane %v163, 4
    %v165 = vadd.f32 %v163, %v164
    %v166 = vrot.slane %v165, 2
    %v167 = vadd.f32 %v165, %v166
    %v168 = vrot.slane %v167, 1
    %v169 = vadd.f32 %v167, %v168
    %v170 = vsel %vm111, %v153, 0.0
    %v171 = vsel %vm111, %v154, 0.0
    %v172 = vadd.f32 %v170, %v171
    %v173 = vsel %vm111, %v155, 0.0
    %v174 = vadd.f32 %v172, %v173
    %v175 = vsel %vm111, %v156, 0.0
    %v176 = vadd.f32 %v174, %v175
    %v177 = vrot.slane %v176, 4
    %v178 = vadd.f32 %v176, %v177
    %v179 = vrot.slane %v178, 2
    %v180 = vadd.f32 %v178, %v179
    %v181 = vrot.slane %v180, 1
    %v182 = vadd.f32 %v180, %v181
    %v183 = vmul.f32 %v169, %v138
    %v184 = vmul.f32 %v182, %v138
    %v185 = vadd.f32 %v183, 1e-06
    %v186 = vadd.f32 %v184, 1e-06
    %v187 = vrsqrt.pop %v185
    %v188 = vrsqrt.pop %v186
    %v189 = vmul.f32 %v141, %v187
    %v190 = vmul.f32 %v142, %v187
    %v191 = vmul.f32 %v143, %v187
    %v192 = vmul.f32 %v144, %v187
    %v193 = vmul.f32 %v145, %v188
    %v194 = vmul.f32 %v146, %v188
    %v195 = vmul.f32 %v147, %v188
    %v196 = vmul.f32 %v148, %v188
    %198 = vset.pattern.permute.xlu0 0
    %199 = vperm.xlu0 %198, %v102
    %v200 = vpop.permute.xlu0 %199
    %203 = vset.pattern.permute.xlu0 0
    %204 = vperm.xlu0 %203, %v103
    %v205 = vpop.permute.xlu0 %204
    %208 = vset.pattern.permute.xlu0 0
    %209 = vperm.xlu0 %208, %v104
    %v210 = vpop.permute.xlu0 %209
    %213 = vset.pattern.permute.xlu0 0
    %214 = vperm.xlu0 %213, %v105
    %v215 = vpop.permute.xlu0 %214
    %v217 = vmul.f32 %v189, %v200
    %v218 = vmul.f32 %v190, %v205
    %v219 = vmul.f32 %v191, %v210
    %v220 = vmul.f32 %v192, %v215
    %v221 = vmul.f32 %v193, %v200
    %v222 = vmul.f32 %v194, %v205
    %v223 = vmul.f32 %v195, %v210
    %v224 = vmul.f32 %v196, %v215
    %226 = vset.pattern.permute.xlu0 0
    %227 = vperm.xlu0 %226, %v107
    %v228 = vpop.permute.xlu0 %227
    %231 = vset.pattern.permute.xlu0 0
    %232 = vperm.xlu0 %231, %v108
    %v233 = vpop.permute.xlu0 %232
    %236 = vset.pattern.permute.xlu0 0
    %237 = vperm.xlu0 %236, %v109
    %v238 = vpop.permute.xlu0 %237
    %241 = vset.pattern.permute.xlu0 0
    %242 = vperm.xlu0 %241, %v110
    %v243 = vpop.permute.xlu0 %242
    %v245 = vadd.f32 %v217, %v228
    %v246 = vadd.f32 %v218, %v233
    %v247 = vadd.f32 %v219, %v238
    %v248 = vadd.f32 %v220, %v243
    %v249 = vadd.f32 %v221, %v228
    %v250 = vadd.f32 %v222, %v233
    %v251 = vadd.f32 %v223, %v238
    %v252 = vadd.f32 %v224, %v243
    %v253 = vpack.c.bf16 %v246, %v245
    %v254 = vpack.c.bf16 %v248, %v247
    %v255 = vpack.c.bf16 %v250, %v249
    %v256 = vpack.c.bf16 %v252, %v251
    %v257 = vld [vmem:[%s2] sm:$0xf]
    %v258 = vld [vmem:[%s2 + $0x4] sm:$0xf]
    %v261 = vunpack.c.l.b16 %v257
    %v262 = vunpack.c.l.b16 %v258
    %v263 = vpack.c.b16 %v262, %v261
    %v266 = vsel %vm111, %v253, 0
    %v269 = vsel %vm111, %v254, 0
    %v272 = vsel %vm111, %v255, 0
    %v275 = vsel %vm111, %v256, 0
    %277 = vmatprep.subr.bf16.mxu0 0
    %278 = vmatpush1.bf16.msra.mxu0 %v263
    %279 = vmatprep.subr.bf16.mxu0 0
    %280 = vmatpush1.bf16.msra.mxu0 0
    %281 = vmatprep.subr.bf16.mxu0 0
    %282 = vmatpush1.bf16.msra.mxu0 0
    %283 = vmatprep.subr.bf16.mxu0 0
    %284 = vmatpush1.bf16.msra.mxu0 0
    %285 = vmatprep.subr.bf16.mxu0 0
    %286 = vmatpush1.bf16.msra.mxu0 0
    %287 = vmatprep.subr.bf16.mxu0 0
    %288 = vmatpush1.bf16.msra.mxu0 0
    %289 = vmatprep.subr.bf16.mxu0 0
    %290 = vmatpush1.bf16.msra.mxu0 0
    %291 = vmatprep.subr.bf16.mxu0 0
    %292 = vmatpush1.bf16.msra.mxu0 0
    %293 = vmatprep.subr.bf16.mxu0 0
    %294 = vmatpush1.bf16.msra.mxu0 0
    %295 = vmatprep.subr.bf16.mxu0 0
    %296 = vmatpush1.bf16.msra.mxu0 0
    %297 = vmatprep.subr.bf16.mxu0 0
    %298 = vmatpush1.bf16.msra.mxu0 0
    %299 = vmatprep.subr.bf16.mxu0 0
    %300 = vmatpush1.bf16.msra.mxu0 0
    %301 = vmatprep.subr.bf16.mxu0 0
    %302 = vmatpush1.bf16.msra.mxu0 0
    %303 = vmatprep.subr.bf16.mxu0 0
    %304 = vmatpush1.bf16.msra.mxu0 0
    %305 = vmatprep.subr.bf16.mxu0 0
    %306 = vmatpush1.bf16.msra.mxu0 0
    %307 = vmatprep.subr.bf16.mxu0 0
    %308 = vmatpush1.bf16.msra.mxu0 0
    %309 = vmatprep.mubr.bf16.mxu0 0
    %310 = vmatmul.mubr.bf16.gmra.mrb[0].mxu0 %v266
    %v311 = vpop.f32.mrb[0].mxu0
    %v312 = vadd.f32 0.0, %v311
    %v313 = vpop.f32.mrb[0].mxu0
    %v314 = vpop.f32.mrb[0].mxu0
    %v315 = vadd.f32 0.0, %v314
    %v316 = vpop.f32.mrb[0].mxu0
    %317 = vmatprep.mubr.bf16.mxu0 0
    %318 = vmatmul.mubr.bf16.gmra.mrb[0].mxu0 %v269
    %v319 = vpop.f32.mrb[0].mxu0
    %v320 = vadd.f32 0.0, %v319
    %v321 = vpop.f32.mrb[0].mxu0
    %v322 = vpop.f32.mrb[0].mxu0
    %v323 = vadd.f32 0.0, %v322
    %v324 = vpop.f32.mrb[0].mxu0
    %325 = vmatprep.mubr.bf16.mxu0 0
    %326 = vmatmul.mubr.bf16.gmra.mrb[0].mxu0 %v272
    %v327 = vpop.f32.mrb[0].mxu0
    %v328 = vadd.f32 0.0, %v327
    %v329 = vpop.f32.mrb[0].mxu0
    %v330 = vpop.f32.mrb[0].mxu0
    %v331 = vadd.f32 0.0, %v330
    %v332 = vpop.f32.mrb[0].mxu0
    %333 = vmatprep.mubr.bf16.mxu0 0
    %334 = vmatmul.mubr.bf16.gmra.mrb[0].mxu0 %v275
    %v335 = vpop.f32.mrb[0].mxu0
    %v336 = vadd.f32 0.0, %v335
    %v337 = vpop.f32.mrb[0].mxu0
    %v338 = vpop.f32.mrb[0].mxu0
    %v339 = vadd.f32 0.0, %v338
    %v340 = vpop.f32.mrb[0].mxu0
    %341 = vdwg.mxu0
    %v342 = vld [vmem:[%s3] sm:$0xf]
    %v343 = vld [vmem:[%s3 + $0x4] sm:$0xf]
    %v346 = vunpack.c.l.b16 %v342
    %v347 = vunpack.c.l.b16 %v343
    %v348 = vpack.c.b16 %v347, %v346
    %350 = vmatprep.subr.bf16.mxu0 0
    %351 = vmatpush1.bf16.msra.mxu0 %v348
    %352 = vmatprep.subr.bf16.mxu0 0
    %353 = vmatpush1.bf16.msra.mxu0 0
    %354 = vmatprep.subr.bf16.mxu0 0
    %355 = vmatpush1.bf16.msra.mxu0 0
    %356 = vmatprep.subr.bf16.mxu0 0
    %357 = vmatpush1.bf16.msra.mxu0 0
    %358 = vmatprep.subr.bf16.mxu0 0
    %359 = vmatpush1.bf16.msra.mxu0 0
    %360 = vmatprep.subr.bf16.mxu0 0
    %361 = vmatpush1.bf16.msra.mxu0 0
    %362 = vmatprep.subr.bf16.mxu0 0
    %363 = vmatpush1.bf16.msra.mxu0 0
    %364 = vmatprep.subr.bf16.mxu0 0
    %365 = vmatpush1.bf16.msra.mxu0 0
    %366 = vmatprep.subr.bf16.mxu0 0
    %367 = vmatpush1.bf16.msra.mxu0 0
    %368 = vmatprep.subr.bf16.mxu0 0
    %369 = vmatpush1.bf16.msra.mxu0 0
    %370 = vmatprep.subr.bf16.mxu0 0
    %371 = vmatpush1.bf16.msra.mxu0 0
    %372 = vmatprep.subr.bf16.mxu0 0
    %373 = vmatpush1.bf16.msra.mxu0 0
    %374 = vmatprep.subr.bf16.mxu0 0
    %375 = vmatpush1.bf16.msra.mxu0 0
    %376 = vmatprep.subr.bf16.mxu0 0
    %377 = vmatpush1.bf16.msra.mxu0 0
    %378 = vmatprep.subr.bf16.mxu0 0
    %379 = vmatpush1.bf16.msra.mxu0 0
    %380 = vmatprep.subr.bf16.mxu0 0
    %381 = vmatpush1.bf16.msra.mxu0 0
    %382 = vmatprep.mubr.bf16.mxu0 0
    %383 = vmatmul.mubr.bf16.gmra.mrb[0].mxu0 %v266
    %v384 = vpop.f32.mrb[0].mxu0
    %v385 = vadd.f32 0.0, %v384
    %v386 = vpop.f32.mrb[0].mxu0
    %v387 = vpop.f32.mrb[0].mxu0
    %v388 = vadd.f32 0.0, %v387
    %v389 = vpop.f32.mrb[0].mxu0
    %390 = vmatprep.mubr.bf16.mxu0 0
    %391 = vmatmul.mubr.bf16.gmra.mrb[0].mxu0 %v269
    %v392 = vpop.f32.mrb[0].mxu0
    %v393 = vadd.f32 0.0, %v392
    %v394 = vpop.f32.mrb[0].mxu0
    %v395 = vpop.f32.mrb[0].mxu0
    %v396 = vadd.f32 0.0, %v395
    %v397 = vpop.f32.mrb[0].mxu0
    %398 = vmatprep.mubr.bf16.mxu0 0
    %399 = vmatmul.mubr.bf16.gmra.mrb[0].mxu0 %v272
    %v400 = vpop.f32.mrb[0].mxu0
    %v401 = vadd.f32 0.0, %v400
    %v402 = vpop.f32.mrb[0].mxu0
    %v403 = vpop.f32.mrb[0].mxu0
    %v404 = vadd.f32 0.0, %v403
    %v405 = vpop.f32.mrb[0].mxu0
    %406 = vmatprep.mubr.bf16.mxu0 0
    %407 = vmatmul.mubr.bf16.gmra.mrb[0].mxu0 %v275
    %v408 = vpop.f32.mrb[0].mxu0
    %v409 = vadd.f32 0.0, %v408
    %v410 = vpop.f32.mrb[0].mxu0
    %v411 = vpop.f32.mrb[0].mxu0
    %v412 = vadd.f32 0.0, %v411
    %v413 = vpop.f32.mrb[0].mxu0
    %414 = vdwg.mxu0
    %s415 = smul.u32 %s87, 16
    %s416 = smul.addr %s415, 4
    %s417 = scalar_lea.vmem %s8, %s416
    %v418 = vld [vmem:[%s417] sm:$0xf]
    %v419 = vld [vmem:[%s417 + $0x4] sm:$0xf]
    %v420 = vld [vmem:[%s417 + $0x8] sm:$0xf]
    %v421 = vld [vmem:[%s417 + $0xc] sm:$0xf]
    %v422 = vld [vmem:[%s417 + $0x10] sm:$0xf]
    %v423 = vld [vmem:[%s417 + $0x14] sm:$0xf]
    %v424 = vld [vmem:[%s417 + $0x18] sm:$0xf]
    %v425 = vld [vmem:[%s417 + $0x1c] sm:$0xf]
    %v426 = vld [vmem:[%s417 + $0x20] sm:$0xf]
    %v427 = vld [vmem:[%s417 + $0x24] sm:$0xf]
    %v428 = vld [vmem:[%s417 + $0x28] sm:$0xf]
    %v429 = vld [vmem:[%s417 + $0x2c] sm:$0xf]
    %v430 = vld [vmem:[%s417 + $0x30] sm:$0xf]
    %v431 = vld [vmem:[%s417 + $0x34] sm:$0xf]
    %v432 = vld [vmem:[%s417 + $0x38] sm:$0xf]
    %v433 = vld [vmem:[%s417 + $0x3c] sm:$0xf]
    %v434 = vpack.c.bf16 %v315, %v312
    %v435 = vpack.c.bf16 %v323, %v320
    %v436 = vpack.c.bf16 %v388, %v385
    %v437 = vpack.c.bf16 %v396, %v393
    %v438 = vpack.c.bf16 %v331, %v328
    %v439 = vpack.c.bf16 %v339, %v336
    %v440 = vpack.c.bf16 %v404, %v401
    %v441 = vpack.c.bf16 %v412, %v409
    %s442 = smul.u32 %s87, 128
    %s443 = scalar_lea.vmem %s9, %s442
    %v444 = vld [vmem:[%s443] sm:$0xff]
    %v445 = vld [vmem:[%s443 + $0x8] sm:$0xff]
    %v446 = vld [vmem:[%s443 + $0x10] sm:$0xff]
    %v447 = vld [vmem:[%s443 + $0x18] sm:$0xff]
    %v448 = vld [vmem:[%s443 + $0x20] sm:$0xff]
    %v449 = vld [vmem:[%s443 + $0x28] sm:$0xff]
    %v450 = vld [vmem:[%s443 + $0x30] sm:$0xff]
    %v451 = vld [vmem:[%s443 + $0x38] sm:$0xff]
    %v452 = vld [vmem:[%s443 + $0x40] sm:$0xff]
    %v453 = vld [vmem:[%s443 + $0x48] sm:$0xff]
    %v454 = vld [vmem:[%s443 + $0x50] sm:$0xff]
    %v455 = vld [vmem:[%s443 + $0x58] sm:$0xff]
    %v456 = vld [vmem:[%s443 + $0x60] sm:$0xff]
    %v457 = vld [vmem:[%s443 + $0x68] sm:$0xff]
    %v458 = vld [vmem:[%s443 + $0x70] sm:$0xff]
    %v459 = vld [vmem:[%s443 + $0x78] sm:$0xff]
    %461 = vset.pattern.permute.xlu0 0
    %462 = vperm.xlu0 %461, %v444
    %v463 = vpop.permute.xlu0 %462
    %466 = vset.pattern.permute.xlu0 0
    %467 = vperm.xlu0 %466, %v445
    %v468 = vpop.permute.xlu0 %467
    %471 = vset.pattern.permute.xlu0 0
    %472 = vperm.xlu0 %471, %v446
    %v473 = vpop.permute.xlu0 %472
    %476 = vset.pattern.permute.xlu0 0
    %477 = vperm.xlu0 %476, %v447
    %v478 = vpop.permute.xlu0 %477
    %481 = vset.pattern.permute.xlu0 0
    %482 = vperm.xlu0 %481, %v448
    %v483 = vpop.permute.xlu0 %482
    %486 = vset.pattern.permute.xlu0 0
    %487 = vperm.xlu0 %486, %v449
    %v488 = vpop.permute.xlu0 %487
    %491 = vset.pattern.permute.xlu0 0
    %492 = vperm.xlu0 %491, %v450
    %v493 = vpop.permute.xlu0 %492
    %496 = vset.pattern.permute.xlu0 0
    %497 = vperm.xlu0 %496, %v451
    %v498 = vpop.permute.xlu0 %497
    %501 = vset.pattern.permute.xlu0 0
    %502 = vperm.xlu0 %501, %v452
    %v503 = vpop.permute.xlu0 %502
    %506 = vset.pattern.permute.xlu0 0
    %507 = vperm.xlu0 %506, %v453
    %v508 = vpop.permute.xlu0 %507
    %511 = vset.pattern.permute.xlu0 0
    %512 = vperm.xlu0 %511, %v454
    %v513 = vpop.permute.xlu0 %512
    %516 = vset.pattern.permute.xlu0 0
    %517 = vperm.xlu0 %516, %v455
    %v518 = vpop.permute.xlu0 %517
    %521 = vset.pattern.permute.xlu0 0
    %522 = vperm.xlu0 %521, %v456
    %v523 = vpop.permute.xlu0 %522
    %526 = vset.pattern.permute.xlu0 0
    %527 = vperm.xlu0 %526, %v457
    %v528 = vpop.permute.xlu0 %527
    %531 = vset.pattern.permute.xlu0 0
    %532 = vperm.xlu0 %531, %v458
    %v533 = vpop.permute.xlu0 %532
    %536 = vset.pattern.permute.xlu0 0
    %537 = vperm.xlu0 %536, %v459
    %v538 = vpop.permute.xlu0 %537
    %v556 = vunpack.c.l.b16 %v418
    %v557 = vunpack.c.l.b16 %v419
    %v558 = vunpack.c.l.b16 %v420
    %v559 = vunpack.c.l.b16 %v421
    %v560 = vunpack.c.l.b16 %v422
    %v561 = vunpack.c.l.b16 %v423
    %v562 = vunpack.c.l.b16 %v424
    %v563 = vunpack.c.l.b16 %v425
    %v564 = vunpack.c.l.b16 %v426
    %v565 = vunpack.c.l.b16 %v427
    %v566 = vunpack.c.l.b16 %v428
    %v567 = vunpack.c.l.b16 %v429
    %v568 = vunpack.c.l.b16 %v430
    %v569 = vunpack.c.l.b16 %v431
    %v570 = vunpack.c.l.b16 %v432
    %v571 = vunpack.c.l.b16 %v433
    %v572 = vpack.c.b16 %v557, %v556
    %v573 = vpack.c.b16 %v559, %v558
    %v574 = vpack.c.b16 %v561, %v560
    %v575 = vpack.c.b16 %v563, %v562
    %v576 = vpack.c.b16 %v565, %v564
    %v577 = vpack.c.b16 %v567, %v566
    %v578 = vpack.c.b16 %v569, %v568
    %v579 = vpack.c.b16 %v571, %v570
    %588 = vmatprep.subr.bf16.mxu0 0
    %589 = vmatpush1.bf16.msra.mxu0 %v434
    %590 = vmatprep.subr.bf16.mxu0 0
    %591 = vmatpush1.bf16.msra.mxu0 %v435
    %592 = vmatprep.subr.bf16.mxu0 0
    %593 = vmatpush1.bf16.msra.mxu0 %v436
    %594 = vmatprep.subr.bf16.mxu0 0
    %595 = vmatpush1.bf16.msra.mxu0 %v437
    %596 = vmatprep.subr.bf16.mxu0 0
    %597 = vmatpush1.bf16.msra.mxu0 %v438
    %598 = vmatprep.subr.bf16.mxu0 0
    %599 = vmatpush1.bf16.msra.mxu0 %v439
    %600 = vmatprep.subr.bf16.mxu0 0
    %601 = vmatpush1.bf16.msra.mxu0 %v440
    %602 = vmatprep.subr.bf16.mxu0 0
    %603 = vmatpush1.bf16.msra.mxu0 %v441
    %604 = vmatprep.subr.bf16.mxu0 0
    %605 = vmatpush1.bf16.msra.mxu0 0
    %606 = vmatprep.subr.bf16.mxu0 0
    %607 = vmatpush1.bf16.msra.mxu0 0
    %608 = vmatprep.subr.bf16.mxu0 0
    %609 = vmatpush1.bf16.msra.mxu0 0
    %610 = vmatprep.subr.bf16.mxu0 0
    %611 = vmatpush1.bf16.msra.mxu0 0
    %612 = vmatprep.subr.bf16.mxu0 0
    %613 = vmatpush1.bf16.msra.mxu0 0
    %614 = vmatprep.subr.bf16.mxu0 0
    %615 = vmatpush1.bf16.msra.mxu0 0
    %616 = vmatprep.subr.bf16.mxu0 0
    %617 = vmatpush1.bf16.msra.mxu0 0
    %618 = vmatprep.subr.bf16.mxu0 0
    %619 = vmatpush1.bf16.msra.mxu0 0
    %620 = vmatprep.mubr.bf16.mxu0 0
    %621 = vmatmul.mubr.bf16.gmra.mrb[0].mxu0 %v572
    %v622 = vpop.f32.mrb[0].mxu0
    %v623 = vadd.f32 %v463, %v622
    %v624 = vpop.f32.mrb[0].mxu0
    %v625 = vpop.f32.mrb[0].mxu0
    %v626 = vadd.f32 %v468, %v625
    %v627 = vpop.f32.mrb[0].mxu0
    %628 = vmatprep.mubr.bf16.mxu0 0
    %629 = vmatmul.mubr.bf16.gmra.mrb[0].mxu0 %v573
    %v630 = vpop.f32.mrb[0].mxu0
    %v631 = vadd.f32 %v473, %v630
    %v632 = vpop.f32.mrb[0].mxu0
    %v633 = vpop.f32.mrb[0].mxu0
    %v634 = vadd.f32 %v478, %v633
    %v635 = vpop.f32.mrb[0].mxu0
    %636 = vmatprep.mubr.bf16.mxu0 0
    %637 = vmatmul.mubr.bf16.gmra.mrb[0].mxu0 %v574
    %v638 = vpop.f32.mrb[0].mxu0
    %v639 = vadd.f32 %v483, %v638
    %v640 = vpop.f32.mrb[0].mxu0
    %v641 = vpop.f32.mrb[0].mxu0
    %v642 = vadd.f32 %v488, %v641
    %v643 = vpop.f32.mrb[0].mxu0
    %644 = vmatprep.mubr.bf16.mxu0 0
    %645 = vmatmul.mubr.bf16.gmra.mrb[0].mxu0 %v575
    %v646 = vpop.f32.mrb[0].mxu0
    %v647 = vadd.f32 %v493, %v646
    %v648 = vpop.f32.mrb[0].mxu0
    %v649 = vpop.f32.mrb[0].mxu0
    %v650 = vadd.f32 %v498, %v649
    %v651 = vpop.f32.mrb[0].mxu0
    %652 = vmatprep.mubr.bf16.mxu0 0
    %653 = vmatmul.mubr.bf16.gmra.mrb[0].mxu0 %v576
    %v654 = vpop.f32.mrb[0].mxu0
    %v655 = vadd.f32 %v503, %v654
    %v656 = vpop.f32.mrb[0].mxu0
    %v657 = vpop.f32.mrb[0].mxu0
    %v658 = vadd.f32 %v508, %v657
    %v659 = vpop.f32.mrb[0].mxu0
    %660 = vmatprep.mubr.bf16.mxu0 0
    %661 = vmatmul.mubr.bf16.gmra.mrb[0].mxu0 %v577
    %v662 = vpop.f32.mrb[0].mxu0
    %v663 = vadd.f32 %v513, %v662
    %v664 = vpop.f32.mrb[0].mxu0
    %v665 = vpop.f32.mrb[0].mxu0
    %v666 = vadd.f32 %v518, %v665
    %v667 = vpop.f32.mrb[0].mxu0
    %668 = vmatprep.mubr.bf16.mxu0 0
    %669 = vmatmul.mubr.bf16.gmra.mrb[0].mxu0 %v578
    %v670 = vpop.f32.mrb[0].mxu0
    %v671 = vadd.f32 %v523, %v670
    %v672 = vpop.f32.mrb[0].mxu0
    %v673 = vpop.f32.mrb[0].mxu0
    %v674 = vadd.f32 %v528, %v673
    %v675 = vpop.f32.mrb[0].mxu0
    %676 = vmatprep.mubr.bf16.mxu0 0
    %677 = vmatmul.mubr.bf16.gmra.mrb[0].mxu0 %v579
    %v678 = vpop.f32.mrb[0].mxu0
    %v679 = vadd.f32 %v533, %v678
    %v680 = vpop.f32.mrb[0].mxu0
    %v681 = vpop.f32.mrb[0].mxu0
    %v682 = vadd.f32 %v538, %v681
    %v683 = vpop.f32.mrb[0].mxu0
    %684 = vdwg.mxu0
    %v685 = vmax.f32 %v623, 0.0
    %v686 = vmax.f32 %v626, 0.0
    %v687 = vmax.f32 %v631, 0.0
    %v688 = vmax.f32 %v634, 0.0
    %v689 = vmax.f32 %v639, 0.0
    %v690 = vmax.f32 %v642, 0.0
    %v691 = vmax.f32 %v647, 0.0
    %v692 = vmax.f32 %v650, 0.0
    %v693 = vmax.f32 %v655, 0.0
    %v694 = vmax.f32 %v658, 0.0
    %v695 = vmax.f32 %v663, 0.0
    %v696 = vmax.f32 %v666, 0.0
    %v697 = vmax.f32 %v671, 0.0
    %v698 = vmax.f32 %v674, 0.0
    %v699 = vmax.f32 %v679, 0.0
    %v700 = vmax.f32 %v682, 0.0
    %s701 = smul.addr %s415, 4
    %s702 = scalar_lea.vmem %s10, %s701
    %v703 = vld [vmem:[%s702] sm:$0xf]
    %v704 = vld [vmem:[%s702 + $0x4] sm:$0xf]
    %v705 = vld [vmem:[%s702 + $0x8] sm:$0xf]
    %v706 = vld [vmem:[%s702 + $0xc] sm:$0xf]
    %v707 = vld [vmem:[%s702 + $0x10] sm:$0xf]
    %v708 = vld [vmem:[%s702 + $0x14] sm:$0xf]
    %v709 = vld [vmem:[%s702 + $0x18] sm:$0xf]
    %v710 = vld [vmem:[%s702 + $0x1c] sm:$0xf]
    %v711 = vld [vmem:[%s702 + $0x20] sm:$0xf]
    %v712 = vld [vmem:[%s702 + $0x24] sm:$0xf]
    %v713 = vld [vmem:[%s702 + $0x28] sm:$0xf]
    %v714 = vld [vmem:[%s702 + $0x2c] sm:$0xf]
    %v715 = vld [vmem:[%s702 + $0x30] sm:$0xf]
    %v716 = vld [vmem:[%s702 + $0x34] sm:$0xf]
    %v717 = vld [vmem:[%s702 + $0x38] sm:$0xf]
    %v718 = vld [vmem:[%s702 + $0x3c] sm:$0xf]
    %v719 = vpack.c.bf16 %v686, %v685
    %v720 = vpack.c.bf16 %v688, %v687
    %v721 = vpack.c.bf16 %v690, %v689
    %v722 = vpack.c.bf16 %v692, %v691
    %v723 = vpack.c.bf16 %v694, %v693
    %v724 = vpack.c.bf16 %v696, %v695
    %v725 = vpack.c.bf16 %v698, %v697
    %v726 = vpack.c.bf16 %v700, %v699
    %s727 = scalar_lea.vmem %s11, %s442
    %v728 = vld [vmem:[%s727] sm:$0xff]
    %v729 = vld [vmem:[%s727 + $0x8] sm:$0xff]
    %v730 = vld [vmem:[%s727 + $0x10] sm:$0xff]
    %v731 = vld [vmem:[%s727 + $0x18] sm:$0xff]
    %v732 = vld [vmem:[%s727 + $0x20] sm:$0xff]
    %v733 = vld [vmem:[%s727 + $0x28] sm:$0xff]
    %v734 = vld [vmem:[%s727 + $0x30] sm:$0xff]
    %v735 = vld [vmem:[%s727 + $0x38] sm:$0xff]
    %v736 = vld [vmem:[%s727 + $0x40] sm:$0xff]
    %v737 = vld [vmem:[%s727 + $0x48] sm:$0xff]
    %v738 = vld [vmem:[%s727 + $0x50] sm:$0xff]
    %v739 = vld [vmem:[%s727 + $0x58] sm:$0xff]
    %v740 = vld [vmem:[%s727 + $0x60] sm:$0xff]
    %v741 = vld [vmem:[%s727 + $0x68] sm:$0xff]
    %v742 = vld [vmem:[%s727 + $0x70] sm:$0xff]
    %v743 = vld [vmem:[%s727 + $0x78] sm:$0xff]
    %745 = vset.pattern.permute.xlu0 0
    %746 = vperm.xlu0 %745, %v728
    %v747 = vpop.permute.xlu0 %746
    %750 = vset.pattern.permute.xlu0 0
    %751 = vperm.xlu0 %750, %v729
    %v752 = vpop.permute.xlu0 %751
    %755 = vset.pattern.permute.xlu0 0
    %756 = vperm.xlu0 %755, %v730
    %v757 = vpop.permute.xlu0 %756
    %760 = vset.pattern.permute.xlu0 0
    %761 = vperm.xlu0 %760, %v731
    %v762 = vpop.permute.xlu0 %761
    %765 = vset.pattern.permute.xlu0 0
    %766 = vperm.xlu0 %765, %v732
    %v767 = vpop.permute.xlu0 %766
    %770 = vset.pattern.permute.xlu0 0
    %771 = vperm.xlu0 %770, %v733
    %v772 = vpop.permute.xlu0 %771
    %775 = vset.pattern.permute.xlu0 0
    %776 = vperm.xlu0 %775, %v734
    %v777 = vpop.permute.xlu0 %776
    %780 = vset.pattern.permute.xlu0 0
    %781 = vperm.xlu0 %780, %v735
    %v782 = vpop.permute.xlu0 %781
    %785 = vset.pattern.permute.xlu0 0
    %786 = vperm.xlu0 %785, %v736
    %v787 = vpop.permute.xlu0 %786
    %790 = vset.pattern.permute.xlu0 0
    %791 = vperm.xlu0 %790, %v737
    %v792 = vpop.permute.xlu0 %791
    %795 = vset.pattern.permute.xlu0 0
    %796 = vperm.xlu0 %795, %v738
    %v797 = vpop.permute.xlu0 %796
    %800 = vset.pattern.permute.xlu0 0
    %801 = vperm.xlu0 %800, %v739
    %v802 = vpop.permute.xlu0 %801
    %805 = vset.pattern.permute.xlu0 0
    %806 = vperm.xlu0 %805, %v740
    %v807 = vpop.permute.xlu0 %806
    %810 = vset.pattern.permute.xlu0 0
    %811 = vperm.xlu0 %810, %v741
    %v812 = vpop.permute.xlu0 %811
    %815 = vset.pattern.permute.xlu0 0
    %816 = vperm.xlu0 %815, %v742
    %v817 = vpop.permute.xlu0 %816
    %820 = vset.pattern.permute.xlu0 0
    %821 = vperm.xlu0 %820, %v743
    %v822 = vpop.permute.xlu0 %821
    %v840 = vunpack.c.l.b16 %v703
    %v841 = vunpack.c.l.b16 %v704
    %v842 = vunpack.c.l.b16 %v705
    %v843 = vunpack.c.l.b16 %v706
    %v844 = vunpack.c.l.b16 %v707
    %v845 = vunpack.c.l.b16 %v708
    %v846 = vunpack.c.l.b16 %v709
    %v847 = vunpack.c.l.b16 %v710
    %v848 = vunpack.c.l.b16 %v711
    %v849 = vunpack.c.l.b16 %v712
    %v850 = vunpack.c.l.b16 %v713
    %v851 = vunpack.c.l.b16 %v714
    %v852 = vunpack.c.l.b16 %v715
    %v853 = vunpack.c.l.b16 %v716
    %v854 = vunpack.c.l.b16 %v717
    %v855 = vunpack.c.l.b16 %v718
    %v856 = vpack.c.b16 %v841, %v840
    %v857 = vpack.c.b16 %v843, %v842
    %v858 = vpack.c.b16 %v845, %v844
    %v859 = vpack.c.b16 %v847, %v846
    %v860 = vpack.c.b16 %v849, %v848
    %v861 = vpack.c.b16 %v851, %v850
    %v862 = vpack.c.b16 %v853, %v852
    %v863 = vpack.c.b16 %v855, %v854
    %872 = vmatprep.subr.bf16.mxu0 0
    %873 = vmatpush1.bf16.msra.mxu0 %v719
    %874 = vmatprep.subr.bf16.mxu0 0
    %875 = vmatpush1.bf16.msra.mxu0 %v720
    %876 = vmatprep.subr.bf16.mxu0 0
    %877 = vmatpush1.bf16.msra.mxu0 %v721
    %878 = vmatprep.subr.bf16.mxu0 0
    %879 = vmatpush1.bf16.msra.mxu0 %v722
    %880 = vmatprep.subr.bf16.mxu0 0
    %881 = vmatpush1.bf16.msra.mxu0 %v723
    %882 = vmatprep.subr.bf16.mxu0 0
    %883 = vmatpush1.bf16.msra.mxu0 %v724
    %884 = vmatprep.subr.bf16.mxu0 0
    %885 = vmatpush1.bf16.msra.mxu0 %v725
    %886 = vmatprep.subr.bf16.mxu0 0
    %887 = vmatpush1.bf16.msra.mxu0 %v726
    %888 = vmatprep.subr.bf16.mxu0 0
    %889 = vmatpush1.bf16.msra.mxu0 0
    %890 = vmatprep.subr.bf16.mxu0 0
    %891 = vmatpush1.bf16.msra.mxu0 0
    %892 = vmatprep.subr.bf16.mxu0 0
    %893 = vmatpush1.bf16.msra.mxu0 0
    %894 = vmatprep.subr.bf16.mxu0 0
    %895 = vmatpush1.bf16.msra.mxu0 0
    %896 = vmatprep.subr.bf16.mxu0 0
    %897 = vmatpush1.bf16.msra.mxu0 0
    %898 = vmatprep.subr.bf16.mxu0 0
    %899 = vmatpush1.bf16.msra.mxu0 0
    %900 = vmatprep.subr.bf16.mxu0 0
    %901 = vmatpush1.bf16.msra.mxu0 0
    %902 = vmatprep.subr.bf16.mxu0 0
    %903 = vmatpush1.bf16.msra.mxu0 0
    %904 = vmatprep.mubr.bf16.mxu0 0
    %905 = vmatmul.mubr.bf16.gmra.mrb[0].mxu0 %v856
    %v906 = vpop.f32.mrb[0].mxu0
    %v907 = vadd.f32 %v747, %v906
    %v908 = vpop.f32.mrb[0].mxu0
    %v909 = vpop.f32.mrb[0].mxu0
    %v910 = vadd.f32 %v752, %v909
    %v911 = vpop.f32.mrb[0].mxu0
    %912 = vmatprep.mubr.bf16.mxu0 0
    %913 = vmatmul.mubr.bf16.gmra.mrb[0].mxu0 %v857
    %v914 = vpop.f32.mrb[0].mxu0
    %v915 = vadd.f32 %v757, %v914
    %v916 = vpop.f32.mrb[0].mxu0
    %v917 = vpop.f32.mrb[0].mxu0
    %v918 = vadd.f32 %v762, %v917
    %v919 = vpop.f32.mrb[0].mxu0
    %920 = vmatprep.mubr.bf16.mxu0 0
    %921 = vmatmul.mubr.bf16.gmra.mrb[0].mxu0 %v858
    %v922 = vpop.f32.mrb[0].mxu0
    %v923 = vadd.f32 %v767, %v922
    %v924 = vpop.f32.mrb[0].mxu0
    %v925 = vpop.f32.mrb[0].mxu0
    %v926 = vadd.f32 %v772, %v925
    %v927 = vpop.f32.mrb[0].mxu0
    %928 = vmatprep.mubr.bf16.mxu0 0
    %929 = vmatmul.mubr.bf16.gmra.mrb[0].mxu0 %v859
    %v930 = vpop.f32.mrb[0].mxu0
    %v931 = vadd.f32 %v777, %v930
    %v932 = vpop.f32.mrb[0].mxu0
    %v933 = vpop.f32.mrb[0].mxu0
    %v934 = vadd.f32 %v782, %v933
    %v935 = vpop.f32.mrb[0].mxu0
    %936 = vmatprep.mubr.bf16.mxu0 0
    %937 = vmatmul.mubr.bf16.gmra.mrb[0].mxu0 %v860
    %v938 = vpop.f32.mrb[0].mxu0
    %v939 = vadd.f32 %v787, %v938
    %v940 = vpop.f32.mrb[0].mxu0
    %v941 = vpop.f32.mrb[0].mxu0
    %v942 = vadd.f32 %v792, %v941
    %v943 = vpop.f32.mrb[0].mxu0
    %944 = vmatprep.mubr.bf16.mxu0 0
    %945 = vmatmul.mubr.bf16.gmra.mrb[0].mxu0 %v861
    %v946 = vpop.f32.mrb[0].mxu0
    %v947 = vadd.f32 %v797, %v946
    %v948 = vpop.f32.mrb[0].mxu0
    %v949 = vpop.f32.mrb[0].mxu0
    %v950 = vadd.f32 %v802, %v949
    %v951 = vpop.f32.mrb[0].mxu0
    %952 = vmatprep.mubr.bf16.mxu0 0
    %953 = vmatmul.mubr.bf16.gmra.mrb[0].mxu0 %v862
    %v954 = vpop.f32.mrb[0].mxu0
    %v955 = vadd.f32 %v807, %v954
    %v956 = vpop.f32.mrb[0].mxu0
    %v957 = vpop.f32.mrb[0].mxu0
    %v958 = vadd.f32 %v812, %v957
    %v959 = vpop.f32.mrb[0].mxu0
    %960 = vmatprep.mubr.bf16.mxu0 0
    %961 = vmatmul.mubr.bf16.gmra.mrb[0].mxu0 %v863
    %v962 = vpop.f32.mrb[0].mxu0
    %v963 = vadd.f32 %v817, %v962
    %v964 = vpop.f32.mrb[0].mxu0
    %v965 = vpop.f32.mrb[0].mxu0
    %v966 = vadd.f32 %v822, %v965
    %v967 = vpop.f32.mrb[0].mxu0
    %968 = vdwg.mxu0
    %vm969 = vcmp.gt.f32.partialorder %v907, 0.01
    %vm970 = vcmp.gt.f32.partialorder %v910, 0.01
    %vm971 = vcmp.gt.f32.partialorder %v915, 0.01
    %vm972 = vcmp.gt.f32.partialorder %v918, 0.01
    %vm973 = vcmp.gt.f32.partialorder %v923, 0.01
    %vm974 = vcmp.gt.f32.partialorder %v926, 0.01
    %vm975 = vcmp.gt.f32.partialorder %v931, 0.01
    %vm976 = vcmp.gt.f32.partialorder %v934, 0.01
    %vm977 = vcmp.gt.f32.partialorder %v939, 0.01
    %vm978 = vcmp.gt.f32.partialorder %v942, 0.01
    %vm979 = vcmp.gt.f32.partialorder %v947, 0.01
    %vm980 = vcmp.gt.f32.partialorder %v950, 0.01
    %vm981 = vcmp.gt.f32.partialorder %v955, 0.01
    %vm982 = vcmp.gt.f32.partialorder %v958, 0.01
    %vm983 = vcmp.gt.f32.partialorder %v963, 0.01
    %vm984 = vcmp.gt.f32.partialorder %v966, 0.01
    %v985 = vsub.f32 %v907, 0.01
    %v986 = vsub.f32 %v910, 0.01
    %v987 = vsub.f32 %v915, 0.01
    %v988 = vsub.f32 %v918, 0.01
    %v989 = vsub.f32 %v923, 0.01
    %v990 = vsub.f32 %v926, 0.01
    %v991 = vsub.f32 %v931, 0.01
    %v992 = vsub.f32 %v934, 0.01
    %v993 = vsub.f32 %v939, 0.01
    %v994 = vsub.f32 %v942, 0.01
    %v995 = vsub.f32 %v947, 0.01
    %v996 = vsub.f32 %v950, 0.01
    %v997 = vsub.f32 %v955, 0.01
    %v998 = vsub.f32 %v958, 0.01
    %v999 = vsub.f32 %v963, 0.01
    %v1000 = vsub.f32 %v966, 0.01
    %vm1001 = vcmp.lt.f32.partialorder %v907, -0.01
    %vm1002 = vcmp.lt.f32.partialorder %v910, -0.01
    %vm1003 = vcmp.lt.f32.partialorder %v915, -0.01
    %vm1004 = vcmp.lt.f32.partialorder %v918, -0.01
    %vm1005 = vcmp.lt.f32.partialorder %v923, -0.01
    %vm1006 = vcmp.lt.f32.partialorder %v926, -0.01
    %vm1007 = vcmp.lt.f32.partialorder %v931, -0.01
    %vm1008 = vcmp.lt.f32.partialorder %v934, -0.01
    %vm1009 = vcmp.lt.f32.partialorder %v939, -0.01
    %vm1010 = vcmp.lt.f32.partialorder %v942, -0.01
    %vm1011 = vcmp.lt.f32.partialorder %v947, -0.01
    %vm1012 = vcmp.lt.f32.partialorder %v950, -0.01
    %vm1013 = vcmp.lt.f32.partialorder %v955, -0.01
    %vm1014 = vcmp.lt.f32.partialorder %v958, -0.01
    %vm1015 = vcmp.lt.f32.partialorder %v963, -0.01
    %vm1016 = vcmp.lt.f32.partialorder %v966, -0.01
    %v1017 = vadd.f32 %v907, 0.01
    %v1018 = vadd.f32 %v910, 0.01
    %v1019 = vadd.f32 %v915, 0.01
    %v1020 = vadd.f32 %v918, 0.01
    %v1021 = vadd.f32 %v923, 0.01
    %v1022 = vadd.f32 %v926, 0.01
    %v1023 = vadd.f32 %v931, 0.01
    %v1024 = vadd.f32 %v934, 0.01
    %v1025 = vadd.f32 %v939, 0.01
    %v1026 = vadd.f32 %v942, 0.01
    %v1027 = vadd.f32 %v947, 0.01
    %v1028 = vadd.f32 %v950, 0.01
    %v1029 = vadd.f32 %v955, 0.01
    %v1030 = vadd.f32 %v958, 0.01
    %v1031 = vadd.f32 %v963, 0.01
    %v1032 = vadd.f32 %v966, 0.01
    %v1033 = vsel %vm1001, %v1017, 0.0
    %v1034 = vsel %vm1002, %v1018, 0.0
    %v1035 = vsel %vm1003, %v1019, 0.0
    %v1036 = vsel %vm1004, %v1020, 0.0
    %v1037 = vsel %vm1005, %v1021, 0.0
    %v1038 = vsel %vm1006, %v1022, 0.0
    %v1039 = vsel %vm1007, %v1023, 0.0
    %v1040 = vsel %vm1008, %v1024, 0.0
    %v1041 = vsel %vm1009, %v1025, 0.0
    %v1042 = vsel %vm1010, %v1026, 0.0
    %v1043 = vsel %vm1011, %v1027, 0.0
    %v1044 = vsel %vm1012, %v1028, 0.0
    %v1045 = vsel %vm1013, %v1029, 0.0
    %v1046 = vsel %vm1014, %v1030, 0.0
    %v1047 = vsel %vm1015, %v1031, 0.0
    %v1048 = vsel %vm1016, %v1032, 0.0
    %v1049 = vsel %vm969, %v985, %v1033
    %v1050 = vsel %vm970, %v986, %v1034
    %v1051 = vsel %vm971, %v987, %v1035
    %v1052 = vsel %vm972, %v988, %v1036
    %v1053 = vsel %vm973, %v989, %v1037
    %v1054 = vsel %vm974, %v990, %v1038
    %v1055 = vsel %vm975, %v991, %v1039
    %v1056 = vsel %vm976, %v992, %v1040
    %v1057 = vsel %vm977, %v993, %v1041
    %v1058 = vsel %vm978, %v994, %v1042
    %v1059 = vsel %vm979, %v995, %v1043
    %v1060 = vsel %vm980, %v996, %v1044
    %v1061 = vsel %vm981, %v997, %v1045
    %v1062 = vsel %vm982, %v998, %v1046
    %v1063 = vsel %vm983, %v999, %v1047
    %v1064 = vsel %vm984, %v1000, %v1048
    %v1065 = vpack.c.bf16 %v1050, %v1049
    %v1066 = vpack.c.bf16 %v1052, %v1051
    %v1067 = vpack.c.bf16 %v1058, %v1057
    %v1068 = vpack.c.bf16 %v1060, %v1059
    %v1069 = vld [vmem:[%s4] sm:$0xf]
    %v1070 = vld [vmem:[%s4 + $0x4] sm:$0xf]
    %v1071 = vpack.c.bf16 %v1054, %v1053
    %v1072 = vpack.c.bf16 %v1056, %v1055
    %v1073 = vpack.c.bf16 %v1062, %v1061
    %v1074 = vpack.c.bf16 %v1064, %v1063
    %v1075 = vld [vmem:[%s5] sm:$0xf]
    %v1076 = vld [vmem:[%s5 + $0x4] sm:$0xf]
    %v1079 = vunpack.c.l.b16 %v1075
    %v1080 = vunpack.c.l.b16 %v1076
    %v1081 = vpack.c.b16 %v1080, %v1079
    %v1084 = vsel %vm111, %v1071, 0
    %v1087 = vsel %vm111, %v1072, 0
    %v1090 = vsel %vm111, %v1073, 0
    %v1093 = vsel %vm111, %v1074, 0
    %1095 = vmatprep.subr.bf16.mxu0 0
    %1096 = vmatpush1.bf16.msra.mxu0 %v1081
    %1097 = vmatprep.subr.bf16.mxu0 0
    %1098 = vmatpush1.bf16.msra.mxu0 0
    %1099 = vmatprep.subr.bf16.mxu0 0
    %1100 = vmatpush1.bf16.msra.mxu0 0
    %1101 = vmatprep.subr.bf16.mxu0 0
    %1102 = vmatpush1.bf16.msra.mxu0 0
    %1103 = vmatprep.subr.bf16.mxu0 0
    %1104 = vmatpush1.bf16.msra.mxu0 0
    %1105 = vmatprep.subr.bf16.mxu0 0
    %1106 = vmatpush1.bf16.msra.mxu0 0
    %1107 = vmatprep.subr.bf16.mxu0 0
    %1108 = vmatpush1.bf16.msra.mxu0 0
    %1109 = vmatprep.subr.bf16.mxu0 0
    %1110 = vmatpush1.bf16.msra.mxu0 0
    %1111 = vmatprep.subr.bf16.mxu0 0
    %1112 = vmatpush1.bf16.msra.mxu0 0
    %1113 = vmatprep.subr.bf16.mxu0 0
    %1114 = vmatpush1.bf16.msra.mxu0 0
    %1115 = vmatprep.subr.bf16.mxu0 0
    %1116 = vmatpush1.bf16.msra.mxu0 0
    %1117 = vmatprep.subr.bf16.mxu0 0
    %1118 = vmatpush1.bf16.msra.mxu0 0
    %1119 = vmatprep.subr.bf16.mxu0 0
    %1120 = vmatpush1.bf16.msra.mxu0 0
    %1121 = vmatprep.subr.bf16.mxu0 0
    %1122 = vmatpush1.bf16.msra.mxu0 0
    %1123 = vmatprep.subr.bf16.mxu0 0
    %1124 = vmatpush1.bf16.msra.mxu0 0
    %1125 = vmatprep.subr.bf16.mxu0 0
    %1126 = vmatpush1.bf16.msra.mxu0 0
    %1127 = vmatprep.mubr.bf16.mxu0 0
    %1128 = vmatmul.mubr.bf16.gmra.mrb[0].mxu0 %v1084
    %v1129 = vpop.f32.mrb[0].mxu0
    %v1130 = vadd.f32 0.0, %v1129
    %v1131 = vpop.f32.mrb[0].mxu0
    %v1132 = vpop.f32.mrb[0].mxu0
    %v1133 = vadd.f32 0.0, %v1132
    %v1134 = vpop.f32.mrb[0].mxu0
    %1135 = vmatprep.mubr.bf16.mxu0 0
    %1136 = vmatmul.mubr.bf16.gmra.mrb[0].mxu0 %v1087
    %v1137 = vpop.f32.mrb[0].mxu0
    %v1138 = vadd.f32 0.0, %v1137
    %v1139 = vpop.f32.mrb[0].mxu0
    %v1140 = vpop.f32.mrb[0].mxu0
    %v1141 = vadd.f32 0.0, %v1140
    %v1142 = vpop.f32.mrb[0].mxu0
    %1143 = vmatprep.mubr.bf16.mxu0 0
    %1144 = vmatmul.mubr.bf16.gmra.mrb[0].mxu0 %v1090
    %v1145 = vpop.f32.mrb[0].mxu0
    %v1146 = vadd.f32 0.0, %v1145
    %v1147 = vpop.f32.mrb[0].mxu0
    %v1148 = vpop.f32.mrb[0].mxu0
    %v1149 = vadd.f32 0.0, %v1148
    %v1150 = vpop.f32.mrb[0].mxu0
    %1151 = vmatprep.mubr.bf16.mxu0 0
    %1152 = vmatmul.mubr.bf16.gmra.mrb[0].mxu0 %v1093
    %v1153 = vpop.f32.mrb[0].mxu0
    %v1154 = vadd.f32 0.0, %v1153
    %v1155 = vpop.f32.mrb[0].mxu0
    %v1156 = vpop.f32.mrb[0].mxu0
    %v1157 = vadd.f32 0.0, %v1156
    %v1158 = vpop.f32.mrb[0].mxu0
    %1159 = vdwg.mxu0
    %v1162 = vunpack.c.l.b16 %v1069
    %v1163 = vunpack.c.l.b16 %v1070
    %v1164 = vpack.c.b16 %v1163, %v1162
    %v1167 = vsel %vm111, %v1065, 0
    %v1170 = vsel %vm111, %v1066, 0
    %v1173 = vsel %vm111, %v1067, 0
    %v1176 = vsel %vm111, %v1068, 0
    %1178 = vmatprep.subr.bf16.mxu0 0
    %1179 = vmatpush1.bf16.msra.mxu0 %v1164
    %1180 = vmatprep.subr.bf16.mxu0 0
    %1181 = vmatpush1.bf16.msra.mxu0 0
    %1182 = vmatprep.subr.bf16.mxu0 0
    %1183 = vmatpush1.bf16.msra.mxu0 0
    %1184 = vmatprep.subr.bf16.mxu0 0
    %1185 = vmatpush1.bf16.msra.mxu0 0
    %1186 = vmatprep.subr.bf16.mxu0 0
    %1187 = vmatpush1.bf16.msra.mxu0 0
    %1188 = vmatprep.subr.bf16.mxu0 0
    %1189 = vmatpush1.bf16.msra.mxu0 0
    %1190 = vmatprep.subr.bf16.mxu0 0
    %1191 = vmatpush1.bf16.msra.mxu0 0
    %1192 = vmatprep.subr.bf16.mxu0 0
    %1193 = vmatpush1.bf16.msra.mxu0 0
    %1194 = vmatprep.subr.bf16.mxu0 0
    %1195 = vmatpush1.bf16.msra.mxu0 0
    %1196 = vmatprep.subr.bf16.mxu0 0
    %1197 = vmatpush1.bf16.msra.mxu0 0
    %1198 = vmatprep.subr.bf16.mxu0 0
    %1199 = vmatpush1.bf16.msra.mxu0 0
    %1200 = vmatprep.subr.bf16.mxu0 0
    %1201 = vmatpush1.bf16.msra.mxu0 0
    %1202 = vmatprep.subr.bf16.mxu0 0
    %1203 = vmatpush1.bf16.msra.mxu0 0
    %1204 = vmatprep.subr.bf16.mxu0 0
    %1205 = vmatpush1.bf16.msra.mxu0 0
    %1206 = vmatprep.subr.bf16.mxu0 0
    %1207 = vmatpush1.bf16.msra.mxu0 0
    %1208 = vmatprep.subr.bf16.mxu0 0
    %1209 = vmatpush1.bf16.msra.mxu0 0
    %1210 = vmatprep.mubr.bf16.mxu0 0
    %1211 = vmatmul.mubr.bf16.gmra.mrb[0].mxu0 %v1167
    %v1212 = vpop.f32.mrb[0].mxu0
    %v1213 = vadd.f32 %v1130, %v1212
    %v1214 = vpop.f32.mrb[0].mxu0
    %v1215 = vpop.f32.mrb[0].mxu0
    %v1216 = vadd.f32 %v1133, %v1215
    %v1217 = vpop.f32.mrb[0].mxu0
    %1218 = vmatprep.mubr.bf16.mxu0 0
    %1219 = vmatmul.mubr.bf16.gmra.mrb[0].mxu0 %v1170
    %v1220 = vpop.f32.mrb[0].mxu0
    %v1221 = vadd.f32 %v1138, %v1220
    %v1222 = vpop.f32.mrb[0].mxu0
    %v1223 = vpop.f32.mrb[0].mxu0
    %v1224 = vadd.f32 %v1141, %v1223
    %v1225 = vpop.f32.mrb[0].mxu0
    %1226 = vmatprep.mubr.bf16.mxu0 0
    %1227 = vmatmul.mubr.bf16.gmra.mrb[0].mxu0 %v1173
    %v1228 = vpop.f32.mrb[0].mxu0
    %v1229 = vadd.f32 %v1146, %v1228
    %v1230 = vpop.f32.mrb[0].mxu0
    %v1231 = vpop.f32.mrb[0].mxu0
    %v1232 = vadd.f32 %v1149, %v1231
    %v1233 = vpop.f32.mrb[0].mxu0
    %1234 = vmatprep.mubr.bf16.mxu0 0
    %1235 = vmatmul.mubr.bf16.gmra.mrb[0].mxu0 %v1176
    %v1236 = vpop.f32.mrb[0].mxu0
    %v1237 = vadd.f32 %v1154, %v1236
    %v1238 = vpop.f32.mrb[0].mxu0
    %v1239 = vpop.f32.mrb[0].mxu0
    %v1240 = vadd.f32 %v1157, %v1239
    %v1241 = vpop.f32.mrb[0].mxu0
    %1242 = vdwg.mxu0
    %v1243 = vadd.f32 %v1213, %v245
    %v1244 = vadd.f32 %v1216, %v246
    %v1245 = vadd.f32 %v1221, %v247
    %v1246 = vadd.f32 %v1224, %v248
    %v1247 = vadd.f32 %v1229, %v249
    %v1248 = vadd.f32 %v1232, %v250
    %v1249 = vadd.f32 %v1237, %v251
    %v1250 = vadd.f32 %v1240, %v252
    %v1251 = vadd.f32 %v1243, %v92
    %v1252 = vadd.f32 %v1244, %v93
    %v1253 = vadd.f32 %v1245, %v94
    %v1254 = vadd.f32 %v1246, %v95
    %v1255 = vadd.f32 %v1247, %v96
    %v1256 = vadd.f32 %v1248, %v97
    %v1257 = vadd.f32 %v1249, %v98
    %v1258 = vadd.f32 %v1250, %v99
    %s1259 = scalar_lea.vmem %s12, %s100
    %v1260 = vld [vmem:[%s1259] sm:$0xff]
    %v1261 = vld [vmem:[%s1259 + $0x8] sm:$0xff]
    %v1262 = vld [vmem:[%s1259 + $0x10] sm:$0xff]
    %v1263 = vld [vmem:[%s1259 + $0x18] sm:$0xff]
    %s1264 = scalar_lea.vmem %s13, %s100
    %v1265 = vld [vmem:[%s1264] sm:$0xff]
    %v1266 = vld [vmem:[%s1264 + $0x8] sm:$0xff]
    %v1267 = vld [vmem:[%s1264 + $0x10] sm:$0xff]
    %v1268 = vld [vmem:[%s1264 + $0x18] sm:$0xff]
    %v1269 = vsel %vm111, %v1251, 0.0
    %v1270 = vsel %vm111, %v1252, 0.0
    %v1271 = vadd.f32 %v1269, %v1270
    %v1272 = vsel %vm111, %v1253, 0.0
    %v1273 = vadd.f32 %v1271, %v1272
    %v1274 = vsel %vm111, %v1254, 0.0
    %v1275 = vadd.f32 %v1273, %v1274
    %v1276 = vrot.slane %v1275, 4
    %v1277 = vadd.f32 %v1275, %v1276
    %v1278 = vrot.slane %v1277, 2
    %v1279 = vadd.f32 %v1277, %v1278
    %v1280 = vrot.slane %v1279, 1
    %v1281 = vadd.f32 %v1279, %v1280
    %v1282 = vsel %vm111, %v1255, 0.0
    %v1283 = vsel %vm111, %v1256, 0.0
    %v1284 = vadd.f32 %v1282, %v1283
    %v1285 = vsel %vm111, %v1257, 0.0
    %v1286 = vadd.f32 %v1284, %v1285
    %v1287 = vsel %vm111, %v1258, 0.0
    %v1288 = vadd.f32 %v1286, %v1287
    %v1289 = vrot.slane %v1288, 4
    %v1290 = vadd.f32 %v1288, %v1289
    %v1291 = vrot.slane %v1290, 2
    %v1292 = vadd.f32 %v1290, %v1291
    %v1293 = vrot.slane %v1292, 1
    %v1294 = vadd.f32 %v1292, %v1293
    %v1295 = vmul.f32 %v1281, %v138
    %v1296 = vmul.f32 %v1294, %v138
    %v1297 = vsub.f32 %v1251, %v1295
    %v1298 = vsub.f32 %v1252, %v1295
    %v1299 = vsub.f32 %v1253, %v1295
    %v1300 = vsub.f32 %v1254, %v1295
    %v1301 = vsub.f32 %v1255, %v1296
    %v1302 = vsub.f32 %v1256, %v1296
    %v1303 = vsub.f32 %v1257, %v1296
    %v1304 = vsub.f32 %v1258, %v1296
    %v1305 = vmul.f32 %v1297, %v1297
    %v1306 = vmul.f32 %v1298, %v1298
    %v1307 = vmul.f32 %v1299, %v1299
    %v1308 = vmul.f32 %v1300, %v1300
    %v1309 = vmul.f32 %v1301, %v1301
    %v1310 = vmul.f32 %v1302, %v1302
    %v1311 = vmul.f32 %v1303, %v1303
    %v1312 = vmul.f32 %v1304, %v1304
    %v1313 = vsel %vm111, %v1305, 0.0
    %v1314 = vsel %vm111, %v1306, 0.0
    %v1315 = vadd.f32 %v1313, %v1314
    %v1316 = vsel %vm111, %v1307, 0.0
    %v1317 = vadd.f32 %v1315, %v1316
    %v1318 = vsel %vm111, %v1308, 0.0
    %v1319 = vadd.f32 %v1317, %v1318
    %v1320 = vrot.slane %v1319, 4
    %v1321 = vadd.f32 %v1319, %v1320
    %v1322 = vrot.slane %v1321, 2
    %v1323 = vadd.f32 %v1321, %v1322
    %v1324 = vrot.slane %v1323, 1
    %v1325 = vadd.f32 %v1323, %v1324
    %v1326 = vsel %vm111, %v1309, 0.0
    %v1327 = vsel %vm111, %v1310, 0.0
    %v1328 = vadd.f32 %v1326, %v1327
    %v1329 = vsel %vm111, %v1311, 0.0
    %v1330 = vadd.f32 %v1328, %v1329
    %v1331 = vsel %vm111, %v1312, 0.0
    %v1332 = vadd.f32 %v1330, %v1331
    %v1333 = vrot.slane %v1332, 4
    %v1334 = vadd.f32 %v1332, %v1333
    %v1335 = vrot.slane %v1334, 2
    %v1336 = vadd.f32 %v1334, %v1335
    %v1337 = vrot.slane %v1336, 1
    %v1338 = vadd.f32 %v1336, %v1337
    %v1339 = vmul.f32 %v1325, %v138
    %v1340 = vmul.f32 %v1338, %v138
    %v1341 = vadd.f32 %v1339, 1e-06
    %v1342 = vadd.f32 %v1340, 1e-06
    %v1343 = vrsqrt.pop %v1341
    %v1344 = vrsqrt.pop %v1342
    %v1345 = vmul.f32 %v1297, %v1343
    %v1346 = vmul.f32 %v1298, %v1343
    %v1347 = vmul.f32 %v1299, %v1343
    %v1348 = vmul.f32 %v1300, %v1343
    %v1349 = vmul.f32 %v1301, %v1344
    %v1350 = vmul.f32 %v1302, %v1344
    %v1351 = vmul.f32 %v1303, %v1344
    %v1352 = vmul.f32 %v1304, %v1344
    %1354 = vset.pattern.permute.xlu0 0
    %1355 = vperm.xlu0 %1354, %v1260
    %v1356 = vpop.permute.xlu0 %1355
    %1359 = vset.pattern.permute.xlu0 0
    %1360 = vperm.xlu0 %1359, %v1261
    %v1361 = vpop.permute.xlu0 %1360
    %1364 = vset.pattern.permute.xlu0 0
    %1365 = vperm.xlu0 %1364, %v1262
    %v1366 = vpop.permute.xlu0 %1365
    %1369 = vset.pattern.permute.xlu0 0
    %1370 = vperm.xlu0 %1369, %v1263
    %v1371 = vpop.permute.xlu0 %1370
    %v1373 = vmul.f32 %v1345, %v1356
    %v1374 = vmul.f32 %v1346, %v1361
    %v1375 = vmul.f32 %v1347, %v1366
    %v1376 = vmul.f32 %v1348, %v1371
    %v1377 = vmul.f32 %v1349, %v1356
    %v1378 = vmul.f32 %v1350, %v1361
    %v1379 = vmul.f32 %v1351, %v1366
    %v1380 = vmul.f32 %v1352, %v1371
    %1382 = vset.pattern.permute.xlu0 0
    %1383 = vperm.xlu0 %1382, %v1265
    %v1384 = vpop.permute.xlu0 %1383
    %1387 = vset.pattern.permute.xlu0 0
    %1388 = vperm.xlu0 %1387, %v1266
    %v1389 = vpop.permute.xlu0 %1388
    %1392 = vset.pattern.permute.xlu0 0
    %1393 = vperm.xlu0 %1392, %v1267
    %v1394 = vpop.permute.xlu0 %1393
    %1397 = vset.pattern.permute.xlu0 0
    %1398 = vperm.xlu0 %1397, %v1268
    %v1399 = vpop.permute.xlu0 %1398
    %v1401 = vadd.f32 %v1373, %v1384
    %v1402 = vadd.f32 %v1374, %v1389
    %v1403 = vadd.f32 %v1375, %v1394
    %v1404 = vadd.f32 %v1376, %v1399
    %v1405 = vadd.f32 %v1377, %v1384
    %v1406 = vadd.f32 %v1378, %v1389
    %v1407 = vadd.f32 %v1379, %v1394
    %v1408 = vadd.f32 %v1380, %v1399
    %v1409 = vpack.c.bf16 %v1402, %v1401
    %v1410 = vpack.c.bf16 %v1404, %v1403
    %v1411 = vpack.c.bf16 %v1406, %v1405
    %v1412 = vpack.c.bf16 %v1408, %v1407
    %s1413 = smul.addr %s100, 4
    %s1414 = scalar_lea.vmem %s14, %s1413
    %v1415 = vld [vmem:[%s1414] sm:$0xf]
    %v1416 = vld [vmem:[%s1414 + $0x4] sm:$0xf]
    %v1417 = vld [vmem:[%s1414 + $0x8] sm:$0xf]
    %v1418 = vld [vmem:[%s1414 + $0xc] sm:$0xf]
    %v1419 = vld [vmem:[%s1414 + $0x10] sm:$0xf]
    %v1420 = vld [vmem:[%s1414 + $0x14] sm:$0xf]
    %v1421 = vld [vmem:[%s1414 + $0x18] sm:$0xf]
    %v1422 = vld [vmem:[%s1414 + $0x1c] sm:$0xf]
    %v1423 = vld [vmem:[%s1414 + $0x20] sm:$0xf]
    %v1424 = vld [vmem:[%s1414 + $0x24] sm:$0xf]
    %v1425 = vld [vmem:[%s1414 + $0x28] sm:$0xf]
    %v1426 = vld [vmem:[%s1414 + $0x2c] sm:$0xf]
    %v1427 = vld [vmem:[%s1414 + $0x30] sm:$0xf]
    %v1428 = vld [vmem:[%s1414 + $0x34] sm:$0xf]
    %v1429 = vld [vmem:[%s1414 + $0x38] sm:$0xf]
    %v1430 = vld [vmem:[%s1414 + $0x3c] sm:$0xf]
    %v1431 = vld [vmem:[%s1414 + $0x40] sm:$0xf]
    %v1432 = vld [vmem:[%s1414 + $0x44] sm:$0xf]
    %v1433 = vld [vmem:[%s1414 + $0x48] sm:$0xf]
    %v1434 = vld [vmem:[%s1414 + $0x4c] sm:$0xf]
    %v1435 = vld [vmem:[%s1414 + $0x50] sm:$0xf]
    %v1436 = vld [vmem:[%s1414 + $0x54] sm:$0xf]
    %v1437 = vld [vmem:[%s1414 + $0x58] sm:$0xf]
    %v1438 = vld [vmem:[%s1414 + $0x5c] sm:$0xf]
    %v1439 = vld [vmem:[%s1414 + $0x60] sm:$0xf]
    %v1440 = vld [vmem:[%s1414 + $0x64] sm:$0xf]
    %v1441 = vld [vmem:[%s1414 + $0x68] sm:$0xf]
    %v1442 = vld [vmem:[%s1414 + $0x6c] sm:$0xf]
    %v1443 = vld [vmem:[%s1414 + $0x70] sm:$0xf]
    %v1444 = vld [vmem:[%s1414 + $0x74] sm:$0xf]
    %v1445 = vld [vmem:[%s1414 + $0x78] sm:$0xf]
    %v1446 = vld [vmem:[%s1414 + $0x7c] sm:$0xf]
    %s1447 = smul.u32 %s87, 256
    %s1448 = scalar_lea.vmem %s15, %s1447
    %v1449 = vld [vmem:[%s1448] sm:$0xff]
    %v1450 = vld [vmem:[%s1448 + $0x8] sm:$0xff]
    %v1451 = vld [vmem:[%s1448 + $0x10] sm:$0xff]
    %v1452 = vld [vmem:[%s1448 + $0x18] sm:$0xff]
    %v1453 = vld [vmem:[%s1448 + $0x20] sm:$0xff]
    %v1454 = vld [vmem:[%s1448 + $0x28] sm:$0xff]
    %v1455 = vld [vmem:[%s1448 + $0x30] sm:$0xff]
    %v1456 = vld [vmem:[%s1448 + $0x38] sm:$0xff]
    %v1457 = vld [vmem:[%s1448 + $0x40] sm:$0xff]
    %v1458 = vld [vmem:[%s1448 + $0x48] sm:$0xff]
    %v1459 = vld [vmem:[%s1448 + $0x50] sm:$0xff]
    %v1460 = vld [vmem:[%s1448 + $0x58] sm:$0xff]
    %v1461 = vld [vmem:[%s1448 + $0x60] sm:$0xff]
    %v1462 = vld [vmem:[%s1448 + $0x68] sm:$0xff]
    %v1463 = vld [vmem:[%s1448 + $0x70] sm:$0xff]
    %v1464 = vld [vmem:[%s1448 + $0x78] sm:$0xff]
    %v1465 = vld [vmem:[%s1448 + $0x80] sm:$0xff]
    %v1466 = vld [vmem:[%s1448 + $0x88] sm:$0xff]
    %v1467 = vld [vmem:[%s1448 + $0x90] sm:$0xff]
    %v1468 = vld [vmem:[%s1448 + $0x98] sm:$0xff]
    %v1469 = vld [vmem:[%s1448 + $0xa0] sm:$0xff]
    %v1470 = vld [vmem:[%s1448 + $0xa8] sm:$0xff]
    %v1471 = vld [vmem:[%s1448 + $0xb0] sm:$0xff]
    %v1472 = vld [vmem:[%s1448 + $0xb8] sm:$0xff]
    %v1473 = vld [vmem:[%s1448 + $0xc0] sm:$0xff]
    %v1474 = vld [vmem:[%s1448 + $0xc8] sm:$0xff]
    %v1475 = vld [vmem:[%s1448 + $0xd0] sm:$0xff]
    %v1476 = vld [vmem:[%s1448 + $0xd8] sm:$0xff]
    %v1477 = vld [vmem:[%s1448 + $0xe0] sm:$0xff]
    %v1478 = vld [vmem:[%s1448 + $0xe8] sm:$0xff]
    %v1479 = vld [vmem:[%s1448 + $0xf0] sm:$0xff]
    %v1480 = vld [vmem:[%s1448 + $0xf8] sm:$0xff]
    %1482 = vset.pattern.permute.xlu0 0
    %1483 = vperm.xlu0 %1482, %v1449
    %v1484 = vpop.permute.xlu0 %1483
    %1487 = vset.pattern.permute.xlu0 0
    %1488 = vperm.xlu0 %1487, %v1450
    %v1489 = vpop.permute.xlu0 %1488
    %1492 = vset.pattern.permute.xlu0 0
    %1493 = vperm.xlu0 %1492, %v1451
    %v1494 = vpop.permute.xlu0 %1493
    %1497 = vset.pattern.permute.xlu0 0
    %1498 = vperm.xlu0 %1497, %v1452
    %v1499 = vpop.permute.xlu0 %1498
    %1502 = vset.pattern.permute.xlu0 0
    %1503 = vperm.xlu0 %1502, %v1453
    %v1504 = vpop.permute.xlu0 %1503
    %1507 = vset.pattern.permute.xlu0 0
    %1508 = vperm.xlu0 %1507, %v1454
    %v1509 = vpop.permute.xlu0 %1508
    %1512 = vset.pattern.permute.xlu0 0
    %1513 = vperm.xlu0 %1512, %v1455
    %v1514 = vpop.permute.xlu0 %1513
    %1517 = vset.pattern.permute.xlu0 0
    %1518 = vperm.xlu0 %1517, %v1456
    %v1519 = vpop.permute.xlu0 %1518
    %1522 = vset.pattern.permute.xlu0 0
    %1523 = vperm.xlu0 %1522, %v1457
    %v1524 = vpop.permute.xlu0 %1523
    %1527 = vset.pattern.permute.xlu0 0
    %1528 = vperm.xlu0 %1527, %v1458
    %v1529 = vpop.permute.xlu0 %1528
    %1532 = vset.pattern.permute.xlu0 0
    %1533 = vperm.xlu0 %1532, %v1459
    %v1534 = vpop.permute.xlu0 %1533
    %1537 = vset.pattern.permute.xlu0 0
    %1538 = vperm.xlu0 %1537, %v1460
    %v1539 = vpop.permute.xlu0 %1538
    %1542 = vset.pattern.permute.xlu0 0
    %1543 = vperm.xlu0 %1542, %v1461
    %v1544 = vpop.permute.xlu0 %1543
    %1547 = vset.pattern.permute.xlu0 0
    %1548 = vperm.xlu0 %1547, %v1462
    %v1549 = vpop.permute.xlu0 %1548
    %1552 = vset.pattern.permute.xlu0 0
    %1553 = vperm.xlu0 %1552, %v1463
    %v1554 = vpop.permute.xlu0 %1553
    %1557 = vset.pattern.permute.xlu0 0
    %1558 = vperm.xlu0 %1557, %v1464
    %v1559 = vpop.permute.xlu0 %1558
    %1562 = vset.pattern.permute.xlu0 0
    %1563 = vperm.xlu0 %1562, %v1465
    %v1564 = vpop.permute.xlu0 %1563
    %1567 = vset.pattern.permute.xlu0 0
    %1568 = vperm.xlu0 %1567, %v1466
    %v1569 = vpop.permute.xlu0 %1568
    %1572 = vset.pattern.permute.xlu0 0
    %1573 = vperm.xlu0 %1572, %v1467
    %v1574 = vpop.permute.xlu0 %1573
    %1577 = vset.pattern.permute.xlu0 0
    %1578 = vperm.xlu0 %1577, %v1468
    %v1579 = vpop.permute.xlu0 %1578
    %1582 = vset.pattern.permute.xlu0 0
    %1583 = vperm.xlu0 %1582, %v1469
    %v1584 = vpop.permute.xlu0 %1583
    %1587 = vset.pattern.permute.xlu0 0
    %1588 = vperm.xlu0 %1587, %v1470
    %v1589 = vpop.permute.xlu0 %1588
    %1592 = vset.pattern.permute.xlu0 0
    %1593 = vperm.xlu0 %1592, %v1471
    %v1594 = vpop.permute.xlu0 %1593
    %1597 = vset.pattern.permute.xlu0 0
    %1598 = vperm.xlu0 %1597, %v1472
    %v1599 = vpop.permute.xlu0 %1598
    %1602 = vset.pattern.permute.xlu0 0
    %1603 = vperm.xlu0 %1602, %v1473
    %v1604 = vpop.permute.xlu0 %1603
    %1607 = vset.pattern.permute.xlu0 0
    %1608 = vperm.xlu0 %1607, %v1474
    %v1609 = vpop.permute.xlu0 %1608
    %1612 = vset.pattern.permute.xlu0 0
    %1613 = vperm.xlu0 %1612, %v1475
    %v1614 = vpop.permute.xlu0 %1613
    %1617 = vset.pattern.permute.xlu0 0
    %1618 = vperm.xlu0 %1617, %v1476
    %v1619 = vpop.permute.xlu0 %1618
    %1622 = vset.pattern.permute.xlu0 0
    %1623 = vperm.xlu0 %1622, %v1477
    %v1624 = vpop.permute.xlu0 %1623
    %1627 = vset.pattern.permute.xlu0 0
    %1628 = vperm.xlu0 %1627, %v1478
    %v1629 = vpop.permute.xlu0 %1628
    %1632 = vset.pattern.permute.xlu0 0
    %1633 = vperm.xlu0 %1632, %v1479
    %v1634 = vpop.permute.xlu0 %1633
    %1637 = vset.pattern.permute.xlu0 0
    %1638 = vperm.xlu0 %1637, %v1480
    %v1639 = vpop.permute.xlu0 %1638
    %v1673 = vunpack.c.l.b16 %v1415
    %v1674 = vunpack.c.l.b16 %v1416
    %v1675 = vunpack.c.l.b16 %v1417
    %v1676 = vunpack.c.l.b16 %v1418
    %v1677 = vunpack.c.l.b16 %v1419
    %v1678 = vunpack.c.l.b16 %v1420
    %v1679 = vunpack.c.l.b16 %v1421
    %v1680 = vunpack.c.l.b16 %v1422
    %v1681 = vunpack.c.l.b16 %v1423
    %v1682 = vunpack.c.l.b16 %v1424
    %v1683 = vunpack.c.l.b16 %v1425
    %v1684 = vunpack.c.l.b16 %v1426
    %v1685 = vunpack.c.l.b16 %v1427
    %v1686 = vunpack.c.l.b16 %v1428
    %v1687 = vunpack.c.l.b16 %v1429
    %v1688 = vunpack.c.l.b16 %v1430
    %v1689 = vunpack.c.l.b16 %v1431
    %v1690 = vunpack.c.l.b16 %v1432
    %v1691 = vunpack.c.l.b16 %v1433
    %v1692 = vunpack.c.l.b16 %v1434
    %v1693 = vunpack.c.l.b16 %v1435
    %v1694 = vunpack.c.l.b16 %v1436
    %v1695 = vunpack.c.l.b16 %v1437
    %v1696 = vunpack.c.l.b16 %v1438
    %v1697 = vunpack.c.l.b16 %v1439
    %v1698 = vunpack.c.l.b16 %v1440
    %v1699 = vunpack.c.l.b16 %v1441
    %v1700 = vunpack.c.l.b16 %v1442
    %v1701 = vunpack.c.l.b16 %v1443
    %v1702 = vunpack.c.l.b16 %v1444
    %v1703 = vunpack.c.l.b16 %v1445
    %v1704 = vunpack.c.l.b16 %v1446
    %v1705 = vpack.c.b16 %v1674, %v1673
    %v1706 = vpack.c.b16 %v1676, %v1675
    %v1707 = vpack.c.b16 %v1678, %v1677
    %v1708 = vpack.c.b16 %v1680, %v1679
    %v1709 = vpack.c.b16 %v1682, %v1681
    %v1710 = vpack.c.b16 %v1684, %v1683
    %v1711 = vpack.c.b16 %v1686, %v1685
    %v1712 = vpack.c.b16 %v1688, %v1687
    %v1713 = vpack.c.b16 %v1690, %v1689
    %v1714 = vpack.c.b16 %v1692, %v1691
    %v1715 = vpack.c.b16 %v1694, %v1693
    %v1716 = vpack.c.b16 %v1696, %v1695
    %v1717 = vpack.c.b16 %v1698, %v1697
    %v1718 = vpack.c.b16 %v1700, %v1699
    %v1719 = vpack.c.b16 %v1702, %v1701
    %v1720 = vpack.c.b16 %v1704, %v1703
    %vm1721 = vcmask 523264
    %v1723 = vsel %vm1721, %v1705, 0
    %v1726 = vsel %vm1721, %v1706, 0
    %v1729 = vsel %vm1721, %v1707, 0
    %v1732 = vsel %vm1721, %v1708, 0
    %v1735 = vsel %vm1721, %v1709, 0
    %v1738 = vsel %vm1721, %v1710, 0
    %v1741 = vsel %vm1721, %v1711, 0
    %v1744 = vsel %vm1721, %v1712, 0
    %v1747 = vsel %vm1721, %v1713, 0
    %v1750 = vsel %vm1721, %v1714, 0
    %v1753 = vsel %vm1721, %v1715, 0
    %v1756 = vsel %vm1721, %v1716, 0
    %v1759 = vsel %vm1721, %v1717, 0
    %v1762 = vsel %vm1721, %v1718, 0
    %v1765 = vsel %vm1721, %v1719, 0
    %v1768 = vsel %vm1721, %v1720, 0
    %1770 = vmatprep.subr.bf16.mxu0 0
    %1771 = vmatpush1.bf16.msra.mxu0 %v1409
    %1772 = vmatprep.subr.bf16.mxu0 0
    %1773 = vmatpush1.bf16.msra.mxu0 %v1410
    %1774 = vmatprep.subr.bf16.mxu0 0
    %1775 = vmatpush1.bf16.msra.mxu0 %v1411
    %1776 = vmatprep.subr.bf16.mxu0 0
    %1777 = vmatpush1.bf16.msra.mxu0 %v1412
    %1778 = vmatprep.subr.bf16.mxu0 0
    %1779 = vmatpush1.bf16.msra.mxu0 0
    %1780 = vmatprep.subr.bf16.mxu0 0
    %1781 = vmatpush1.bf16.msra.mxu0 0
    %1782 = vmatprep.subr.bf16.mxu0 0
    %1783 = vmatpush1.bf16.msra.mxu0 0
    %1784 = vmatprep.subr.bf16.mxu0 0
    %1785 = vmatpush1.bf16.msra.mxu0 0
    %1786 = vmatprep.subr.bf16.mxu0 0
    %1787 = vmatpush1.bf16.msra.mxu0 0
    %1788 = vmatprep.subr.bf16.mxu0 0
    %1789 = vmatpush1.bf16.msra.mxu0 0
    %1790 = vmatprep.subr.bf16.mxu0 0
    %1791 = vmatpush1.bf16.msra.mxu0 0
    %1792 = vmatprep.subr.bf16.mxu0 0
    %1793 = vmatpush1.bf16.msra.mxu0 0
    %1794 = vmatprep.subr.bf16.mxu0 0
    %1795 = vmatpush1.bf16.msra.mxu0 0
    %1796 = vmatprep.subr.bf16.mxu0 0
    %1797 = vmatpush1.bf16.msra.mxu0 0
    %1798 = vmatprep.subr.bf16.mxu0 0
    %1799 = vmatpush1.bf16.msra.mxu0 0
    %1800 = vmatprep.subr.bf16.mxu0 0
    %1801 = vmatpush1.bf16.msra.mxu0 0
    %1802 = vmatprep.mubr.bf16.mxu0 0
    %1803 = vmatmul.mubr.bf16.gmra.mrb[0].mxu0 %v1723
    %v1804 = vpop.f32.mrb[0].mxu0
    %v1805 = vadd.f32 %v1484, %v1804
    %v1806 = vpop.f32.mrb[0].mxu0
    %v1807 = vpop.f32.mrb[0].mxu0
    %v1808 = vadd.f32 %v1489, %v1807
    %v1809 = vpop.f32.mrb[0].mxu0
    %1810 = vmatprep.mubr.bf16.mxu0 0
    %1811 = vmatmul.mubr.bf16.gmra.mrb[0].mxu0 %v1726
    %v1812 = vpop.f32.mrb[0].mxu0
    %v1813 = vadd.f32 %v1494, %v1812
    %v1814 = vpop.f32.mrb[0].mxu0
    %v1815 = vpop.f32.mrb[0].mxu0
    %v1816 = vadd.f32 %v1499, %v1815
    %v1817 = vpop.f32.mrb[0].mxu0
    %1818 = vmatprep.mubr.bf16.mxu0 0
    %1819 = vmatmul.mubr.bf16.gmra.mrb[0].mxu0 %v1729
    %v1820 = vpop.f32.mrb[0].mxu0
    %v1821 = vadd.f32 %v1504, %v1820
    %v1822 = vpop.f32.mrb[0].mxu0
    %v1823 = vpop.f32.mrb[0].mxu0
    %v1824 = vadd.f32 %v1509, %v1823
    %v1825 = vpop.f32.mrb[0].mxu0
    %1826 = vmatprep.mubr.bf16.mxu0 0
    %1827 = vmatmul.mubr.bf16.gmra.mrb[0].mxu0 %v1732
    %v1828 = vpop.f32.mrb[0].mxu0
    %v1829 = vadd.f32 %v1514, %v1828
    %v1830 = vpop.f32.mrb[0].mxu0
    %v1831 = vpop.f32.mrb[0].mxu0
    %v1832 = vadd.f32 %v1519, %v1831
    %v1833 = vpop.f32.mrb[0].mxu0
    %1834 = vmatprep.mubr.bf16.mxu0 0
    %1835 = vmatmul.mubr.bf16.gmra.mrb[0].mxu0 %v1735
    %v1836 = vpop.f32.mrb[0].mxu0
    %v1837 = vadd.f32 %v1524, %v1836
    %v1838 = vpop.f32.mrb[0].mxu0
    %v1839 = vpop.f32.mrb[0].mxu0
    %v1840 = vadd.f32 %v1529, %v1839
    %v1841 = vpop.f32.mrb[0].mxu0
    %1842 = vmatprep.mubr.bf16.mxu0 0
    %1843 = vmatmul.mubr.bf16.gmra.mrb[0].mxu0 %v1738
    %v1844 = vpop.f32.mrb[0].mxu0
    %v1845 = vadd.f32 %v1534, %v1844
    %v1846 = vpop.f32.mrb[0].mxu0
    %v1847 = vpop.f32.mrb[0].mxu0
    %v1848 = vadd.f32 %v1539, %v1847
    %v1849 = vpop.f32.mrb[0].mxu0
    %1850 = vmatprep.mubr.bf16.mxu0 0
    %1851 = vmatmul.mubr.bf16.gmra.mrb[0].mxu0 %v1741
    %v1852 = vpop.f32.mrb[0].mxu0
    %v1853 = vadd.f32 %v1544, %v1852
    %v1854 = vpop.f32.mrb[0].mxu0
    %v1855 = vpop.f32.mrb[0].mxu0
    %v1856 = vadd.f32 %v1549, %v1855
    %v1857 = vpop.f32.mrb[0].mxu0
    %1858 = vmatprep.mubr.bf16.mxu0 0
    %1859 = vmatmul.mubr.bf16.gmra.mrb[0].mxu0 %v1744
    %v1860 = vpop.f32.mrb[0].mxu0
    %v1861 = vadd.f32 %v1554, %v1860
    %v1862 = vpop.f32.mrb[0].mxu0
    %v1863 = vpop.f32.mrb[0].mxu0
    %v1864 = vadd.f32 %v1559, %v1863
    %v1865 = vpop.f32.mrb[0].mxu0
    %1866 = vmatprep.mubr.bf16.mxu0 0
    %1867 = vmatmul.mubr.bf16.gmra.mrb[0].mxu0 %v1747
    %v1868 = vpop.f32.mrb[0].mxu0
    %v1869 = vadd.f32 %v1564, %v1868
    %v1870 = vpop.f32.mrb[0].mxu0
    %v1871 = vpop.f32.mrb[0].mxu0
    %v1872 = vadd.f32 %v1569, %v1871
    %v1873 = vpop.f32.mrb[0].mxu0
    %1874 = vmatprep.mubr.bf16.mxu0 0
    %1875 = vmatmul.mubr.bf16.gmra.mrb[0].mxu0 %v1750
    %v1876 = vpop.f32.mrb[0].mxu0
    %v1877 = vadd.f32 %v1574, %v1876
    %v1878 = vpop.f32.mrb[0].mxu0
    %v1879 = vpop.f32.mrb[0].mxu0
    %v1880 = vadd.f32 %v1579, %v1879
    %v1881 = vpop.f32.mrb[0].mxu0
    %1882 = vmatprep.mubr.bf16.mxu0 0
    %1883 = vmatmul.mubr.bf16.gmra.mrb[0].mxu0 %v1753
    %v1884 = vpop.f32.mrb[0].mxu0
    %v1885 = vadd.f32 %v1584, %v1884
    %v1886 = vpop.f32.mrb[0].mxu0
    %v1887 = vpop.f32.mrb[0].mxu0
    %v1888 = vadd.f32 %v1589, %v1887
    %v1889 = vpop.f32.mrb[0].mxu0
    %1890 = vmatprep.mubr.bf16.mxu0 0
    %1891 = vmatmul.mubr.bf16.gmra.mrb[0].mxu0 %v1756
    %v1892 = vpop.f32.mrb[0].mxu0
    %v1893 = vadd.f32 %v1594, %v1892
    %v1894 = vpop.f32.mrb[0].mxu0
    %v1895 = vpop.f32.mrb[0].mxu0
    %v1896 = vadd.f32 %v1599, %v1895
    %v1897 = vpop.f32.mrb[0].mxu0
    %1898 = vmatprep.mubr.bf16.mxu0 0
    %1899 = vmatmul.mubr.bf16.gmra.mrb[0].mxu0 %v1759
    %v1900 = vpop.f32.mrb[0].mxu0
    %v1901 = vadd.f32 %v1604, %v1900
    %v1902 = vpop.f32.mrb[0].mxu0
    %v1903 = vpop.f32.mrb[0].mxu0
    %v1904 = vadd.f32 %v1609, %v1903
    %v1905 = vpop.f32.mrb[0].mxu0
    %1906 = vmatprep.mubr.bf16.mxu0 0
    %1907 = vmatmul.mubr.bf16.gmra.mrb[0].mxu0 %v1762
    %v1908 = vpop.f32.mrb[0].mxu0
    %v1909 = vadd.f32 %v1614, %v1908
    %v1910 = vpop.f32.mrb[0].mxu0
    %v1911 = vpop.f32.mrb[0].mxu0
    %v1912 = vadd.f32 %v1619, %v1911
    %v1913 = vpop.f32.mrb[0].mxu0
    %1914 = vmatprep.mubr.bf16.mxu0 0
    %1915 = vmatmul.mubr.bf16.gmra.mrb[0].mxu0 %v1765
    %v1916 = vpop.f32.mrb[0].mxu0
    %v1917 = vadd.f32 %v1624, %v1916
    %v1918 = vpop.f32.mrb[0].mxu0
    %v1919 = vpop.f32.mrb[0].mxu0
    %v1920 = vadd.f32 %v1629, %v1919
    %v1921 = vpop.f32.mrb[0].mxu0
    %1922 = vmatprep.mubr.bf16.mxu0 0
    %1923 = vmatmul.mubr.bf16.gmra.mrb[0].mxu0 %v1768
    %v1924 = vpop.f32.mrb[0].mxu0
    %v1925 = vadd.f32 %v1634, %v1924
    %v1926 = vpop.f32.mrb[0].mxu0
    %v1927 = vpop.f32.mrb[0].mxu0
    %v1928 = vadd.f32 %v1639, %v1927
    %v1929 = vpop.f32.mrb[0].mxu0
    %1930 = vdwg.mxu0
    %v1931 = vmul.f32 %v1805, 0.5
    %v1932 = vmul.f32 %v1808, 0.5
    %v1933 = vmul.f32 %v1813, 0.5
    %v1934 = vmul.f32 %v1816, 0.5
    %v1935 = vmul.f32 %v1821, 0.5
    %v1936 = vmul.f32 %v1824, 0.5
    %v1937 = vmul.f32 %v1829, 0.5
    %v1938 = vmul.f32 %v1832, 0.5
    %v1939 = vmul.f32 %v1837, 0.5
    %v1940 = vmul.f32 %v1840, 0.5
    %v1941 = vmul.f32 %v1845, 0.5
    %v1942 = vmul.f32 %v1848, 0.5
    %v1943 = vmul.f32 %v1853, 0.5
    %v1944 = vmul.f32 %v1856, 0.5
    %v1945 = vmul.f32 %v1861, 0.5
    %v1946 = vmul.f32 %v1864, 0.5
    %v1947 = vmul.f32 %v1869, 0.5
    %v1948 = vmul.f32 %v1872, 0.5
    %v1949 = vmul.f32 %v1877, 0.5
    %v1950 = vmul.f32 %v1880, 0.5
    %v1951 = vmul.f32 %v1885, 0.5
    %v1952 = vmul.f32 %v1888, 0.5
    %v1953 = vmul.f32 %v1893, 0.5
    %v1954 = vmul.f32 %v1896, 0.5
    %v1955 = vmul.f32 %v1901, 0.5
    %v1956 = vmul.f32 %v1904, 0.5
    %v1957 = vmul.f32 %v1909, 0.5
    %v1958 = vmul.f32 %v1912, 0.5
    %v1959 = vmul.f32 %v1917, 0.5
    %v1960 = vmul.f32 %v1920, 0.5
    %v1961 = vmul.f32 %v1925, 0.5
    %v1962 = vmul.f32 %v1928, 0.5
    %v1963 = vmul.f32 %v1805, 0.044715
    %v1964 = vmul.f32 %v1808, 0.044715
    %v1965 = vmul.f32 %v1813, 0.044715
    %v1966 = vmul.f32 %v1816, 0.044715
    %v1967 = vmul.f32 %v1821, 0.044715
    %v1968 = vmul.f32 %v1824, 0.044715
    %v1969 = vmul.f32 %v1829, 0.044715
    %v1970 = vmul.f32 %v1832, 0.044715
    %v1971 = vmul.f32 %v1837, 0.044715
    %v1972 = vmul.f32 %v1840, 0.044715
    %v1973 = vmul.f32 %v1845, 0.044715
    %v1974 = vmul.f32 %v1848, 0.044715
    %v1975 = vmul.f32 %v1853, 0.044715
    %v1976 = vmul.f32 %v1856, 0.044715
    %v1977 = vmul.f32 %v1861, 0.044715
    %v1978 = vmul.f32 %v1864, 0.044715
    %v1979 = vmul.f32 %v1869, 0.044715
    %v1980 = vmul.f32 %v1872, 0.044715
    %v1981 = vmul.f32 %v1877, 0.044715
    %v1982 = vmul.f32 %v1880, 0.044715
    %v1983 = vmul.f32 %v1885, 0.044715
    %v1984 = vmul.f32 %v1888, 0.044715
    %v1985 = vmul.f32 %v1893, 0.044715
    %v1986 = vmul.f32 %v1896, 0.044715
    %v1987 = vmul.f32 %v1901, 0.044715
    %v1988 = vmul.f32 %v1904, 0.044715
    %v1989 = vmul.f32 %v1909, 0.044715
    %v1990 = vmul.f32 %v1912, 0.044715
    %v1991 = vmul.f32 %v1917, 0.044715
    %v1992 = vmul.f32 %v1920, 0.044715
    %v1993 = vmul.f32 %v1925, 0.044715
    %v1994 = vmul.f32 %v1928, 0.044715
    %v1995 = vmul.f32 %v1963, %v1805
    %v1996 = vmul.f32 %v1964, %v1808
    %v1997 = vmul.f32 %v1965, %v1813
    %v1998 = vmul.f32 %v1966, %v1816
    %v1999 = vmul.f32 %v1967, %v1821
    %v2000 = vmul.f32 %v1968, %v1824
    %v2001 = vmul.f32 %v1969, %v1829
    %v2002 = vmul.f32 %v1970, %v1832
    %v2003 = vmul.f32 %v1971, %v1837
    %v2004 = vmul.f32 %v1972, %v1840
    %v2005 = vmul.f32 %v1973, %v1845
    %v2006 = vmul.f32 %v1974, %v1848
    %v2007 = vmul.f32 %v1975, %v1853
    %v2008 = vmul.f32 %v1976, %v1856
    %v2009 = vmul.f32 %v1977, %v1861
    %v2010 = vmul.f32 %v1978, %v1864
    %v2011 = vmul.f32 %v1979, %v1869
    %v2012 = vmul.f32 %v1980, %v1872
    %v2013 = vmul.f32 %v1981, %v1877
    %v2014 = vmul.f32 %v1982, %v1880
    %v2015 = vmul.f32 %v1983, %v1885
    %v2016 = vmul.f32 %v1984, %v1888
    %v2017 = vmul.f32 %v1985, %v1893
    %v2018 = vmul.f32 %v1986, %v1896
    %v2019 = vmul.f32 %v1987, %v1901
    %v2020 = vmul.f32 %v1988, %v1904
    %v2021 = vmul.f32 %v1989, %v1909
    %v2022 = vmul.f32 %v1990, %v1912
    %v2023 = vmul.f32 %v1991, %v1917
    %v2024 = vmul.f32 %v1992, %v1920
    %v2025 = vmul.f32 %v1993, %v1925
    %v2026 = vmul.f32 %v1994, %v1928
    %v2027 = vmul.f32 %v1995, %v1805
    %v2028 = vmul.f32 %v1996, %v1808
    %v2029 = vmul.f32 %v1997, %v1813
    %v2030 = vmul.f32 %v1998, %v1816
    %v2031 = vmul.f32 %v1999, %v1821
    %v2032 = vmul.f32 %v2000, %v1824
    %v2033 = vmul.f32 %v2001, %v1829
    %v2034 = vmul.f32 %v2002, %v1832
    %v2035 = vmul.f32 %v2003, %v1837
    %v2036 = vmul.f32 %v2004, %v1840
    %v2037 = vmul.f32 %v2005, %v1845
    %v2038 = vmul.f32 %v2006, %v1848
    %v2039 = vmul.f32 %v2007, %v1853
    %v2040 = vmul.f32 %v2008, %v1856
    %v2041 = vmul.f32 %v2009, %v1861
    %v2042 = vmul.f32 %v2010, %v1864
    %v2043 = vmul.f32 %v2011, %v1869
    %v2044 = vmul.f32 %v2012, %v1872
    %v2045 = vmul.f32 %v2013, %v1877
    %v2046 = vmul.f32 %v2014, %v1880
    %v2047 = vmul.f32 %v2015, %v1885
    %v2048 = vmul.f32 %v2016, %v1888
    %v2049 = vmul.f32 %v2017, %v1893
    %v2050 = vmul.f32 %v2018, %v1896
    %v2051 = vmul.f32 %v2019, %v1901
    %v2052 = vmul.f32 %v2020, %v1904
    %v2053 = vmul.f32 %v2021, %v1909
    %v2054 = vmul.f32 %v2022, %v1912
    %v2055 = vmul.f32 %v2023, %v1917
    %v2056 = vmul.f32 %v2024, %v1920
    %v2057 = vmul.f32 %v2025, %v1925
    %v2058 = vmul.f32 %v2026, %v1928
    %v2059 = vadd.f32 %v1805, %v2027
    %v2060 = vadd.f32 %v1808, %v2028
    %v2061 = vadd.f32 %v1813, %v2029
    %v2062 = vadd.f32 %v1816, %v2030
    %v2063 = vadd.f32 %v1821, %v2031
    %v2064 = vadd.f32 %v1824, %v2032
    %v2065 = vadd.f32 %v1829, %v2033
    %v2066 = vadd.f32 %v1832, %v2034
    %v2067 = vadd.f32 %v1837, %v2035
    %v2068 = vadd.f32 %v1840, %v2036
    %v2069 = vadd.f32 %v1845, %v2037
    %v2070 = vadd.f32 %v1848, %v2038
    %v2071 = vadd.f32 %v1853, %v2039
    %v2072 = vadd.f32 %v1856, %v2040
    %v2073 = vadd.f32 %v1861, %v2041
    %v2074 = vadd.f32 %v1864, %v2042
    %v2075 = vadd.f32 %v1869, %v2043
    %v2076 = vadd.f32 %v1872, %v2044
    %v2077 = vadd.f32 %v1877, %v2045
    %v2078 = vadd.f32 %v1880, %v2046
    %v2079 = vadd.f32 %v1885, %v2047
    %v2080 = vadd.f32 %v1888, %v2048
    %v2081 = vadd.f32 %v1893, %v2049
    %v2082 = vadd.f32 %v1896, %v2050
    %v2083 = vadd.f32 %v1901, %v2051
    %v2084 = vadd.f32 %v1904, %v2052
    %v2085 = vadd.f32 %v1909, %v2053
    %v2086 = vadd.f32 %v1912, %v2054
    %v2087 = vadd.f32 %v1917, %v2055
    %v2088 = vadd.f32 %v1920, %v2056
    %v2089 = vadd.f32 %v1925, %v2057
    %v2090 = vadd.f32 %v1928, %v2058
    %v2091 = vmul.f32 %v2059, 0.7978846
    %v2092 = vmul.f32 %v2060, 0.7978846
    %v2093 = vmul.f32 %v2061, 0.7978846
    %v2094 = vmul.f32 %v2062, 0.7978846
    %v2095 = vmul.f32 %v2063, 0.7978846
    %v2096 = vmul.f32 %v2064, 0.7978846
    %v2097 = vmul.f32 %v2065, 0.7978846
    %v2098 = vmul.f32 %v2066, 0.7978846
    %v2099 = vmul.f32 %v2067, 0.7978846
    %v2100 = vmul.f32 %v2068, 0.7978846
    %v2101 = vmul.f32 %v2069, 0.7978846
    %v2102 = vmul.f32 %v2070, 0.7978846
    %v2103 = vmul.f32 %v2071, 0.7978846
    %v2104 = vmul.f32 %v2072, 0.7978846
    %v2105 = vmul.f32 %v2073, 0.7978846
    %v2106 = vmul.f32 %v2074, 0.7978846
    %v2107 = vmul.f32 %v2075, 0.7978846
    %v2108 = vmul.f32 %v2076, 0.7978846
    %v2109 = vmul.f32 %v2077, 0.7978846
    %v2110 = vmul.f32 %v2078, 0.7978846
    %v2111 = vmul.f32 %v2079, 0.7978846
    %v2112 = vmul.f32 %v2080, 0.7978846
    %v2113 = vmul.f32 %v2081, 0.7978846
    %v2114 = vmul.f32 %v2082, 0.7978846
    %v2115 = vmul.f32 %v2083, 0.7978846
    %v2116 = vmul.f32 %v2084, 0.7978846
    %v2117 = vmul.f32 %v2085, 0.7978846
    %v2118 = vmul.f32 %v2086, 0.7978846
    %v2119 = vmul.f32 %v2087, 0.7978846
    %v2120 = vmul.f32 %v2088, 0.7978846
    %v2121 = vmul.f32 %v2089, 0.7978846
    %v2122 = vmul.f32 %v2090, 0.7978846
    %v2123 = vtanh.pop %v2091
    %v2124 = vtanh.pop %v2092
    %v2125 = vtanh.pop %v2093
    %v2126 = vtanh.pop %v2094
    %v2127 = vtanh.pop %v2095
    %v2128 = vtanh.pop %v2096
    %v2129 = vtanh.pop %v2097
    %v2130 = vtanh.pop %v2098
    %v2131 = vtanh.pop %v2099
    %v2132 = vtanh.pop %v2100
    %v2133 = vtanh.pop %v2101
    %v2134 = vtanh.pop %v2102
    %v2135 = vtanh.pop %v2103
    %v2136 = vtanh.pop %v2104
    %v2137 = vtanh.pop %v2105
    %v2138 = vtanh.pop %v2106
    %v2139 = vtanh.pop %v2107
    %v2140 = vtanh.pop %v2108
    %v2141 = vtanh.pop %v2109
    %v2142 = vtanh.pop %v2110
    %v2143 = vtanh.pop %v2111
    %v2144 = vtanh.pop %v2112
    %v2145 = vtanh.pop %v2113
    %v2146 = vtanh.pop %v2114
    %v2147 = vtanh.pop %v2115
    %v2148 = vtanh.pop %v2116
    %v2149 = vtanh.pop %v2117
    %v2150 = vtanh.pop %v2118
    %v2151 = vtanh.pop %v2119
    %v2152 = vtanh.pop %v2120
    %v2153 = vtanh.pop %v2121
    %v2154 = vtanh.pop %v2122
    %v2155 = vadd.f32 %v2123, 1.0
    %v2156 = vadd.f32 %v2124, 1.0
    %v2157 = vadd.f32 %v2125, 1.0
    %v2158 = vadd.f32 %v2126, 1.0
    %v2159 = vadd.f32 %v2127, 1.0
    %v2160 = vadd.f32 %v2128, 1.0
    %v2161 = vadd.f32 %v2129, 1.0
    %v2162 = vadd.f32 %v2130, 1.0
    %v2163 = vadd.f32 %v2131, 1.0
    %v2164 = vadd.f32 %v2132, 1.0
    %v2165 = vadd.f32 %v2133, 1.0
    %v2166 = vadd.f32 %v2134, 1.0
    %v2167 = vadd.f32 %v2135, 1.0
    %v2168 = vadd.f32 %v2136, 1.0
    %v2169 = vadd.f32 %v2137, 1.0
    %v2170 = vadd.f32 %v2138, 1.0
    %v2171 = vadd.f32 %v2139, 1.0
    %v2172 = vadd.f32 %v2140, 1.0
    %v2173 = vadd.f32 %v2141, 1.0
    %v2174 = vadd.f32 %v2142, 1.0
    %v2175 = vadd.f32 %v2143, 1.0
    %v2176 = vadd.f32 %v2144, 1.0
    %v2177 = vadd.f32 %v2145, 1.0
    %v2178 = vadd.f32 %v2146, 1.0
    %v2179 = vadd.f32 %v2147, 1.0
    %v2180 = vadd.f32 %v2148, 1.0
    %v2181 = vadd.f32 %v2149, 1.0
    %v2182 = vadd.f32 %v2150, 1.0
    %v2183 = vadd.f32 %v2151, 1.0
    %v2184 = vadd.f32 %v2152, 1.0
    %v2185 = vadd.f32 %v2153, 1.0
    %v2186 = vadd.f32 %v2154, 1.0
    %v2187 = vmul.f32 %v1931, %v2155
    %v2188 = vmul.f32 %v1932, %v2156
    %v2189 = vmul.f32 %v1933, %v2157
    %v2190 = vmul.f32 %v1934, %v2158
    %v2191 = vmul.f32 %v1935, %v2159
    %v2192 = vmul.f32 %v1936, %v2160
    %v2193 = vmul.f32 %v1937, %v2161
    %v2194 = vmul.f32 %v1938, %v2162
    %v2195 = vmul.f32 %v1939, %v2163
    %v2196 = vmul.f32 %v1940, %v2164
    %v2197 = vmul.f32 %v1941, %v2165
    %v2198 = vmul.f32 %v1942, %v2166
    %v2199 = vmul.f32 %v1943, %v2167
    %v2200 = vmul.f32 %v1944, %v2168
    %v2201 = vmul.f32 %v1945, %v2169
    %v2202 = vmul.f32 %v1946, %v2170
    %v2203 = vmul.f32 %v1947, %v2171
    %v2204 = vmul.f32 %v1948, %v2172
    %v2205 = vmul.f32 %v1949, %v2173
    %v2206 = vmul.f32 %v1950, %v2174
    %v2207 = vmul.f32 %v1951, %v2175
    %v2208 = vmul.f32 %v1952, %v2176
    %v2209 = vmul.f32 %v1953, %v2177
    %v2210 = vmul.f32 %v1954, %v2178
    %v2211 = vmul.f32 %v1955, %v2179
    %v2212 = vmul.f32 %v1956, %v2180
    %v2213 = vmul.f32 %v1957, %v2181
    %v2214 = vmul.f32 %v1958, %v2182
    %v2215 = vmul.f32 %v1959, %v2183
    %v2216 = vmul.f32 %v1960, %v2184
    %v2217 = vmul.f32 %v1961, %v2185
    %v2218 = vmul.f32 %v1962, %v2186
    %s2219 = smul.addr %s415, 4
    %s2220 = scalar_lea.vmem %s16, %s2219
    %v2221 = vld [vmem:[%s2220] sm:$0xff]
    %v2222 = vld [vmem:[%s2220 + $0x8] sm:$0xff]
    %v2223 = vld [vmem:[%s2220 + $0x10] sm:$0xff]
    %v2224 = vld [vmem:[%s2220 + $0x18] sm:$0xff]
    %v2225 = vld [vmem:[%s2220 + $0x20] sm:$0xff]
    %v2226 = vld [vmem:[%s2220 + $0x28] sm:$0xff]
    %v2227 = vld [vmem:[%s2220 + $0x30] sm:$0xff]
    %v2228 = vld [vmem:[%s2220 + $0x38] sm:$0xff]
    %v2229 = vpack.c.bf16 %v2188, %v2187
    %v2230 = vpack.c.bf16 %v2190, %v2189
    %v2231 = vpack.c.bf16 %v2192, %v2191
    %v2232 = vpack.c.bf16 %v2194, %v2193
    %v2233 = vpack.c.bf16 %v2196, %v2195
    %v2234 = vpack.c.bf16 %v2198, %v2197
    %v2235 = vpack.c.bf16 %v2200, %v2199
    %v2236 = vpack.c.bf16 %v2202, %v2201
    %v2237 = vpack.c.bf16 %v2204, %v2203
    %v2238 = vpack.c.bf16 %v2206, %v2205
    %v2239 = vpack.c.bf16 %v2208, %v2207
    %v2240 = vpack.c.bf16 %v2210, %v2209
    %v2241 = vpack.c.bf16 %v2212, %v2211
    %v2242 = vpack.c.bf16 %v2214, %v2213
    %v2243 = vpack.c.bf16 %v2216, %v2215
    %v2244 = vpack.c.bf16 %v2218, %v2217
    %s2245 = smul.u32 %s87, 64
    %s2246 = scalar_lea.vmem %s17, %s2245
    %v2247 = vld [vmem:[%s2246] sm:$0xff]
    %v2248 = vld [vmem:[%s2246 + $0x8] sm:$0xff]
    %v2249 = vld [vmem:[%s2246 + $0x10] sm:$0xff]
    %v2250 = vld [vmem:[%s2246 + $0x18] sm:$0xff]
    %v2251 = vld [vmem:[%s2246 + $0x20] sm:$0xff]
    %v2252 = vld [vmem:[%s2246 + $0x28] sm:$0xff]
    %v2253 = vld [vmem:[%s2246 + $0x30] sm:$0xff]
    %v2254 = vld [vmem:[%s2246 + $0x38] sm:$0xff]
    %2256 = vset.pattern.permute.xlu0 0
    %2257 = vperm.xlu0 %2256, %v2247
    %v2258 = vpop.permute.xlu0 %2257
    %2261 = vset.pattern.permute.xlu0 0
    %2262 = vperm.xlu0 %2261, %v2248
    %v2263 = vpop.permute.xlu0 %2262
    %2266 = vset.pattern.permute.xlu0 0
    %2267 = vperm.xlu0 %2266, %v2249
    %v2268 = vpop.permute.xlu0 %2267
    %2271 = vset.pattern.permute.xlu0 0
    %2272 = vperm.xlu0 %2271, %v2250
    %v2273 = vpop.permute.xlu0 %2272
    %2276 = vset.pattern.permute.xlu0 0
    %2277 = vperm.xlu0 %2276, %v2251
    %v2278 = vpop.permute.xlu0 %2277
    %2281 = vset.pattern.permute.xlu0 0
    %2282 = vperm.xlu0 %2281, %v2252
    %v2283 = vpop.permute.xlu0 %2282
    %2286 = vset.pattern.permute.xlu0 0
    %2287 = vperm.xlu0 %2286, %v2253
    %v2288 = vpop.permute.xlu0 %2287
    %2291 = vset.pattern.permute.xlu0 0
    %2292 = vperm.xlu0 %2291, %v2254
    %v2293 = vpop.permute.xlu0 %2292
    %v2303 = vunpack.c.l.b16 %v2221
    %v2304 = vunpack.c.h.b16 %v2221
    %v2305 = vunpack.c.l.b16 %v2222
    %v2306 = vunpack.c.h.b16 %v2222
    %v2307 = vunpack.c.l.b16 %v2223
    %v2308 = vunpack.c.h.b16 %v2223
    %v2309 = vunpack.c.l.b16 %v2224
    %v2310 = vunpack.c.h.b16 %v2224
    %v2311 = vunpack.c.l.b16 %v2225
    %v2312 = vunpack.c.h.b16 %v2225
    %v2313 = vunpack.c.l.b16 %v2226
    %v2314 = vunpack.c.h.b16 %v2226
    %v2315 = vunpack.c.l.b16 %v2227
    %v2316 = vunpack.c.h.b16 %v2227
    %v2317 = vunpack.c.l.b16 %v2228
    %v2318 = vunpack.c.h.b16 %v2228
    %v2319 = vpack.c.b16 %v2305, %v2303
    %v2320 = vpack.c.b16 %v2306, %v2304
    %v2321 = vpack.c.b16 %v2309, %v2307
    %v2322 = vpack.c.b16 %v2310, %v2308
    %v2323 = vpack.c.b16 %v2313, %v2311
    %v2324 = vpack.c.b16 %v2314, %v2312
    %v2325 = vpack.c.b16 %v2317, %v2315
    %v2326 = vpack.c.b16 %v2318, %v2316
    %2335 = vmatprep.subr.bf16.mxu0 0
    %2336 = vmatpush1.bf16.msra.mxu0 %v2229
    %2337 = vmatprep.subr.bf16.mxu0 0
    %2338 = vmatpush1.bf16.msra.mxu0 %v2230
    %2339 = vmatprep.subr.bf16.mxu0 0
    %2340 = vmatpush1.bf16.msra.mxu0 %v2231
    %2341 = vmatprep.subr.bf16.mxu0 0
    %2342 = vmatpush1.bf16.msra.mxu0 %v2232
    %2343 = vmatprep.subr.bf16.mxu0 0
    %2344 = vmatpush1.bf16.msra.mxu0 %v2233
    %2345 = vmatprep.subr.bf16.mxu0 0
    %2346 = vmatpush1.bf16.msra.mxu0 %v2234
    %2347 = vmatprep.subr.bf16.mxu0 0
    %2348 = vmatpush1.bf16.msra.mxu0 %v2235
    %2349 = vmatprep.subr.bf16.mxu0 0
    %2350 = vmatpush1.bf16.msra.mxu0 %v2236
    %2351 = vmatprep.subr.bf16.mxu0 0
    %2352 = vmatpush1.bf16.msra.mxu0 %v2237
    %2353 = vmatprep.subr.bf16.mxu0 0
    %2354 = vmatpush1.bf16.msra.mxu0 %v2238
    %2355 = vmatprep.subr.bf16.mxu0 0
    %2356 = vmatpush1.bf16.msra.mxu0 %v2239
    %2357 = vmatprep.subr.bf16.mxu0 0
    %2358 = vmatpush1.bf16.msra.mxu0 %v2240
    %2359 = vmatprep.subr.bf16.mxu0 0
    %2360 = vmatpush1.bf16.msra.mxu0 %v2241
    %2361 = vmatprep.subr.bf16.mxu0 0
    %2362 = vmatpush1.bf16.msra.mxu0 %v2242
    %2363 = vmatprep.subr.bf16.mxu0 0
    %2364 = vmatpush1.bf16.msra.mxu0 %v2243
    %2365 = vmatprep.subr.bf16.mxu0 0
    %2366 = vmatpush1.bf16.msra.mxu0 %v2244
    %2367 = vmatprep.mubr.bf16.mxu0 %v2320
    %2368 = vmatmul.mubr.bf16.gmra.mrb[0].mxu0 %v2319
    %v2369 = vpop.f32.mrb[0].mxu0
    %v2370 = vadd.f32 %v2258, %v2369
    %v2371 = vpop.f32.mrb[0].mxu0
    %v2372 = vpop.f32.mrb[0].mxu0
    %v2373 = vadd.f32 %v2263, %v2372
    %v2374 = vpop.f32.mrb[0].mxu0
    %2375 = vmatprep.mubr.bf16.mxu0 %v2322
    %2376 = vmatmul.mubr.bf16.gmra.mrb[0].mxu0 %v2321
    %v2377 = vpop.f32.mrb[0].mxu0
    %v2378 = vadd.f32 %v2268, %v2377
    %v2379 = vpop.f32.mrb[0].mxu0
    %v2380 = vpop.f32.mrb[0].mxu0
    %v2381 = vadd.f32 %v2273, %v2380
    %v2382 = vpop.f32.mrb[0].mxu0
    %2383 = vmatprep.mubr.bf16.mxu0 %v2324
    %2384 = vmatmul.mubr.bf16.gmra.mrb[0].mxu0 %v2323
    %v2385 = vpop.f32.mrb[0].mxu0
    %v2386 = vadd.f32 %v2278, %v2385
    %v2387 = vpop.f32.mrb[0].mxu0
    %v2388 = vpop.f32.mrb[0].mxu0
    %v2389 = vadd.f32 %v2283, %v2388
    %v2390 = vpop.f32.mrb[0].mxu0
    %2391 = vmatprep.mubr.bf16.mxu0 %v2326
    %2392 = vmatmul.mubr.bf16.gmra.mrb[0].mxu0 %v2325
    %v2393 = vpop.f32.mrb[0].mxu0
    %v2394 = vadd.f32 %v2288, %v2393
    %v2395 = vpop.f32.mrb[0].mxu0
    %v2396 = vpop.f32.mrb[0].mxu0
    %v2397 = vadd.f32 %v2293, %v2396
    %v2398 = vpop.f32.mrb[0].mxu0
    %2399 = vdwg.mxu0
    %v2400 = vadd.f32 %v2370, %v1251
    %v2401 = vadd.f32 %v2373, %v1252
    %v2402 = vadd.f32 %v2378, %v1253
    %v2403 = vadd.f32 %v2381, %v1254
    %v2404 = vadd.f32 %v2386, %v1255
    %v2405 = vadd.f32 %v2389, %v1256
    %v2406 = vadd.f32 %v2394, %v1257
    %v2407 = vadd.f32 %v2397, %v1258
  $region86: #{tpu_custom_call.1} parent=0 // loop_footer
    %s91 = sadd.s32 1, %s87
  $region87: #{tpu_custom_call.1} parent=0 // loop_footer_branch
    %86 = sbr.rel target = $region83
  $region88: #{tpu_custom_call.1} parent=0 // loop_exit
    _
  %v2408 = vld [vmem:[%s18] sm:$0xff]
  %v2409 = vld [vmem:[%s18 + $0x8] sm:$0xff]
  %v2410 = vld [vmem:[%s18 + $0x10] sm:$0xff]
  %v2411 = vld [vmem:[%s18 + $0x18] sm:$0xff]
  %v2412 = vld [vmem:[%s19] sm:$0xff]
  %v2413 = vld [vmem:[%s19 + $0x8] sm:$0xff]
  %v2414 = vld [vmem:[%s19 + $0x10] sm:$0xff]
  %v2415 = vld [vmem:[%s19 + $0x18] sm:$0xff]
  %vm2416 = vcmask 130048
  %v2417 = vsel %vm2416, %v92, 0.0
  %v2418 = vsel %vm2416, %v93, 0.0
  %v2419 = vadd.f32 %v2417, %v2418
  %v2420 = vsel %vm2416, %v94, 0.0
  %v2421 = vadd.f32 %v2419, %v2420
  %v2422 = vsel %vm2416, %v95, 0.0
  %v2423 = vadd.f32 %v2421, %v2422
  %v2424 = vrot.slane %v2423, 4
  %v2425 = vadd.f32 %v2423, %v2424
  %v2426 = vrot.slane %v2425, 2
  %v2427 = vadd.f32 %v2425, %v2426
  %v2428 = vrot.slane %v2427, 1
  %v2429 = vadd.f32 %v2427, %v2428
  %v2430 = vsel %vm2416, %v96, 0.0
  %v2431 = vsel %vm2416, %v97, 0.0
  %v2432 = vadd.f32 %v2430, %v2431
  %v2433 = vsel %vm2416, %v98, 0.0
  %v2434 = vadd.f32 %v2432, %v2433
  %v2435 = vsel %vm2416, %v99, 0.0
  %v2436 = vadd.f32 %v2434, %v2435
  %v2437 = vrot.slane %v2436, 4
  %v2438 = vadd.f32 %v2436, %v2437
  %v2439 = vrot.slane %v2438, 2
  %v2440 = vadd.f32 %v2438, %v2439
  %v2441 = vrot.slane %v2440, 1
  %v2442 = vadd.f32 %v2440, %v2441
  %v2443 = vrcp.pop 32.0
  %v2444 = vmul.f32 %v2429, %v2443
  %v2445 = vmul.f32 %v2442, %v2443
  %v2446 = vsub.f32 %v92, %v2444
  %v2447 = vsub.f32 %v93, %v2444
  %v2448 = vsub.f32 %v94, %v2444
  %v2449 = vsub.f32 %v95, %v2444
  %v2450 = vsub.f32 %v96, %v2445
  %v2451 = vsub.f32 %v97, %v2445
  %v2452 = vsub.f32 %v98, %v2445
  %v2453 = vsub.f32 %v99, %v2445
  %v2454 = vmul.f32 %v2446, %v2446
  %v2455 = vmul.f32 %v2447, %v2447
  %v2456 = vmul.f32 %v2448, %v2448
  %v2457 = vmul.f32 %v2449, %v2449
  %v2458 = vmul.f32 %v2450, %v2450
  %v2459 = vmul.f32 %v2451, %v2451
  %v2460 = vmul.f32 %v2452, %v2452
  %v2461 = vmul.f32 %v2453, %v2453
  %v2462 = vsel %vm2416, %v2454, 0.0
  %v2463 = vsel %vm2416, %v2455, 0.0
  %v2464 = vadd.f32 %v2462, %v2463
  %v2465 = vsel %vm2416, %v2456, 0.0
  %v2466 = vadd.f32 %v2464, %v2465
  %v2467 = vsel %vm2416, %v2457, 0.0
  %v2468 = vadd.f32 %v2466, %v2467
  %v2469 = vrot.slane %v2468, 4
  %v2470 = vadd.f32 %v2468, %v2469
  %v2471 = vrot.slane %v2470, 2
  %v2472 = vadd.f32 %v2470, %v2471
  %v2473 = vrot.slane %v2472, 1
  %v2474 = vadd.f32 %v2472, %v2473
  %v2475 = vsel %vm2416, %v2458, 0.0
  %v2476 = vsel %vm2416, %v2459, 0.0
  %v2477 = vadd.f32 %v2475, %v2476
  %v2478 = vsel %vm2416, %v2460, 0.0
  %v2479 = vadd.f32 %v2477, %v2478
  %v2480 = vsel %vm2416, %v2461, 0.0
  %v2481 = vadd.f32 %v2479, %v2480
  %v2482 = vrot.slane %v2481, 4
  %v2483 = vadd.f32 %v2481, %v2482
  %v2484 = vrot.slane %v2483, 2
  %v2485 = vadd.f32 %v2483, %v2484
  %v2486 = vrot.slane %v2485, 1
  %v2487 = vadd.f32 %v2485, %v2486
  %v2488 = vmul.f32 %v2474, %v2443
  %v2489 = vmul.f32 %v2487, %v2443
  %v2490 = vadd.f32 %v2488, 1e-06
  %v2491 = vadd.f32 %v2489, 1e-06
  %v2492 = vrsqrt.pop %v2490
  %v2493 = vrsqrt.pop %v2491
  %v2494 = vmul.f32 %v2446, %v2492
  %v2495 = vmul.f32 %v2447, %v2492
  %v2496 = vmul.f32 %v2448, %v2492
  %v2497 = vmul.f32 %v2449, %v2492
  %v2498 = vmul.f32 %v2450, %v2493
  %v2499 = vmul.f32 %v2451, %v2493
  %v2500 = vmul.f32 %v2452, %v2493
  %v2501 = vmul.f32 %v2453, %v2493
  %2503 = vset.pattern.permute.xlu0 0
  %2504 = vperm.xlu0 %2503, %v2408
  %v2505 = vpop.permute.xlu0 %2504
  %2508 = vset.pattern.permute.xlu0 0
  %2509 = vperm.xlu0 %2508, %v2409
  %v2510 = vpop.permute.xlu0 %2509
  %2513 = vset.pattern.permute.xlu0 0
  %2514 = vperm.xlu0 %2513, %v2410
  %v2515 = vpop.permute.xlu0 %2514
  %2518 = vset.pattern.permute.xlu0 0
  %2519 = vperm.xlu0 %2518, %v2411
  %v2520 = vpop.permute.xlu0 %2519
  %v2522 = vmul.f32 %v2494, %v2505
  %v2523 = vmul.f32 %v2495, %v2510
  %v2524 = vmul.f32 %v2496, %v2515
  %v2525 = vmul.f32 %v2497, %v2520
  %v2526 = vmul.f32 %v2498, %v2505
  %v2527 = vmul.f32 %v2499, %v2510
  %v2528 = vmul.f32 %v2500, %v2515
  %v2529 = vmul.f32 %v2501, %v2520
  %2531 = vset.pattern.permute.xlu0 0
  %2532 = vperm.xlu0 %2531, %v2412
  %v2533 = vpop.permute.xlu0 %2532
  %2536 = vset.pattern.permute.xlu0 0
  %2537 = vperm.xlu0 %2536, %v2413
  %v2538 = vpop.permute.xlu0 %2537
  %2541 = vset.pattern.permute.xlu0 0
  %2542 = vperm.xlu0 %2541, %v2414
  %v2543 = vpop.permute.xlu0 %2542
  %2546 = vset.pattern.permute.xlu0 0
  %2547 = vperm.xlu0 %2546, %v2415
  %v2548 = vpop.permute.xlu0 %2547
  %v2550 = vadd.f32 %v2522, %v2533
  %v2551 = vadd.f32 %v2523, %v2538
  %v2552 = vadd.f32 %v2524, %v2543
  %v2553 = vadd.f32 %v2525, %v2548
  %v2554 = vadd.f32 %v2526, %v2533
  %v2555 = vadd.f32 %v2527, %v2538
  %v2556 = vadd.f32 %v2528, %v2543
  %v2557 = vadd.f32 %v2529, %v2548
  %2558 = vst.msk [vmem:[%s20] sm:$0xff] %vm2416, %v2550
  %2559 = vst.msk [vmem:[%s20 + $0x8] sm:$0xff] %vm2416, %v2551
  %2560 = vst.msk [vmem:[%s20 + $0x10] sm:$0xff] %vm2416, %v2552
  %2561 = vst.msk [vmem:[%s20 + $0x18] sm:$0xff] %vm2416, %v2553
  %2562 = vst.msk [vmem:[%s20 + $0x20] sm:$0xff] %vm2416, %v2554
  %2563 = vst.msk [vmem:[%s20 + $0x28] sm:$0xff] %vm2416, %v2555
  %2564 = vst.msk [vmem:[%s20 + $0x30] sm:$0xff] %vm2416, %v2556
  %2565 = vst.msk [vmem:[%s20 + $0x38] sm:$0xff] %vm2416, %v2557
  // Predicated region
  $region89: #{tpu_custom_call.1} parent=0 // pred_check
    _
  $region90: #{tpu_custom_call.1} parent=0 // pred_check_branch
    %2567 = sbr.rel (0) target = $region92
  $region91: #{tpu_custom_call.1} parent=0 // pred_region
    _
  $region92: #{tpu_custom_call.1} parent=0 // pred_fallthru
    _
  // Predicated region
  $region93: #{tpu_custom_call.1} parent=0 // pred_check
    _
  $region94: #{tpu_custom_call.1} parent=0 // pred_check_branch
    %2569 = sbr.rel (0) target = $region96
  $region95: #{tpu_custom_call.1} parent=0 // pred_region
    _
  $region96: #{tpu_custom_call.1} parent=0 // pred_fallthru
    _

// kernel: tpu_custom_call.1
$region0: #{tpu_custom_call.1}
  #allocation0 [shape = 'u32[]', space=smem, size = 0x4, offset = 0x4, fixed_abs, tag = 'smem constant byte address 0x4 - core index']
  #allocation1 [shape = 'u32[144,128]{1,0:T(1,128)}', space=vmem, size = 0x12000, scoped, tag = 'internal scratch']
  %s0 = inlined_call_operand.vmem [shape: f32[2,32,16], index: 0, kind: input, shape index: {}]
  %s1 = inlined_call_operand.vmem [shape: f32[1,32,16], index: 1, kind: input, shape index: {}]
  %s2 = inlined_call_operand.vmem [shape: bf16[16,16], index: 2, kind: input, shape index: {}]
  %s3 = inlined_call_operand.vmem [shape: bf16[16,16], index: 3, kind: input, shape index: {}]
  %s4 = inlined_call_operand.vmem [shape: bf16[16,16], index: 4, kind: input, shape index: {}]
  %s5 = inlined_call_operand.vmem [shape: bf16[16,16], index: 5, kind: input, shape index: {}]
  %s6 = inlined_call_operand.vmem [shape: f32[2,32,1], index: 6, kind: input, shape index: {}]
  %s7 = inlined_call_operand.vmem [shape: f32[2,32,1], index: 7, kind: input, shape index: {}]
  %s8 = inlined_call_operand.vmem [shape: bf16[2,128,128], index: 8, kind: input, shape index: {}]
  %s9 = inlined_call_operand.vmem [shape: f32[2,128,1], index: 9, kind: input, shape index: {}]
  %s10 = inlined_call_operand.vmem [shape: bf16[2,128,128], index: 10, kind: input, shape index: {}]
  %s11 = inlined_call_operand.vmem [shape: f32[2,128,1], index: 11, kind: input, shape index: {}]
  %s12 = inlined_call_operand.vmem [shape: f32[2,32,1], index: 12, kind: input, shape index: {}]
  %s13 = inlined_call_operand.vmem [shape: f32[2,32,1], index: 13, kind: input, shape index: {}]
  %s14 = inlined_call_operand.vmem [shape: bf16[2,256,64], index: 14, kind: input, shape index: {}]
  %s15 = inlined_call_operand.vmem [shape: f32[2,256,1], index: 15, kind: input, shape index: {}]
  %s16 = inlined_call_operand.vmem [shape: bf16[2,64,256], index: 16, kind: input, shape index: {}]
  %s17 = inlined_call_operand.vmem [shape: f32[2,64,1], index: 17, kind: input, shape index: {}]
  %s18 = inlined_call_operand.vmem [shape: f32[32,1], index: 18, kind: input, shape index: {}]
  %s19 = inlined_call_operand.vmem [shape: f32[32,1], index: 19, kind: input, shape index: {}]
  %s20 = inlined_call_operand.vmem [shape: f32[2,32,16], index: 20, kind: output, shape index: {}]
  %s21 = sld [smem:[#allocation0]]
  $region97: #{tpu_custom_call.1} parent=0
    _
  %s23 = ssub.s32 1, %s21
  %s24 = scalar_select 0, %s23, %s21
  // Predicated region
  $region2: #{tpu_custom_call.1} parent=0 // pred_check
    _
  $region3: #{tpu_custom_call.1} parent=0 // pred_check_branch
    %26 = sbr.rel (0) target = $region5
  $region4: #{tpu_custom_call.1} parent=0 // pred_region
    _
  $region5: #{tpu_custom_call.1} parent=0 // pred_fallthru
    _
  // Predicated region
  $region6: #{tpu_custom_call.1} parent=0 // pred_check
    _
  $region7: #{tpu_custom_call.1} parent=0 // pred_check_branch
    %28 = sbr.rel (0) target = $region9
  $region8: #{tpu_custom_call.1} parent=0 // pred_region
    _
  $region9: #{tpu_custom_call.1} parent=0 // pred_fallthru
    _
  // Predicated region
  $region10: #{tpu_custom_call.1} parent=0 // pred_check
    _
  $region11: #{tpu_custom_call.1} parent=0 // pred_check_branch
    %30 = sbr.rel (0) target = $region13
  $region12: #{tpu_custom_call.1} parent=0 // pred_region
    _
  $region13: #{tpu_custom_call.1} parent=0 // pred_fallthru
    _
  // Predicated region
  $region14: #{tpu_custom_call.1} parent=0 // pred_check
    _
  $region15: #{tpu_custom_call.1} parent=0 // pred_check_branch
    %32 = sbr.rel (0) target = $region17
  $region16: #{tpu_custom_call.1} parent=0 // pred_region
    _
  $region17: #{tpu_custom_call.1} parent=0 // pred_fallthru
    _
  // Predicated region
  $region18: #{tpu_custom_call.1} parent=0 // pred_check
    _
  $region19: #{tpu_custom_call.1} parent=0 // pred_check_branch
    %34 = sbr.rel (0) target = $region21
  $region20: #{tpu_custom_call.1} parent=0 // pred_region
    _
  $region21: #{tpu_custom_call.1} parent=0 // pred_fallthru
    _
  // Predicated region
  $region22: #{tpu_custom_call.1} parent=0 // pred_check
    _
  $region23: #{tpu_custom_call.1} parent=0 // pred_check_branch
    %36 = sbr.rel (0) target = $region25
  $region24: #{tpu_custom_call.1} parent=0 // pred_region
    _
  $region25: #{tpu_custom_call.1} parent=0 // pred_fallthru
    _
  // Predicated region
  $region26: #{tpu_custom_call.1} parent=0 // pred_check
    _
  $region27: #{tpu_custom_call.1} parent=0 // pred_check_branch
    %38 = sbr.rel (0) target = $region29
  $region28: #{tpu_custom_call.1} parent=0 // pred_region
    _
  $region29: #{tpu_custom_call.1} parent=0 // pred_fallthru
    _
  // Predicated region
  $region30: #{tpu_custom_call.1} parent=0 // pred_check
    _
  $region31: #{tpu_custom_call.1} parent=0 // pred_check_branch
    %40 = sbr.rel (0) target = $region33
  $region32: #{tpu_custom_call.1} parent=0 // pred_region
    _
  $region33: #{tpu_custom_call.1} parent=0 // pred_fallthru
    _
  // Predicated region
  $region34: #{tpu_custom_call.1} parent=0 // pred_check
    _
  $region35: #{tpu_custom_call.1} parent=0 // pred_check_branch
    %42 = sbr.rel (0) target = $region37
  $region36: #{tpu_custom_call.1} parent=0 // pred_region
    _
  $region37: #{tpu_custom_call.1} parent=0 // pred_fallthru
    _
  // Predicated region
  $region38: #{tpu_custom_call.1} parent=0 // pred_check
    _
  $region39: #{tpu_custom_call.1} parent=0 // pred_check_branch
    %44 = sbr.rel (0) target = $region41
  $region40: #{tpu_custom_call.1} parent=0 // pred_region
    _
  $region41: #{tpu_custom_call.1} parent=0 // pred_fallthru
    _
  // Predicated region
  $region42: #{tpu_custom_call.1} parent=0 // pred_check
    _
  $region43: #{tpu_custom_call.1} parent=0 // pred_check_branch
    %46 = sbr.rel (0) target = $region45
  $region44: #{tpu_custom_call.1} parent=0 // pred_region
    _
  $region45: #{tpu_custom_call.1} parent=0 // pred_fallthru
    _
  // Predicated region
  $region46: #{tpu_custom_call.1} parent=0 // pred_check
    _
  $region47: #{tpu_custom_call.1} parent=0 // pred_check_branch
    %48 = sbr.rel (0) target = $region49
  $region48: #{tpu_custom_call.1} parent=0 // pred_region
    _
  $region49: #{tpu_custom_call.1} parent=0 // pred_fallthru
    _
  // Predicated region
  $region50: #{tpu_custom_call.1} parent=0 // pred_check
    _
  $region51: #{tpu_custom_call.1} parent=0 // pred_check_branch
    %50 = sbr.rel (0) target = $region53
  $region52: #{tpu_custom_call.1} parent=0 // pred_region
    _
  $region53: #{tpu_custom_call.1} parent=0 // pred_fallthru
    _
  // Predicated region
  $region54: #{tpu_custom_call.1} parent=0 // pred_check
    _
  $region55: #{tpu_custom_call.1} parent=0 // pred_check_branch
    %52 = sbr.rel (0) target = $region57
  $region56: #{tpu_custom_call.1} parent=0 // pred_region
    _
  $region57: #{tpu_custom_call.1} parent=0 // pred_fallthru
    _
  // Predicated region
  $region58: #{tpu_custom_call.1} parent=0 // pred_check
    _
  $region59: #{tpu_custom_call.1} parent=0 // pred_check_branch
    %54 = sbr.rel (0) target = $region61
  $region60: #{tpu_custom_call.1} parent=0 // pred_region
    _
  $region61: #{tpu_custom_call.1} parent=0 // pred_fallthru
    _
  // Predicated region
  $region62: #{tpu_custom_call.1} parent=0 // pred_check
    _
  $region63: #{tpu_custom_call.1} parent=0 // pred_check_branch
    %56 = sbr.rel (0) target = $region65
  $region64: #{tpu_custom_call.1} parent=0 // pred_region
    _
  $region65: #{tpu_custom_call.1} parent=0 // pred_fallthru
    _
  // Predicated region
  $region66: #{tpu_custom_call.1} parent=0 // pred_check
    _
  $region67: #{tpu_custom_call.1} parent=0 // pred_check_branch
    %58 = sbr.rel (0) target = $region69
  $region68: #{tpu_custom_call.1} parent=0 // pred_region
    _
  $region69: #{tpu_custom_call.1} parent=0 // pred_fallthru
    _
  // Predicated region
  $region70: #{tpu_custom_call.1} parent=0 // pred_check
    _
  $region71: #{tpu_custom_call.1} parent=0 // pred_check_branch
    %60 = sbr.rel (0) target = $region73
  $region72: #{tpu_custom_call.1} parent=0 // pred_region
    _
  $region73: #{tpu_custom_call.1} parent=0 // pred_fallthru
    _
  // Predicated region
  $region74: #{tpu_custom_call.1} parent=0 // pred_check
    _
  $region75: #{tpu_custom_call.1} parent=0 // pred_check_branch
    %62 = sbr.rel (0) target = $region77
  $region76: #{tpu_custom_call.1} parent=0 // pred_region
    _
  $region77: #{tpu_custom_call.1} parent=0 // pred_fallthru
    _
  // Predicated region
  $region78: #{tpu_custom_call.1} parent=0 // pred_check
    _
  $region79: #{tpu_custom_call.1} parent=0 // pred_check_branch
    %64 = sbr.rel (0) target = $region81
  $region80: #{tpu_custom_call.1} parent=0 // pred_region
    _
  $region81: #{tpu_custom_call.1} parent=0 // pred_fallthru
    _
  %v66 = vld [vmem:[%s0] sm:$0xff]
  %v67 = vld [vmem:[%s0 + $0x8] sm:$0xff]
  %v68 = vld [vmem:[%s0 + $0x10] sm:$0xff]
  %v69 = vld [vmem:[%s0 + $0x18] sm:$0xff]
  %v70 = vld [vmem:[%s0 + $0x20] sm:$0xff]
  %v71 = vld [vmem:[%s0 + $0x28] sm:$0xff]
  %v72 = vld [vmem:[%s0 + $0x30] sm:$0xff]
  %v73 = vld [vmem:[%s0 + $0x38] sm:$0xff]
  %v74 = vld [vmem:[%s1] sm:$0xff]
  %v75 = vld [vmem:[%s1 + $0x8] sm:$0xff]
  %v76 = vld [vmem:[%s1 + $0x10] sm:$0xff]
  %v77 = vld [vmem:[%s1 + $0x18] sm:$0xff]
  %v78 = vadd.f32 %v66, %v74
  %v79 = vadd.f32 %v67, %v75
  %v80 = vadd.f32 %v68, %v76
  %v81 = vadd.f32 %v69, %v77
  %v82 = vadd.f32 %v70, %v74
  %v83 = vadd.f32 %v71, %v75
  %v84 = vadd.f32 %v72, %v76
  %v85 = vadd.f32 %v73, %v77
  loop: start=0, step=1, limit=2
  $region82: #{tpu_custom_call.1} parent=0 // loop_pre_header
    _
  $region83: #{tpu_custom_call.1} parent=0 // loop_header
    %s87 = sphi 0, %s91
    %p88 = scmp.ge.s32.totalorder %s87, 2
    %v92 = vphi %v78, %v2400
    %v93 = vphi %v79, %v2401
    %v94 = vphi %v80, %v2402
    %v95 = vphi %v81, %v2403
    %v96 = vphi %v82, %v2404
    %v97 = vphi %v83, %v2405
    %v98 = vphi %v84, %v2406
    %v99 = vphi %v85, %v2407
  $region84: #{tpu_custom_call.1} parent=0 // loop_header_branch
    %90 = sbr.rel (%p88) target = $region88
  $region85: #{tpu_custom_call.1} parent=0 // loop_body
    %s100 = smul.u32 %s87, 32
    %s101 = scalar_lea.vmem %s6, %s100
    %v102 = vld [vmem:[%s101] sm:$0xff]
    %v103 = vld [vmem:[%s101 + $0x8] sm:$0xff]
    %v104 = vld [vmem:[%s101 + $0x10] sm:$0xff]
    %v105 = vld [vmem:[%s101 + $0x18] sm:$0xff]
    %s106 = scalar_lea.vmem %s7, %s100
    %v107 = vld [vmem:[%s106] sm:$0xff]
    %v108 = vld [vmem:[%s106 + $0x8] sm:$0xff]
    %v109 = vld [vmem:[%s106 + $0x10] sm:$0xff]
    %v110 = vld [vmem:[%s106 + $0x18] sm:$0xff]
    %vm111 = vcmask 130048
    %v112 = vsel %vm111, %v92, 0.0
    %v113 = vsel %vm111, %v93, 0.0
    %v114 = vadd.f32 %v112, %v113
    %v115 = vsel %vm111, %v94, 0.0
    %v116 = vadd.f32 %v114, %v115
    %v117 = vsel %vm111, %v95, 0.0
    %v118 = vadd.f32 %v116, %v117
    %v119 = vrot.slane %v118, 4
    %v120 = vadd.f32 %v118, %v119
    %v121 = vrot.slane %v120, 2
    %v122 = vadd.f32 %v120, %v121
    %v123 = vrot.slane %v122, 1
    %v124 = vadd.f32 %v122, %v123
    %v125 = vsel %vm111, %v96, 0.0
    %v126 = vsel %vm111, %v97, 0.0
    %v127 = vadd.f32 %v125, %v126
    %v128 = vsel %vm111, %v98, 0.0
    %v129 = vadd.f32 %v127, %v128
    %v130 = vsel %vm111, %v99, 0.0
    %v131 = vadd.f32 %v129, %v130
    %v132 = vrot.slane %v131, 4
    %v133 = vadd.f32 %v131, %v132
    %v134 = vrot.slane %v133, 2
    %v135 = vadd.f32 %v133, %v134
    %v136 = vrot.slane %v135, 1
    %v137 = vadd.f32 %v135, %v136
    %v138 = vrcp.pop 32.0
    %v139 = vmul.f32 %v124, %v138
    %v140 = vmul.f32 %v137, %v138
    %v141 = vsub.f32 %v92, %v139
    %v142 = vsub.f32 %v93, %v139
    %v143 = vsub.f32 %v94, %v139
    %v144 = vsub.f32 %v95, %v139
    %v145 = vsub.f32 %v96, %v140
    %v146 = vsub.f32 %v97, %v140
    %v147 = vsub.f32 %v98, %v140
    %v148 = vsub.f32 %v99, %v140
    %v149 = vmul.f32 %v141, %v141
    %v150 = vmul.f32 %v142, %v142
    %v151 = vmul.f32 %v143, %v143
    %v152 = vmul.f32 %v144, %v144
    %v153 = vmul.f32 %v145, %v145
    %v154 = vmul.f32 %v146, %v146
    %v155 = vmul.f32 %v147, %v147
    %v156 = vmul.f32 %v148, %v148
    %v157 = vsel %vm111, %v149, 0.0
    %v158 = vsel %vm111, %v150, 0.0
    %v159 = vadd.f32 %v157, %v158
    %v160 = vsel %vm111, %v151, 0.0
    %v161 = vadd.f32 %v159, %v160
    %v162 = vsel %vm111, %v152, 0.0
    %v163 = vadd.f32 %v161, %v162
    %v164 = vrot.slane %v163, 4
    %v165 = vadd.f32 %v163, %v164
    %v166 = vrot.slane %v165, 2
    %v167 = vadd.f32 %v165, %v166
    %v168 = vrot.slane %v167, 1
    %v169 = vadd.f32 %v167, %v168
    %v170 = vsel %vm111, %v153, 0.0
    %v171 = vsel %vm111, %v154, 0.0
    %v172 = vadd.f32 %v170, %v171
    %v173 = vsel %vm111, %v155, 0.0
    %v174 = vadd.f32 %v172, %v173
    %v175 = vsel %vm111, %v156, 0.0
    %v176 = vadd.f32 %v174, %v175
    %v177 = vrot.slane %v176, 4
    %v178 = vadd.f32 %v176, %v177
    %v179 = vrot.slane %v178, 2
    %v180 = vadd.f32 %v178, %v179
    %v181 = vrot.slane %v180, 1
    %v182 = vadd.f32 %v180, %v181
    %v183 = vmul.f32 %v169, %v138
    %v184 = vmul.f32 %v182, %v138
    %v185 = vadd.f32 %v183, 1e-06
    %v186 = vadd.f32 %v184, 1e-06
    %v187 = vrsqrt.pop %v185
    %v188 = vrsqrt.pop %v186
    %v189 = vmul.f32 %v141, %v187
    %v190 = vmul.f32 %v142, %v187
    %v191 = vmul.f32 %v143, %v187
    %v192 = vmul.f32 %v144, %v187
    %v193 = vmul.f32 %v145, %v188
    %v194 = vmul.f32 %v146, %v188
    %v195 = vmul.f32 %v147, %v188
    %v196 = vmul.f32 %v148, %v188
    %198 = vset.pattern.permute.xlu0 0
    %199 = vperm.xlu0 %198, %v102
    %v200 = vpop.permute.xlu0 %199
    %203 = vset.pattern.permute.xlu0 0
    %204 = vperm.xlu0 %203, %v103
    %v205 = vpop.permute.xlu0 %204
    %208 = vset.pattern.permute.xlu0 0
    %209 = vperm.xlu0 %208, %v104
    %v210 = vpop.permute.xlu0 %209
    %213 = vset.pattern.permute.xlu0 0
    %214 = vperm.xlu0 %213, %v105
    %v215 = vpop.permute.xlu0 %214
    %v217 = vmul.f32 %v189, %v200
    %v218 = vmul.f32 %v190, %v205
    %v219 = vmul.f32 %v191, %v210
    %v220 = vmul.f32 %v192, %v215
    %v221 = vmul.f32 %v193, %v200
    %v222 = vmul.f32 %v194, %v205
    %v223 = vmul.f32 %v195, %v210
    %v224 = vmul.f32 %v196, %v215
    %226 = vset.pattern.permute.xlu0 0
    %227 = vperm.xlu0 %226, %v107
    %v228 = vpop.permute.xlu0 %227
    %231 = vset.pattern.permute.xlu0 0
    %232 = vperm.xlu0 %231, %v108
    %v233 = vpop.permute.xlu0 %232
    %236 = vset.pattern.permute.xlu0 0
    %237 = vperm.xlu0 %236, %v109
    %v238 = vpop.permute.xlu0 %237
    %241 = vset.pattern.permute.xlu0 0
    %242 = vperm.xlu0 %241, %v110
    %v243 = vpop.permute.xlu0 %242
    %v245 = vadd.f32 %v217, %v228
    %v246 = vadd.f32 %v218, %v233
    %v247 = vadd.f32 %v219, %v238
    %v248 = vadd.f32 %v220, %v243
    %v249 = vadd.f32 %v221, %v228
    %v250 = vadd.f32 %v222, %v233
    %v251 = vadd.f32 %v223, %v238
    %v252 = vadd.f32 %v224, %v243
    %v253 = vpack.c.bf16 %v246, %v245
    %v254 = vpack.c.bf16 %v248, %v247
    %v255 = vpack.c.bf16 %v250, %v249
    %v256 = vpack.c.bf16 %v252, %v251
    %v257 = vld [vmem:[%s2] sm:$0xf]
    %v258 = vld [vmem:[%s2 + $0x4] sm:$0xf]
    %v261 = vunpack.c.l.b16 %v257
    %v262 = vunpack.c.l.b16 %v258
    %v263 = vpack.c.b16 %v262, %v261
    %v266 = vsel %vm111, %v253, 0
    %v269 = vsel %vm111, %v254, 0
    %v272 = vsel %vm111, %v255, 0
    %v275 = vsel %vm111, %v256, 0
    %277 = vmatprep.subr.bf16.mxu0 0
    %278 = vmatpush1.bf16.msra.mxu0 %v263
    %279 = vmatprep.subr.bf16.mxu0 0
    %280 = vmatpush1.bf16.msra.mxu0 0
    %281 = vmatprep.subr.bf16.mxu0 0
    %282 = vmatpush1.bf16.msra.mxu0 0
    %283 = vmatprep.subr.bf16.mxu0 0
    %284 = vmatpush1.bf16.msra.mxu0 0
    %285 = vmatprep.subr.bf16.mxu0 0
    %286 = vmatpush1.bf16.msra.mxu0 0
    %287 = vmatprep.subr.bf16.mxu0 0
    %288 = vmatpush1.bf16.msra.mxu0 0
    %289 = vmatprep.subr.bf16.mxu0 0
    %290 = vmatpush1.bf16.msra.mxu0 0
    %291 = vmatprep.subr.bf16.mxu0 0
    %292 = vmatpush1.bf16.msra.mxu0 0
    %293 = vmatprep.subr.bf16.mxu0 0
    %294 = vmatpush1.bf16.msra.mxu0 0
    %295 = vmatprep.subr.bf16.mxu0 0
    %296 = vmatpush1.bf16.msra.mxu0 0
    %297 = vmatprep.subr.bf16.mxu0 0
    %298 = vmatpush1.bf16.msra.mxu0 0
    %299 = vmatprep.subr.bf16.mxu0 0
    %300 = vmatpush1.bf16.msra.mxu0 0
    %301 = vmatprep.subr.bf16.mxu0 0
    %302 = vmatpush1.bf16.msra.mxu0 0
    %303 = vmatprep.subr.bf16.mxu0 0
    %304 = vmatpush1.bf16.msra.mxu0 0
    %305 = vmatprep.subr.bf16.mxu0 0
    %306 = vmatpush1.bf16.msra.mxu0 0
    %307 = vmatprep.subr.bf16.mxu0 0
    %308 = vmatpush1.bf16.msra.mxu0 0
    %309 = vmatprep.mubr.bf16.mxu0 0
    %310 = vmatmul.mubr.bf16.gmra.mrb[0].mxu0 %v266
    %v311 = vpop.f32.mrb[0].mxu0
    %v312 = vadd.f32 0.0, %v311
    %v313 = vpop.f32.mrb[0].mxu0
    %v314 = vpop.f32.mrb[0].mxu0
    %v315 = vadd.f32 0.0, %v314
    %v316 = vpop.f32.mrb[0].mxu0
    %317 = vmatprep.mubr.bf16.mxu0 0
    %318 = vmatmul.mubr.bf16.gmra.mrb[0].mxu0 %v269
    %v319 = vpop.f32.mrb[0].mxu0
    %v320 = vadd.f32 0.0, %v319
    %v321 = vpop.f32.mrb[0].mxu0
    %v322 = vpop.f32.mrb[0].mxu0
    %v323 = vadd.f32 0.0, %v322
    %v324 = vpop.f32.mrb[0].mxu0
    %325 = vmatprep.mubr.bf16.mxu0 0
    %326 = vmatmul.mubr.bf16.gmra.mrb[0].mxu0 %v272
    %v327 = vpop.f32.mrb[0].mxu0
    %v328 = vadd.f32 0.0, %v327
    %v329 = vpop.f32.mrb[0].mxu0
    %v330 = vpop.f32.mrb[0].mxu0
    %v331 = vadd.f32 0.0, %v330
    %v332 = vpop.f32.mrb[0].mxu0
    %333 = vmatprep.mubr.bf16.mxu0 0
    %334 = vmatmul.mubr.bf16.gmra.mrb[0].mxu0 %v275
    %v335 = vpop.f32.mrb[0].mxu0
    %v336 = vadd.f32 0.0, %v335
    %v337 = vpop.f32.mrb[0].mxu0
    %v338 = vpop.f32.mrb[0].mxu0
    %v339 = vadd.f32 0.0, %v338
    %v340 = vpop.f32.mrb[0].mxu0
    %341 = vdwg.mxu0
    %v342 = vld [vmem:[%s3] sm:$0xf]
    %v343 = vld [vmem:[%s3 + $0x4] sm:$0xf]
    %v346 = vunpack.c.l.b16 %v342
    %v347 = vunpack.c.l.b16 %v343
    %v348 = vpack.c.b16 %v347, %v346
    %350 = vmatprep.subr.bf16.mxu0 0
    %351 = vmatpush1.bf16.msra.mxu0 %v348
    %352 = vmatprep.subr.bf16.mxu0 0
    %353 = vmatpush1.bf16.msra.mxu0 0
    %354 = vmatprep.subr.bf16.mxu0 0
    %355 = vmatpush1.bf16.msra.mxu0 0
    %356 = vmatprep.subr.bf16.mxu0 0
    %357 = vmatpush1.bf16.msra.mxu0 0
    %358 = vmatprep.subr.bf16.mxu0 0
    %359 = vmatpush1.bf16.msra.mxu0 0
    %360 = vmatprep.subr.bf16.mxu0 0
    %361 = vmatpush1.bf16.msra.mxu0 0
    %362 = vmatprep.subr.bf16.mxu0 0
    %363 = vmatpush1.bf16.msra.mxu0 0
    %364 = vmatprep.subr.bf16.mxu0 0
    %365 = vmatpush1.bf16.msra.mxu0 0
    %366 = vmatprep.subr.bf16.mxu0 0
    %367 = vmatpush1.bf16.msra.mxu0 0
    %368 = vmatprep.subr.bf16.mxu0 0
    %369 = vmatpush1.bf16.msra.mxu0 0
    %370 = vmatprep.subr.bf16.mxu0 0
    %371 = vmatpush1.bf16.msra.mxu0 0
    %372 = vmatprep.subr.bf16.mxu0 0
    %373 = vmatpush1.bf16.msra.mxu0 0
    %374 = vmatprep.subr.bf16.mxu0 0
    %375 = vmatpush1.bf16.msra.mxu0 0
    %376 = vmatprep.subr.bf16.mxu0 0
    %377 = vmatpush1.bf16.msra.mxu0 0
    %378 = vmatprep.subr.bf16.mxu0 0
    %379 = vmatpush1.bf16.msra.mxu0 0
    %380 = vmatprep.subr.bf16.mxu0 0
    %381 = vmatpush1.bf16.msra.mxu0 0
    %382 = vmatprep.mubr.bf16.mxu0 0
    %383 = vmatmul.mubr.bf16.gmra.mrb[0].mxu0 %v266
    %v384 = vpop.f32.mrb[0].mxu0
    %v385 = vadd.f32 0.0, %v384
    %v386 = vpop.f32.mrb[0].mxu0
    %v387 = vpop.f32.mrb[0].mxu0
    %v388 = vadd.f32 0.0, %v387
    %v389 = vpop.f32.mrb[0].mxu0
    %390 = vmatprep.mubr.bf16.mxu0 0
    %391 = vmatmul.mubr.bf16.gmra.mrb[0].mxu0 %v269
    %v392 = vpop.f32.mrb[0].mxu0
    %v393 = vadd.f32 0.0, %v392
    %v394 = vpop.f32.mrb[0].mxu0
    %v395 = vpop.f32.mrb[0].mxu0
    %v396 = vadd.f32 0.0, %v395
    %v397 = vpop.f32.mrb[0].mxu0
    %398 = vmatprep.mubr.bf16.mxu0 0
    %399 = vmatmul.mubr.bf16.gmra.mrb[0].mxu0 %v272
    %v400 = vpop.f32.mrb[0].mxu0
    %v401 = vadd.f32 0.0, %v400
    %v402 = vpop.f32.mrb[0].mxu0
    %v403 = vpop.f32.mrb[0].mxu0
    %v404 = vadd.f32 0.0, %v403
    %v405 = vpop.f32.mrb[0].mxu0
    %406 = vmatprep.mubr.bf16.mxu0 0
    %407 = vmatmul.mubr.bf16.gmra.mrb[0].mxu0 %v275
    %v408 = vpop.f32.mrb[0].mxu0
    %v409 = vadd.f32 0.0, %v408
    %v410 = vpop.f32.mrb[0].mxu0
    %v411 = vpop.f32.mrb[0].mxu0
    %v412 = vadd.f32 0.0, %v411
    %v413 = vpop.f32.mrb[0].mxu0
    %414 = vdwg.mxu0
    %s415 = smul.u32 %s87, 16
    %s416 = smul.addr %s415, 4
    %s417 = scalar_lea.vmem %s8, %s416
    %v418 = vld [vmem:[%s417] sm:$0xf]
    %v419 = vld [vmem:[%s417 + $0x4] sm:$0xf]
    %v420 = vld [vmem:[%s417 + $0x8] sm:$0xf]
    %v421 = vld [vmem:[%s417 + $0xc] sm:$0xf]
    %v422 = vld [vmem:[%s417 + $0x10] sm:$0xf]
    %v423 = vld [vmem:[%s417 + $0x14] sm:$0xf]
    %v424 = vld [vmem:[%s417 + $0x18] sm:$0xf]
    %v425 = vld [vmem:[%s417 + $0x1c] sm:$0xf]
    %v426 = vld [vmem:[%s417 + $0x20] sm:$0xf]
    %v427 = vld [vmem:[%s417 + $0x24] sm:$0xf]
    %v428 = vld [vmem:[%s417 + $0x28] sm:$0xf]
    %v429 = vld [vmem:[%s417 + $0x2c] sm:$0xf]
    %v430 = vld [vmem:[%s417 + $0x30] sm:$0xf]
    %v431 = vld [vmem:[%s417 + $0x34] sm:$0xf]
    %v432 = vld [vmem:[%s417 + $0x38] sm:$0xf]
    %v433 = vld [vmem:[%s417 + $0x3c] sm:$0xf]
    %v434 = vpack.c.bf16 %v315, %v312
    %v435 = vpack.c.bf16 %v323, %v320
    %v436 = vpack.c.bf16 %v388, %v385
    %v437 = vpack.c.bf16 %v396, %v393
    %v438 = vpack.c.bf16 %v331, %v328
    %v439 = vpack.c.bf16 %v339, %v336
    %v440 = vpack.c.bf16 %v404, %v401
    %v441 = vpack.c.bf16 %v412, %v409
    %s442 = smul.u32 %s87, 128
    %s443 = scalar_lea.vmem %s9, %s442
    %v444 = vld [vmem:[%s443] sm:$0xff]
    %v445 = vld [vmem:[%s443 + $0x8] sm:$0xff]
    %v446 = vld [vmem:[%s443 + $0x10] sm:$0xff]
    %v447 = vld [vmem:[%s443 + $0x18] sm:$0xff]
    %v448 = vld [vmem:[%s443 + $0x20] sm:$0xff]
    %v449 = vld [vmem:[%s443 + $0x28] sm:$0xff]
    %v450 = vld [vmem:[%s443 + $0x30] sm:$0xff]
    %v451 = vld [vmem:[%s443 + $0x38] sm:$0xff]
    %v452 = vld [vmem:[%s443 + $0x40] sm:$0xff]
    %v453 = vld [vmem:[%s443 + $0x48] sm:$0xff]
    %v454 = vld [vmem:[%s443 + $0x50] sm:$0xff]
    %v455 = vld [vmem:[%s443 + $0x58] sm:$0xff]
    %v456 = vld [vmem:[%s443 + $0x60] sm:$0xff]
    %v457 = vld [vmem:[%s443 + $0x68] sm:$0xff]
    %v458 = vld [vmem:[%s443 + $0x70] sm:$0xff]
    %v459 = vld [vmem:[%s443 + $0x78] sm:$0xff]
    %461 = vset.pattern.permute.xlu0 0
    %462 = vperm.xlu0 %461, %v444
    %v463 = vpop.permute.xlu0 %462
    %466 = vset.pattern.permute.xlu0 0
    %467 = vperm.xlu0 %466, %v445
    %v468 = vpop.permute.xlu0 %467
    %471 = vset.pattern.permute.xlu0 0
    %472 = vperm.xlu0 %471, %v446
    %v473 = vpop.permute.xlu0 %472
    %476 = vset.pattern.permute.xlu0 0
    %477 = vperm.xlu0 %476, %v447
    %v478 = vpop.permute.xlu0 %477
    %481 = vset.pattern.permute.xlu0 0
    %482 = vperm.xlu0 %481, %v448
    %v483 = vpop.permute.xlu0 %482
    %486 = vset.pattern.permute.xlu0 0
    %487 = vperm.xlu0 %486, %v449
    %v488 = vpop.permute.xlu0 %487
    %491 = vset.pattern.permute.xlu0 0
    %492 = vperm.xlu0 %491, %v450
    %v493 = vpop.permute.xlu0 %492
    %496 = vset.pattern.permute.xlu0 0
    %497 = vperm.xlu0 %496, %v451
    %v498 = vpop.permute.xlu0 %497
    %501 = vset.pattern.permute.xlu0 0
    %502 = vperm.xlu0 %501, %v452
    %v503 = vpop.permute.xlu0 %502
    %506 = vset.pattern.permute.xlu0 0
    %507 = vperm.xlu0 %506, %v453
    %v508 = vpop.permute.xlu0 %507
    %511 = vset.pattern.permute.xlu0 0
    %512 = vperm.xlu0 %511, %v454
    %v513 = vpop.permute.xlu0 %512
    %516 = vset.pattern.permute.xlu0 0
    %517 = vperm.xlu0 %516, %v455
    %v518 = vpop.permute.xlu0 %517
    %521 = vset.pattern.permute.xlu0 0
    %522 = vperm.xlu0 %521, %v456
    %v523 = vpop.permute.xlu0 %522
    %526 = vset.pattern.permute.xlu0 0
    %527 = vperm.xlu0 %526, %v457
    %v528 = vpop.permute.xlu0 %527
    %531 = vset.pattern.permute.xlu0 0
    %532 = vperm.xlu0 %531, %v458
    %v533 = vpop.permute.xlu0 %532
    %536 = vset.pattern.permute.xlu0 0
    %537 = vperm.xlu0 %536, %v459
    %v538 = vpop.permute.xlu0 %537
    %v556 = vunpack.c.l.b16 %v418
    %v557 = vunpack.c.l.b16 %v419
    %v558 = vunpack.c.l.b16 %v420
    %v559 = vunpack.c.l.b16 %v421
    %v560 = vunpack.c.l.b16 %v422
    %v561 = vunpack.c.l.b16 %v423
    %v562 = vunpack.c.l.b16 %v424
    %v563 = vunpack.c.l.b16 %v425
    %v564 = vunpack.c.l.b16 %v426
    %v565 = vunpack.c.l.b16 %v427
    %v566 = vunpack.c.l.b16 %v428
    %v567 = vunpack.c.l.b16 %v429
    %v568 = vunpack.c.l.b16 %v430
    %v569 = vunpack.c.l.b16 %v431
    %v570 = vunpack.c.l.b16 %v432
    %v571 = vunpack.c.l.b16 %v433
    %v572 = vpack.c.b16 %v557, %v556
    %v573 = vpack.c.b16 %v559, %v558
    %v574 = vpack.c.b16 %v561, %v560
    %v575 = vpack.c.b16 %v563, %v562
    %v576 = vpack.c.b16 %v565, %v564
    %v577 = vpack.c.b16 %v567, %v566
    %v578 = vpack.c.b16 %v569, %v568
    %v579 = vpack.c.b16 %v571, %v570
    %588 = vmatprep.subr.bf16.mxu0 0
    %589 = vmatpush1.bf16.msra.mxu0 %v434
    %590 = vmatprep.subr.bf16.mxu0 0
    %591 = vmatpush1.bf16.msra.mxu0 %v435
    %592 = vmatprep.subr.bf16.mxu0 0
    %593 = vmatpush1.bf16.msra.mxu0 %v436
    %594 = vmatprep.subr.bf16.mxu0 0
    %595 = vmatpush1.bf16.msra.mxu0 %v437
    %596 = vmatprep.subr.bf16.mxu0 0
    %597 = vmatpush1.bf16.msra.mxu0 %v438
    %598 = vmatprep.subr.bf16.mxu0 0
    %599 = vmatpush1.bf16.msra.mxu0 %v439
    %600 = vmatprep.subr.bf16.mxu0 0
    %601 = vmatpush1.bf16.msra.mxu0 %v440
    %602 = vmatprep.subr.bf16.mxu0 0
    %603 = vmatpush1.bf16.msra.mxu0 %v441
    %604 = vmatprep.subr.bf16.mxu0 0
    %605 = vmatpush1.bf16.msra.mxu0 0
    %606 = vmatprep.subr.bf16.mxu0 0
    %607 = vmatpush1.bf16.msra.mxu0 0
    %608 = vmatprep.subr.bf16.mxu0 0
    %609 = vmatpush1.bf16.msra.mxu0 0
    %610 = vmatprep.subr.bf16.mxu0 0
    %611 = vmatpush1.bf16.msra.mxu0 0
    %612 = vmatprep.subr.bf16.mxu0 0
    %613 = vmatpush1.bf16.msra.mxu0 0
    %614 = vmatprep.subr.bf16.mxu0 0
    %615 = vmatpush1.bf16.msra.mxu0 0
    %616 = vmatprep.subr.bf16.mxu0 0
    %617 = vmatpush1.bf16.msra.mxu0 0
    %618 = vmatprep.subr.bf16.mxu0 0
    %619 = vmatpush1.bf16.msra.mxu0 0
    %620 = vmatprep.mubr.bf16.mxu0 0
    %621 = vmatmul.mubr.bf16.gmra.mrb[0].mxu0 %v572
    %v622 = vpop.f32.mrb[0].mxu0
    %v623 = vadd.f32 %v463, %v622
    %v624 = vpop.f32.mrb[0].mxu0
    %v625 = vpop.f32.mrb[0].mxu0
    %v626 = vadd.f32 %v468, %v625
    %v627 = vpop.f32.mrb[0].mxu0
    %628 = vmatprep.mubr.bf16.mxu0 0
    %629 = vmatmul.mubr.bf16.gmra.mrb[0].mxu0 %v573
    %v630 = vpop.f32.mrb[0].mxu0
    %v631 = vadd.f32 %v473, %v630
    %v632 = vpop.f32.mrb[0].mxu0
    %v633 = vpop.f32.mrb[0].mxu0
    %v634 = vadd.f32 %v478, %v633
    %v635 = vpop.f32.mrb[0].mxu0
    %636 = vmatprep.mubr.bf16.mxu0 0
    %637 = vmatmul.mubr.bf16.gmra.mrb[0].mxu0 %v574
    %v638 = vpop.f32.mrb[0].mxu0
    %v639 = vadd.f32 %v483, %v638
    %v640 = vpop.f32.mrb[0].mxu0
    %v641 = vpop.f32.mrb[0].mxu0
    %v642 = vadd.f32 %v488, %v641
    %v643 = vpop.f32.mrb[0].mxu0
    %644 = vmatprep.mubr.bf16.mxu0 0
    %645 = vmatmul.mubr.bf16.gmra.mrb[0].mxu0 %v575
    %v646 = vpop.f32.mrb[0].mxu0
    %v647 = vadd.f32 %v493, %v646
    %v648 = vpop.f32.mrb[0].mxu0
    %v649 = vpop.f32.mrb[0].mxu0
    %v650 = vadd.f32 %v498, %v649
    %v651 = vpop.f32.mrb[0].mxu0
    %652 = vmatprep.mubr.bf16.mxu0 0
    %653 = vmatmul.mubr.bf16.gmra.mrb[0].mxu0 %v576
    %v654 = vpop.f32.mrb[0].mxu0
    %v655 = vadd.f32 %v503, %v654
    %v656 = vpop.f32.mrb[0].mxu0
    %v657 = vpop.f32.mrb[0].mxu0
    %v658 = vadd.f32 %v508, %v657
    %v659 = vpop.f32.mrb[0].mxu0
    %660 = vmatprep.mubr.bf16.mxu0 0
    %661 = vmatmul.mubr.bf16.gmra.mrb[0].mxu0 %v577
    %v662 = vpop.f32.mrb[0].mxu0
    %v663 = vadd.f32 %v513, %v662
    %v664 = vpop.f32.mrb[0].mxu0
    %v665 = vpop.f32.mrb[0].mxu0
    %v666 = vadd.f32 %v518, %v665
    %v667 = vpop.f32.mrb[0].mxu0
    %668 = vmatprep.mubr.bf16.mxu0 0
    %669 = vmatmul.mubr.bf16.gmra.mrb[0].mxu0 %v578
    %v670 = vpop.f32.mrb[0].mxu0
    %v671 = vadd.f32 %v523, %v670
    %v672 = vpop.f32.mrb[0].mxu0
    %v673 = vpop.f32.mrb[0].mxu0
    %v674 = vadd.f32 %v528, %v673
    %v675 = vpop.f32.mrb[0].mxu0
    %676 = vmatprep.mubr.bf16.mxu0 0
    %677 = vmatmul.mubr.bf16.gmra.mrb[0].mxu0 %v579
    %v678 = vpop.f32.mrb[0].mxu0
    %v679 = vadd.f32 %v533, %v678
    %v680 = vpop.f32.mrb[0].mxu0
    %v681 = vpop.f32.mrb[0].mxu0
    %v682 = vadd.f32 %v538, %v681
    %v683 = vpop.f32.mrb[0].mxu0
    %684 = vdwg.mxu0
    %v685 = vmax.f32 %v623, 0.0
    %v686 = vmax.f32 %v626, 0.0
    %v687 = vmax.f32 %v631, 0.0
    %v688 = vmax.f32 %v634, 0.0
    %v689 = vmax.f32 %v639, 0.0
    %v690 = vmax.f32 %v642, 0.0
    %v691 = vmax.f32 %v647, 0.0
    %v692 = vmax.f32 %v650, 0.0
    %v693 = vmax.f32 %v655, 0.0
    %v694 = vmax.f32 %v658, 0.0
    %v695 = vmax.f32 %v663, 0.0
    %v696 = vmax.f32 %v666, 0.0
    %v697 = vmax.f32 %v671, 0.0
    %v698 = vmax.f32 %v674, 0.0
    %v699 = vmax.f32 %v679, 0.0
    %v700 = vmax.f32 %v682, 0.0
    %s701 = smul.addr %s415, 4
    %s702 = scalar_lea.vmem %s10, %s701
    %v703 = vld [vmem:[%s702] sm:$0xf]
    %v704 = vld [vmem:[%s702 + $0x4] sm:$0xf]
    %v705 = vld [vmem:[%s702 + $0x8] sm:$0xf]
    %v706 = vld [vmem:[%s702 + $0xc] sm:$0xf]
    %v707 = vld [vmem:[%s702 + $0x10] sm:$0xf]
    %v708 = vld [vmem:[%s702 + $0x14] sm:$0xf]
    %v709 = vld [vmem:[%s702 + $0x18] sm:$0xf]
    %v710 = vld [vmem:[%s702 + $0x1c] sm:$0xf]
    %v711 = vld [vmem:[%s702 + $0x20] sm:$0xf]
    %v712 = vld [vmem:[%s702 + $0x24] sm:$0xf]
    %v713 = vld [vmem:[%s702 + $0x28] sm:$0xf]
    %v714 = vld [vmem:[%s702 + $0x2c] sm:$0xf]
    %v715 = vld [vmem:[%s702 + $0x30] sm:$0xf]
    %v716 = vld [vmem:[%s702 + $0x34] sm:$0xf]
    %v717 = vld [vmem:[%s702 + $0x38] sm:$0xf]
    %v718 = vld [vmem:[%s702 + $0x3c] sm:$0xf]
    %v719 = vpack.c.bf16 %v686, %v685
    %v720 = vpack.c.bf16 %v688, %v687
    %v721 = vpack.c.bf16 %v690, %v689
    %v722 = vpack.c.bf16 %v692, %v691
    %v723 = vpack.c.bf16 %v694, %v693
    %v724 = vpack.c.bf16 %v696, %v695
    %v725 = vpack.c.bf16 %v698, %v697
    %v726 = vpack.c.bf16 %v700, %v699
    %s727 = scalar_lea.vmem %s11, %s442
    %v728 = vld [vmem:[%s727] sm:$0xff]
    %v729 = vld [vmem:[%s727 + $0x8] sm:$0xff]
    %v730 = vld [vmem:[%s727 + $0x10] sm:$0xff]
    %v731 = vld [vmem:[%s727 + $0x18] sm:$0xff]
    %v732 = vld [vmem:[%s727 + $0x20] sm:$0xff]
    %v733 = vld [vmem:[%s727 + $0x28] sm:$0xff]
    %v734 = vld [vmem:[%s727 + $0x30] sm:$0xff]
    %v735 = vld [vmem:[%s727 + $0x38] sm:$0xff]
    %v736 = vld [vmem:[%s727 + $0x40] sm:$0xff]
    %v737 = vld [vmem:[%s727 + $0x48] sm:$0xff]
    %v738 = vld [vmem:[%s727 + $0x50] sm:$0xff]
    %v739 = vld [vmem:[%s727 + $0x58] sm:$0xff]
    %v740 = vld [vmem:[%s727 + $0x60] sm:$0xff]
    %v741 = vld [vmem:[%s727 + $0x68] sm:$0xff]
    %v742 = vld [vmem:[%s727 + $0x70] sm:$0xff]
    %v743 = vld [vmem:[%s727 + $0x78] sm:$0xff]
    %745 = vset.pattern.permute.xlu0 0
    %746 = vperm.xlu0 %745, %v728
    %v747 = vpop.permute.xlu0 %746
    %750 = vset.pattern.permute.xlu0 0
    %751 = vperm.xlu0 %750, %v729
    %v752 = vpop.permute.xlu0 %751
    %755 = vset.pattern.permute.xlu0 0
    %756 = vperm.xlu0 %755, %v730
    %v757 = vpop.permute.xlu0 %756
    %760 = vset.pattern.permute.xlu0 0
    %761 = vperm.xlu0 %760, %v731
    %v762 = vpop.permute.xlu0 %761
    %765 = vset.pattern.permute.xlu0 0
    %766 = vperm.xlu0 %765, %v732
    %v767 = vpop.permute.xlu0 %766
    %770 = vset.pattern.permute.xlu0 0
    %771 = vperm.xlu0 %770, %v733
    %v772 = vpop.permute.xlu0 %771
    %775 = vset.pattern.permute.xlu0 0
    %776 = vperm.xlu0 %775, %v734
    %v777 = vpop.permute.xlu0 %776
    %780 = vset.pattern.permute.xlu0 0
    %781 = vperm.xlu0 %780, %v735
    %v782 = vpop.permute.xlu0 %781
    %785 = vset.pattern.permute.xlu0 0
    %786 = vperm.xlu0 %785, %v736
    %v787 = vpop.permute.xlu0 %786
    %790 = vset.pattern.permute.xlu0 0
    %791 = vperm.xlu0 %790, %v737
    %v792 = vpop.permute.xlu0 %791
    %795 = vset.pattern.permute.xlu0 0
    %796 = vperm.xlu0 %795, %v738
    %v797 = vpop.permute.xlu0 %796
    %800 = vset.pattern.permute.xlu0 0
    %801 = vperm.xlu0 %800, %v739
    %v802 = vpop.permute.xlu0 %801
    %805 = vset.pattern.permute.xlu0 0
    %806 = vperm.xlu0 %805, %v740
    %v807 = vpop.permute.xlu0 %806
    %810 = vset.pattern.permute.xlu0 0
    %811 = vperm.xlu0 %810, %v741
    %v812 = vpop.permute.xlu0 %811
    %815 = vset.pattern.permute.xlu0 0
    %816 = vperm.xlu0 %815, %v742
    %v817 = vpop.permute.xlu0 %816
    %820 = vset.pattern.permute.xlu0 0
    %821 = vperm.xlu0 %820, %v743
    %v822 = vpop.permute.xlu0 %821
    %v840 = vunpack.c.l.b16 %v703
    %v841 = vunpack.c.l.b16 %v704
    %v842 = vunpack.c.l.b16 %v705
    %v843 = vunpack.c.l.b16 %v706
    %v844 = vunpack.c.l.b16 %v707
    %v845 = vunpack.c.l.b16 %v708
    %v846 = vunpack.c.l.b16 %v709
    %v847 = vunpack.c.l.b16 %v710
    %v848 = vunpack.c.l.b16 %v711
    %v849 = vunpack.c.l.b16 %v712
    %v850 = vunpack.c.l.b16 %v713
    %v851 = vunpack.c.l.b16 %v714
    %v852 = vunpack.c.l.b16 %v715
    %v853 = vunpack.c.l.b16 %v716
    %v854 = vunpack.c.l.b16 %v717
    %v855 = vunpack.c.l.b16 %v718
    %v856 = vpack.c.b16 %v841, %v840
    %v857 = vpack.c.b16 %v843, %v842
    %v858 = vpack.c.b16 %v845, %v844
    %v859 = vpack.c.b16 %v847, %v846
    %v860 = vpack.c.b16 %v849, %v848
    %v861 = vpack.c.b16 %v851, %v850
    %v862 = vpack.c.b16 %v853, %v852
    %v863 = vpack.c.b16 %v855, %v854
    %872 = vmatprep.subr.bf16.mxu0 0
    %873 = vmatpush1.bf16.msra.mxu0 %v719
    %874 = vmatprep.subr.bf16.mxu0 0
    %875 = vmatpush1.bf16.msra.mxu0 %v720
    %876 = vmatprep.subr.bf16.mxu0 0
    %877 = vmatpush1.bf16.msra.mxu0 %v721
    %878 = vmatprep.subr.bf16.mxu0 0
    %879 = vmatpush1.bf16.msra.mxu0 %v722
    %880 = vmatprep.subr.bf16.mxu0 0
    %881 = vmatpush1.bf16.msra.mxu0 %v723
    %882 = vmatprep.subr.bf16.mxu0 0
    %883 = vmatpush1.bf16.msra.mxu0 %v724
    %884 = vmatprep.subr.bf16.mxu0 0
    %885 = vmatpush1.bf16.msra.mxu0 %v725
    %886 = vmatprep.subr.bf16.mxu0 0
    %887 = vmatpush1.bf16.msra.mxu0 %v726
    %888 = vmatprep.subr.bf16.mxu0 0
    %889 = vmatpush1.bf16.msra.mxu0 0
    %890 = vmatprep.subr.bf16.mxu0 0
    %891 = vmatpush1.bf16.msra.mxu0 0
    %892 = vmatprep.subr.bf16.mxu0 0
    %893 = vmatpush1.bf16.msra.mxu0 0
    %894 = vmatprep.subr.bf16.mxu0 0
    %895 = vmatpush1.bf16.msra.mxu0 0
    %896 = vmatprep.subr.bf16.mxu0 0
    %897 = vmatpush1.bf16.msra.mxu0 0
    %898 = vmatprep.subr.bf16.mxu0 0
    %899 = vmatpush1.bf16.msra.mxu0 0
    %900 = vmatprep.subr.bf16.mxu0 0
    %901 = vmatpush1.bf16.msra.mxu0 0
    %902 = vmatprep.subr.bf16.mxu0 0
    %903 = vmatpush1.bf16.msra.mxu0 0
    %904 = vmatprep.mubr.bf16.mxu0 0
    %905 = vmatmul.mubr.bf16.gmra.mrb[0].mxu0 %v856
    %v906 = vpop.f32.mrb[0].mxu0
    %v907 = vadd.f32 %v747, %v906
    %v908 = vpop.f32.mrb[0].mxu0
    %v909 = vpop.f32.mrb[0].mxu0
    %v910 = vadd.f32 %v752, %v909
    %v911 = vpop.f32.mrb[0].mxu0
    %912 = vmatprep.mubr.bf16.mxu0 0
    %913 = vmatmul.mubr.bf16.gmra.mrb[0].mxu0 %v857
    %v914 = vpop.f32.mrb[0].mxu0
    %v915 = vadd.f32 %v757, %v914
    %v916 = vpop.f32.mrb[0].mxu0
    %v917 = vpop.f32.mrb[0].mxu0
    %v918 = vadd.f32 %v762, %v917
    %v919 = vpop.f32.mrb[0].mxu0
    %920 = vmatprep.mubr.bf16.mxu0 0
    %921 = vmatmul.mubr.bf16.gmra.mrb[0].mxu0 %v858
    %v922 = vpop.f32.mrb[0].mxu0
    %v923 = vadd.f32 %v767, %v922
    %v924 = vpop.f32.mrb[0].mxu0
    %v925 = vpop.f32.mrb[0].mxu0
    %v926 = vadd.f32 %v772, %v925
    %v927 = vpop.f32.mrb[0].mxu0
    %928 = vmatprep.mubr.bf16.mxu0 0
    %929 = vmatmul.mubr.bf16.gmra.mrb[0].mxu0 %v859
    %v930 = vpop.f32.mrb[0].mxu0
    %v931 = vadd.f32 %v777, %v930
    %v932 = vpop.f32.mrb[0].mxu0
    %v933 = vpop.f32.mrb[0].mxu0
    %v934 = vadd.f32 %v782, %v933
    %v935 = vpop.f32.mrb[0].mxu0
    %936 = vmatprep.mubr.bf16.mxu0 0
    %937 = vmatmul.mubr.bf16.gmra.mrb[0].mxu0 %v860
    %v938 = vpop.f32.mrb[0].mxu0
    %v939 = vadd.f32 %v787, %v938
    %v940 = vpop.f32.mrb[0].mxu0
    %v941 = vpop.f32.mrb[0].mxu0
    %v942 = vadd.f32 %v792, %v941
    %v943 = vpop.f32.mrb[0].mxu0
    %944 = vmatprep.mubr.bf16.mxu0 0
    %945 = vmatmul.mubr.bf16.gmra.mrb[0].mxu0 %v861
    %v946 = vpop.f32.mrb[0].mxu0
    %v947 = vadd.f32 %v797, %v946
    %v948 = vpop.f32.mrb[0].mxu0
    %v949 = vpop.f32.mrb[0].mxu0
    %v950 = vadd.f32 %v802, %v949
    %v951 = vpop.f32.mrb[0].mxu0
    %952 = vmatprep.mubr.bf16.mxu0 0
    %953 = vmatmul.mubr.bf16.gmra.mrb[0].mxu0 %v862
    %v954 = vpop.f32.mrb[0].mxu0
    %v955 = vadd.f32 %v807, %v954
    %v956 = vpop.f32.mrb[0].mxu0
    %v957 = vpop.f32.mrb[0].mxu0
    %v958 = vadd.f32 %v812, %v957
    %v959 = vpop.f32.mrb[0].mxu0
    %960 = vmatprep.mubr.bf16.mxu0 0
    %961 = vmatmul.mubr.bf16.gmra.mrb[0].mxu0 %v863
    %v962 = vpop.f32.mrb[0].mxu0
    %v963 = vadd.f32 %v817, %v962
    %v964 = vpop.f32.mrb[0].mxu0
    %v965 = vpop.f32.mrb[0].mxu0
    %v966 = vadd.f32 %v822, %v965
    %v967 = vpop.f32.mrb[0].mxu0
    %968 = vdwg.mxu0
    %vm969 = vcmp.gt.f32.partialorder %v907, 0.01
    %vm970 = vcmp.gt.f32.partialorder %v910, 0.01
    %vm971 = vcmp.gt.f32.partialorder %v915, 0.01
    %vm972 = vcmp.gt.f32.partialorder %v918, 0.01
    %vm973 = vcmp.gt.f32.partialorder %v923, 0.01
    %vm974 = vcmp.gt.f32.partialorder %v926, 0.01
    %vm975 = vcmp.gt.f32.partialorder %v931, 0.01
    %vm976 = vcmp.gt.f32.partialorder %v934, 0.01
    %vm977 = vcmp.gt.f32.partialorder %v939, 0.01
    %vm978 = vcmp.gt.f32.partialorder %v942, 0.01
    %vm979 = vcmp.gt.f32.partialorder %v947, 0.01
    %vm980 = vcmp.gt.f32.partialorder %v950, 0.01
    %vm981 = vcmp.gt.f32.partialorder %v955, 0.01
    %vm982 = vcmp.gt.f32.partialorder %v958, 0.01
    %vm983 = vcmp.gt.f32.partialorder %v963, 0.01
    %vm984 = vcmp.gt.f32.partialorder %v966, 0.01
    %v985 = vsub.f32 %v907, 0.01
    %v986 = vsub.f32 %v910, 0.01
    %v987 = vsub.f32 %v915, 0.01
    %v988 = vsub.f32 %v918, 0.01
    %v989 = vsub.f32 %v923, 0.01
    %v990 = vsub.f32 %v926, 0.01
    %v991 = vsub.f32 %v931, 0.01
    %v992 = vsub.f32 %v934, 0.01
    %v993 = vsub.f32 %v939, 0.01
    %v994 = vsub.f32 %v942, 0.01
    %v995 = vsub.f32 %v947, 0.01
    %v996 = vsub.f32 %v950, 0.01
    %v997 = vsub.f32 %v955, 0.01
    %v998 = vsub.f32 %v958, 0.01
    %v999 = vsub.f32 %v963, 0.01
    %v1000 = vsub.f32 %v966, 0.01
    %vm1001 = vcmp.lt.f32.partialorder %v907, -0.01
    %vm1002 = vcmp.lt.f32.partialorder %v910, -0.01
    %vm1003 = vcmp.lt.f32.partialorder %v915, -0.01
    %vm1004 = vcmp.lt.f32.partialorder %v918, -0.01
    %vm1005 = vcmp.lt.f32.partialorder %v923, -0.01
    %vm1006 = vcmp.lt.f32.partialorder %v926, -0.01
    %vm1007 = vcmp.lt.f32.partialorder %v931, -0.01
    %vm1008 = vcmp.lt.f32.partialorder %v934, -0.01
    %vm1009 = vcmp.lt.f32.partialorder %v939, -0.01
    %vm1010 = vcmp.lt.f32.partialorder %v942, -0.01
    %vm1011 = vcmp.lt.f32.partialorder %v947, -0.01
    %vm1012 = vcmp.lt.f32.partialorder %v950, -0.01
    %vm1013 = vcmp.lt.f32.partialorder %v955, -0.01
    %vm1014 = vcmp.lt.f32.partialorder %v958, -0.01
    %vm1015 = vcmp.lt.f32.partialorder %v963, -0.01
    %vm1016 = vcmp.lt.f32.partialorder %v966, -0.01
    %v1017 = vadd.f32 %v907, 0.01
    %v1018 = vadd.f32 %v910, 0.01
    %v1019 = vadd.f32 %v915, 0.01
    %v1020 = vadd.f32 %v918, 0.01
    %v1021 = vadd.f32 %v923, 0.01
    %v1022 = vadd.f32 %v926, 0.01
    %v1023 = vadd.f32 %v931, 0.01
    %v1024 = vadd.f32 %v934, 0.01
    %v1025 = vadd.f32 %v939, 0.01
    %v1026 = vadd.f32 %v942, 0.01
    %v1027 = vadd.f32 %v947, 0.01
    %v1028 = vadd.f32 %v950, 0.01
    %v1029 = vadd.f32 %v955, 0.01
    %v1030 = vadd.f32 %v958, 0.01
    %v1031 = vadd.f32 %v963, 0.01
    %v1032 = vadd.f32 %v966, 0.01
    %v1033 = vsel %vm1001, %v1017, 0.0
    %v1034 = vsel %vm1002, %v1018, 0.0
    %v1035 = vsel %vm1003, %v1019, 0.0
    %v1036 = vsel %vm1004, %v1020, 0.0
    %v1037 = vsel %vm1005, %v1021, 0.0
    %v1038 = vsel %vm1006, %v1022, 0.0
    %v1039 = vsel %vm1007, %v1023, 0.0
    %v1040 = vsel %vm1008, %v1024, 0.0
    %v1041 = vsel %vm1009, %v1025, 0.0
    %v1042 = vsel %vm1010, %v1026, 0.0
    %v1043 = vsel %vm1011, %v1027, 0.0
    %v1044 = vsel %vm1012, %v1028, 0.0
    %v1045 = vsel %vm1013, %v1029, 0.0
    %v1046 = vsel %vm1014, %v1030, 0.0
    %v1047 = vsel %vm1015, %v1031, 0.0
    %v1048 = vsel %vm1016, %v1032, 0.0
    %v1049 = vsel %vm969, %v985, %v1033
    %v1050 = vsel %vm970, %v986, %v1034
    %v1051 = vsel %vm971, %v987, %v1035
    %v1052 = vsel %vm972, %v988, %v1036
    %v1053 = vsel %vm973, %v989, %v1037
    %v1054 = vsel %vm974, %v990, %v1038
    %v1055 = vsel %vm975, %v991, %v1039
    %v1056 = vsel %vm976, %v992, %v1040
    %v1057 = vsel %vm977, %v993, %v1041
    %v1058 = vsel %vm978, %v994, %v1042
    %v1059 = vsel %vm979, %v995, %v1043
    %v1060 = vsel %vm980, %v996, %v1044
    %v1061 = vsel %vm981, %v997, %v1045
    %v1062 = vsel %vm982, %v998, %v1046
    %v1063 = vsel %vm983, %v999, %v1047
    %v1064 = vsel %vm984, %v1000, %v1048
    %v1065 = vpack.c.bf16 %v1050, %v1049
    %v1066 = vpack.c.bf16 %v1052, %v1051
    %v1067 = vpack.c.bf16 %v1058, %v1057
    %v1068 = vpack.c.bf16 %v1060, %v1059
    %v1069 = vld [vmem:[%s4] sm:$0xf]
    %v1070 = vld [vmem:[%s4 + $0x4] sm:$0xf]
    %v1071 = vpack.c.bf16 %v1054, %v1053
    %v1072 = vpack.c.bf16 %v1056, %v1055
    %v1073 = vpack.c.bf16 %v1062, %v1061
    %v1074 = vpack.c.bf16 %v1064, %v1063
    %v1075 = vld [vmem:[%s5] sm:$0xf]
    %v1076 = vld [vmem:[%s5 + $0x4] sm:$0xf]
    %v1079 = vunpack.c.l.b16 %v1075
    %v1080 = vunpack.c.l.b16 %v1076
    %v1081 = vpack.c.b16 %v1080, %v1079
    %v1084 = vsel %vm111, %v1071, 0
    %v1087 = vsel %vm111, %v1072, 0
    %v1090 = vsel %vm111, %v1073, 0
    %v1093 = vsel %vm111, %v1074, 0
    %1095 = vmatprep.subr.bf16.mxu0 0
    %1096 = vmatpush1.bf16.msra.mxu0 %v1081
    %1097 = vmatprep.subr.bf16.mxu0 0
    %1098 = vmatpush1.bf16.msra.mxu0 0
    %1099 = vmatprep.subr.bf16.mxu0 0
    %1100 = vmatpush1.bf16.msra.mxu0 0
    %1101 = vmatprep.subr.bf16.mxu0 0
    %1102 = vmatpush1.bf16.msra.mxu0 0
    %1103 = vmatprep.subr.bf16.mxu0 0
    %1104 = vmatpush1.bf16.msra.mxu0 0
    %1105 = vmatprep.subr.bf16.mxu0 0
    %1106 = vmatpush1.bf16.msra.mxu0 0
    %1107 = vmatprep.subr.bf16.mxu0 0
    %1108 = vmatpush1.bf16.msra.mxu0 0
    %1109 = vmatprep.subr.bf16.mxu0 0
    %1110 = vmatpush1.bf16.msra.mxu0 0
    %1111 = vmatprep.subr.bf16.mxu0 0
    %1112 = vmatpush1.bf16.msra.mxu0 0
    %1113 = vmatprep.subr.bf16.mxu0 0
    %1114 = vmatpush1.bf16.msra.mxu0 0
    %1115 = vmatprep.subr.bf16.mxu0 0
    %1116 = vmatpush1.bf16.msra.mxu0 0
    %1117 = vmatprep.subr.bf16.mxu0 0
    %1118 = vmatpush1.bf16.msra.mxu0 0
    %1119 = vmatprep.subr.bf16.mxu0 0
    %1120 = vmatpush1.bf16.msra.mxu0 0
    %1121 = vmatprep.subr.bf16.mxu0 0
    %1122 = vmatpush1.bf16.msra.mxu0 0
    %1123 = vmatprep.subr.bf16.mxu0 0
    %1124 = vmatpush1.bf16.msra.mxu0 0
    %1125 = vmatprep.subr.bf16.mxu0 0
    %1126 = vmatpush1.bf16.msra.mxu0 0
    %1127 = vmatprep.mubr.bf16.mxu0 0
    %1128 = vmatmul.mubr.bf16.gmra.mrb[0].mxu0 %v1084
    %v1129 = vpop.f32.mrb[0].mxu0
    %v1130 = vadd.f32 0.0, %v1129
    %v1131 = vpop.f32.mrb[0].mxu0
    %v1132 = vpop.f32.mrb[0].mxu0
    %v1133 = vadd.f32 0.0, %v1132
    %v1134 = vpop.f32.mrb[0].mxu0
    %1135 = vmatprep.mubr.bf16.mxu0 0
    %1136 = vmatmul.mubr.bf16.gmra.mrb[0].mxu0 %v1087
    %v1137 = vpop.f32.mrb[0].mxu0
    %v1138 = vadd.f32 0.0, %v1137
    %v1139 = vpop.f32.mrb[0].mxu0
    %v1140 = vpop.f32.mrb[0].mxu0
    %v1141 = vadd.f32 0.0, %v1140
    %v1142 = vpop.f32.mrb[0].mxu0
    %1143 = vmatprep.mubr.bf16.mxu0 0
    %1144 = vmatmul.mubr.bf16.gmra.mrb[0].mxu0 %v1090
    %v1145 = vpop.f32.mrb[0].mxu0
    %v1146 = vadd.f32 0.0, %v1145
    %v1147 = vpop.f32.mrb[0].mxu0
    %v1148 = vpop.f32.mrb[0].mxu0
    %v1149 = vadd.f32 0.0, %v1148
    %v1150 = vpop.f32.mrb[0].mxu0
    %1151 = vmatprep.mubr.bf16.mxu0 0
    %1152 = vmatmul.mubr.bf16.gmra.mrb[0].mxu0 %v1093
    %v1153 = vpop.f32.mrb[0].mxu0
    %v1154 = vadd.f32 0.0, %v1153
    %v1155 = vpop.f32.mrb[0].mxu0
    %v1156 = vpop.f32.mrb[0].mxu0
    %v1157 = vadd.f32 0.0, %v1156
    %v1158 = vpop.f32.mrb[0].mxu0
    %1159 = vdwg.mxu0
    %v1162 = vunpack.c.l.b16 %v1069
    %v1163 = vunpack.c.l.b16 %v1070
    %v1164 = vpack.c.b16 %v1163, %v1162
    %v1167 = vsel %vm111, %v1065, 0
    %v1170 = vsel %vm111, %v1066, 0
    %v1173 = vsel %vm111, %v1067, 0
    %v1176 = vsel %vm111, %v1068, 0
    %1178 = vmatprep.subr.bf16.mxu0 0
    %1179 = vmatpush1.bf16.msra.mxu0 %v1164
    %1180 = vmatprep.subr.bf16.mxu0 0
    %1181 = vmatpush1.bf16.msra.mxu0 0
    %1182 = vmatprep.subr.bf16.mxu0 0
    %1183 = vmatpush1.bf16.msra.mxu0 0
    %1184 = vmatprep.subr.bf16.mxu0 0
    %1185 = vmatpush1.bf16.msra.mxu0 0
    %1186 = vmatprep.subr.bf16.mxu0 0
    %1187 = vmatpush1.bf16.msra.mxu0 0
    %1188 = vmatprep.subr.bf16.mxu0 0
    %1189 = vmatpush1.bf16.msra.mxu0 0
    %1190 = vmatprep.subr.bf16.mxu0 0
    %1191 = vmatpush1.bf16.msra.mxu0 0
    %1192 = vmatprep.subr.bf16.mxu0 0
    %1193 = vmatpush1.bf16.msra.mxu0 0
    %1194 = vmatprep.subr.bf16.mxu0 0
    %1195 = vmatpush1.bf16.msra.mxu0 0
    %1196 = vmatprep.subr.bf16.mxu0 0
    %1197 = vmatpush1.bf16.msra.mxu0 0
    %1198 = vmatprep.subr.bf16.mxu0 0
    %1199 = vmatpush1.bf16.msra.mxu0 0
    %1200 = vmatprep.subr.bf16.mxu0 0
    %1201 = vmatpush1.bf16.msra.mxu0 0
    %1202 = vmatprep.subr.bf16.mxu0 0
    %1203 = vmatpush1.bf16.msra.mxu0 0
    %1204 = vmatprep.subr.bf16.mxu0 0
    %1205 = vmatpush1.bf16.msra.mxu0 0
    %1206 = vmatprep.subr.bf16.mxu0 0
    %1207 = vmatpush1.bf16.msra.mxu0 0
    %1208 = vmatprep.subr.bf16.mxu0 0
    %1209 = vmatpush1.bf16.msra.mxu0 0
    %1210 = vmatprep.mubr.bf16.mxu0 0
    %1211 = vmatmul.mubr.bf16.gmra.mrb[0].mxu0 %v1167
    %v1212 = vpop.f32.mrb[0].mxu0
    %v1213 = vadd.f32 %v1130, %v1212
    %v1214 = vpop.f32.mrb[0].mxu0
    %v1215 = vpop.f32.mrb[0].mxu0
    %v1216 = vadd.f32 %v1133, %v1215
    %v1217 = vpop.f32.mrb[0].mxu0
    %1218 = vmatprep.mubr.bf16.mxu0 0
    %1219 = vmatmul.mubr.bf16.gmra.mrb[0].mxu0 %v1170
    %v1220 = vpop.f32.mrb[0].mxu0
    %v1221 = vadd.f32 %v1138, %v1220
    %v1222 = vpop.f32.mrb[0].mxu0
    %v1223 = vpop.f32.mrb[0].mxu0
    %v1224 = vadd.f32 %v1141, %v1223
    %v1225 = vpop.f32.mrb[0].mxu0
    %1226 = vmatprep.mubr.bf16.mxu0 0
    %1227 = vmatmul.mubr.bf16.gmra.mrb[0].mxu0 %v1173
    %v1228 = vpop.f32.mrb[0].mxu0
    %v1229 = vadd.f32 %v1146, %v1228
    %v1230 = vpop.f32.mrb[0].mxu0
    %v1231 = vpop.f32.mrb[0].mxu0
    %v1232 = vadd.f32 %v1149, %v1231
    %v1233 = vpop.f32.mrb[0].mxu0
    %1234 = vmatprep.mubr.bf16.mxu0 0
    %1235 = vmatmul.mubr.bf16.gmra.mrb[0].mxu0 %v1176
    %v1236 = vpop.f32.mrb[0].mxu0
    %v1237 = vadd.f32 %v1154, %v1236
    %v1238 = vpop.f32.mrb[0].mxu0
    %v1239 = vpop.f32.mrb[0].mxu0
    %v1240 = vadd.f32 %v1157, %v1239
    %v1241 = vpop.f32.mrb[0].mxu0
    %1242 = vdwg.mxu0
    %v1243 = vadd.f32 %v1213, %v245
    %v1244 = vadd.f32 %v1216, %v246
    %v1245 = vadd.f32 %v1221, %v247
    %v1246 = vadd.f32 %v1224, %v248
    %v1247 = vadd.f32 %v1229, %v249
    %v1248 = vadd.f32 %v1232, %v250
    %v1249 = vadd.f32 %v1237, %v251
    %v1250 = vadd.f32 %v1240, %v252
    %v1251 = vadd.f32 %v1243, %v92
    %v1252 = vadd.f32 %v1244, %v93
    %v1253 = vadd.f32 %v1245, %v94
    %v1254 = vadd.f32 %v1246, %v95
    %v1255 = vadd.f32 %v1247, %v96
    %v1256 = vadd.f32 %v1248, %v97
    %v1257 = vadd.f32 %v1249, %v98
    %v1258 = vadd.f32 %v1250, %v99
    %s1259 = scalar_lea.vmem %s12, %s100
    %v1260 = vld [vmem:[%s1259] sm:$0xff]
    %v1261 = vld [vmem:[%s1259 + $0x8] sm:$0xff]
    %v1262 = vld [vmem:[%s1259 + $0x10] sm:$0xff]
    %v1263 = vld [vmem:[%s1259 + $0x18] sm:$0xff]
    %s1264 = scalar_lea.vmem %s13, %s100
    %v1265 = vld [vmem:[%s1264] sm:$0xff]
    %v1266 = vld [vmem:[%s1264 + $0x8] sm:$0xff]
    %v1267 = vld [vmem:[%s1264 + $0x10] sm:$0xff]
    %v1268 = vld [vmem:[%s1264 + $0x18] sm:$0xff]
    %v1269 = vsel %vm111, %v1251, 0.0
    %v1270 = vsel %vm111, %v1252, 0.0
    %v1271 = vadd.f32 %v1269, %v1270
    %v1272 = vsel %vm111, %v1253, 0.0
    %v1273 = vadd.f32 %v1271, %v1272
    %v1274 = vsel %vm111, %v1254, 0.0
    %v1275 = vadd.f32 %v1273, %v1274
    %v1276 = vrot.slane %v1275, 4
    %v1277 = vadd.f32 %v1275, %v1276
    %v1278 = vrot.slane %v1277, 2
    %v1279 = vadd.f32 %v1277, %v1278
    %v1280 = vrot.slane %v1279, 1
    %v1281 = vadd.f32 %v1279, %v1280
    %v1282 = vsel %vm111, %v1255, 0.0
    %v1283 = vsel %vm111, %v1256, 0.0
    %v1284 = vadd.f32 %v1282, %v1283
    %v1285 = vsel %vm111, %v1257, 0.0
    %v1286 = vadd.f32 %v1284, %v1285
    %v1287 = vsel %vm111, %v1258, 0.0
    %v1288 = vadd.f32 %v1286, %v1287
    %v1289 = vrot.slane %v1288, 4
    %v1290 = vadd.f32 %v1288, %v1289
    %v1291 = vrot.slane %v1290, 2
    %v1292 = vadd.f32 %v1290, %v1291
    %v1293 = vrot.slane %v1292, 1
    %v1294 = vadd.f32 %v1292, %v1293
    %v1295 = vmul.f32 %v1281, %v138
    %v1296 = vmul.f32 %v1294, %v138
    %v1297 = vsub.f32 %v1251, %v1295
    %v1298 = vsub.f32 %v1252, %v1295
    %v1299 = vsub.f32 %v1253, %v1295
    %v1300 = vsub.f32 %v1254, %v1295
    %v1301 = vsub.f32 %v1255, %v1296
    %v1302 = vsub.f32 %v1256, %v1296
    %v1303 = vsub.f32 %v1257, %v1296
    %v1304 = vsub.f32 %v1258, %v1296
    %v1305 = vmul.f32 %v1297, %v1297
    %v1306 = vmul.f32 %v1298, %v1298
    %v1307 = vmul.f32 %v1299, %v1299
    %v1308 = vmul.f32 %v1300, %v1300
    %v1309 = vmul.f32 %v1301, %v1301
    %v1310 = vmul.f32 %v1302, %v1302
    %v1311 = vmul.f32 %v1303, %v1303
    %v1312 = vmul.f32 %v1304, %v1304
    %v1313 = vsel %vm111, %v1305, 0.0
    %v1314 = vsel %vm111, %v1306, 0.0
    %v1315 = vadd.f32 %v1313, %v1314
    %v1316 = vsel %vm111, %v1307, 0.0
    %v1317 = vadd.f32 %v1315, %v1316
    %v1318 = vsel %vm111, %v1308, 0.0
    %v1319 = vadd.f32 %v1317, %v1318
    %v1320 = vrot.slane %v1319, 4
    %v1321 = vadd.f32 %v1319, %v1320
    %v1322 = vrot.slane %v1321, 2
    %v1323 = vadd.f32 %v1321, %v1322
    %v1324 = vrot.slane %v1323, 1
    %v1325 = vadd.f32 %v1323, %v1324
    %v1326 = vsel %vm111, %v1309, 0.0
    %v1327 = vsel %vm111, %v1310, 0.0
    %v1328 = vadd.f32 %v1326, %v1327
    %v1329 = vsel %vm111, %v1311, 0.0
    %v1330 = vadd.f32 %v1328, %v1329
    %v1331 = vsel %vm111, %v1312, 0.0
    %v1332 = vadd.f32 %v1330, %v1331
    %v1333 = vrot.slane %v1332, 4
    %v1334 = vadd.f32 %v1332, %v1333
    %v1335 = vrot.slane %v1334, 2
    %v1336 = vadd.f32 %v1334, %v1335
    %v1337 = vrot.slane %v1336, 1
    %v1338 = vadd.f32 %v1336, %v1337
    %v1339 = vmul.f32 %v1325, %v138
    %v1340 = vmul.f32 %v1338, %v138
    %v1341 = vadd.f32 %v1339, 1e-06
    %v1342 = vadd.f32 %v1340, 1e-06
    %v1343 = vrsqrt.pop %v1341
    %v1344 = vrsqrt.pop %v1342
    %v1345 = vmul.f32 %v1297, %v1343
    %v1346 = vmul.f32 %v1298, %v1343
    %v1347 = vmul.f32 %v1299, %v1343
    %v1348 = vmul.f32 %v1300, %v1343
    %v1349 = vmul.f32 %v1301, %v1344
    %v1350 = vmul.f32 %v1302, %v1344
    %v1351 = vmul.f32 %v1303, %v1344
    %v1352 = vmul.f32 %v1304, %v1344
    %1354 = vset.pattern.permute.xlu0 0
    %1355 = vperm.xlu0 %1354, %v1260
    %v1356 = vpop.permute.xlu0 %1355
    %1359 = vset.pattern.permute.xlu0 0
    %1360 = vperm.xlu0 %1359, %v1261
    %v1361 = vpop.permute.xlu0 %1360
    %1364 = vset.pattern.permute.xlu0 0
    %1365 = vperm.xlu0 %1364, %v1262
    %v1366 = vpop.permute.xlu0 %1365
    %1369 = vset.pattern.permute.xlu0 0
    %1370 = vperm.xlu0 %1369, %v1263
    %v1371 = vpop.permute.xlu0 %1370
    %v1373 = vmul.f32 %v1345, %v1356
    %v1374 = vmul.f32 %v1346, %v1361
    %v1375 = vmul.f32 %v1347, %v1366
    %v1376 = vmul.f32 %v1348, %v1371
    %v1377 = vmul.f32 %v1349, %v1356
    %v1378 = vmul.f32 %v1350, %v1361
    %v1379 = vmul.f32 %v1351, %v1366
    %v1380 = vmul.f32 %v1352, %v1371
    %1382 = vset.pattern.permute.xlu0 0
    %1383 = vperm.xlu0 %1382, %v1265
    %v1384 = vpop.permute.xlu0 %1383
    %1387 = vset.pattern.permute.xlu0 0
    %1388 = vperm.xlu0 %1387, %v1266
    %v1389 = vpop.permute.xlu0 %1388
    %1392 = vset.pattern.permute.xlu0 0
    %1393 = vperm.xlu0 %1392, %v1267
    %v1394 = vpop.permute.xlu0 %1393
    %1397 = vset.pattern.permute.xlu0 0
    %1398 = vperm.xlu0 %1397, %v1268
    %v1399 = vpop.permute.xlu0 %1398
    %v1401 = vadd.f32 %v1373, %v1384
    %v1402 = vadd.f32 %v1374, %v1389
    %v1403 = vadd.f32 %v1375, %v1394
    %v1404 = vadd.f32 %v1376, %v1399
    %v1405 = vadd.f32 %v1377, %v1384
    %v1406 = vadd.f32 %v1378, %v1389
    %v1407 = vadd.f32 %v1379, %v1394
    %v1408 = vadd.f32 %v1380, %v1399
    %v1409 = vpack.c.bf16 %v1402, %v1401
    %v1410 = vpack.c.bf16 %v1404, %v1403
    %v1411 = vpack.c.bf16 %v1406, %v1405
    %v1412 = vpack.c.bf16 %v1408, %v1407
    %s1413 = smul.addr %s100, 4
    %s1414 = scalar_lea.vmem %s14, %s1413
    %v1415 = vld [vmem:[%s1414] sm:$0xf]
    %v1416 = vld [vmem:[%s1414 + $0x4] sm:$0xf]
    %v1417 = vld [vmem:[%s1414 + $0x8] sm:$0xf]
    %v1418 = vld [vmem:[%s1414 + $0xc] sm:$0xf]
    %v1419 = vld [vmem:[%s1414 + $0x10] sm:$0xf]
    %v1420 = vld [vmem:[%s1414 + $0x14] sm:$0xf]
    %v1421 = vld [vmem:[%s1414 + $0x18] sm:$0xf]
    %v1422 = vld [vmem:[%s1414 + $0x1c] sm:$0xf]
    %v1423 = vld [vmem:[%s1414 + $0x20] sm:$0xf]
    %v1424 = vld [vmem:[%s1414 + $0x24] sm:$0xf]
    %v1425 = vld [vmem:[%s1414 + $0x28] sm:$0xf]
    %v1426 = vld [vmem:[%s1414 + $0x2c] sm:$0xf]
    %v1427 = vld [vmem:[%s1414 + $0x30] sm:$0xf]
    %v1428 = vld [vmem:[%s1414 + $0x34] sm:$0xf]
    %v1429 = vld [vmem:[%s1414 + $0x38] sm:$0xf]
    %v1430 = vld [vmem:[%s1414 + $0x3c] sm:$0xf]
    %v1431 = vld [vmem:[%s1414 + $0x40] sm:$0xf]
    %v1432 = vld [vmem:[%s1414 + $0x44] sm:$0xf]
    %v1433 = vld [vmem:[%s1414 + $0x48] sm:$0xf]
    %v1434 = vld [vmem:[%s1414 + $0x4c] sm:$0xf]
    %v1435 = vld [vmem:[%s1414 + $0x50] sm:$0xf]
    %v1436 = vld [vmem:[%s1414 + $0x54] sm:$0xf]
    %v1437 = vld [vmem:[%s1414 + $0x58] sm:$0xf]
    %v1438 = vld [vmem:[%s1414 + $0x5c] sm:$0xf]
    %v1439 = vld [vmem:[%s1414 + $0x60] sm:$0xf]
    %v1440 = vld [vmem:[%s1414 + $0x64] sm:$0xf]
    %v1441 = vld [vmem:[%s1414 + $0x68] sm:$0xf]
    %v1442 = vld [vmem:[%s1414 + $0x6c] sm:$0xf]
    %v1443 = vld [vmem:[%s1414 + $0x70] sm:$0xf]
    %v1444 = vld [vmem:[%s1414 + $0x74] sm:$0xf]
    %v1445 = vld [vmem:[%s1414 + $0x78] sm:$0xf]
    %v1446 = vld [vmem:[%s1414 + $0x7c] sm:$0xf]
    %s1447 = smul.u32 %s87, 256
    %s1448 = scalar_lea.vmem %s15, %s1447
    %v1449 = vld [vmem:[%s1448] sm:$0xff]
    %v1450 = vld [vmem:[%s1448 + $0x8] sm:$0xff]
    %v1451 = vld [vmem:[%s1448 + $0x10] sm:$0xff]
    %v1452 = vld [vmem:[%s1448 + $0x18] sm:$0xff]
    %v1453 = vld [vmem:[%s1448 + $0x20] sm:$0xff]
    %v1454 = vld [vmem:[%s1448 + $0x28] sm:$0xff]
    %v1455 = vld [vmem:[%s1448 + $0x30] sm:$0xff]
    %v1456 = vld [vmem:[%s1448 + $0x38] sm:$0xff]
    %v1457 = vld [vmem:[%s1448 + $0x40] sm:$0xff]
    %v1458 = vld [vmem:[%s1448 + $0x48] sm:$0xff]
    %v1459 = vld [vmem:[%s1448 + $0x50] sm:$0xff]
    %v1460 = vld [vmem:[%s1448 + $0x58] sm:$0xff]
    %v1461 = vld [vmem:[%s1448 + $0x60] sm:$0xff]
    %v1462 = vld [vmem:[%s1448 + $0x68] sm:$0xff]
    %v1463 = vld [vmem:[%s1448 + $0x70] sm:$0xff]
    %v1464 = vld [vmem:[%s1448 + $0x78] sm:$0xff]
    %v1465 = vld [vmem:[%s1448 + $0x80] sm:$0xff]
    %v1466 = vld [vmem:[%s1448 + $0x88] sm:$0xff]
    %v1467 = vld [vmem:[%s1448 + $0x90] sm:$0xff]
    %v1468 = vld [vmem:[%s1448 + $0x98] sm:$0xff]
    %v1469 = vld [vmem:[%s1448 + $0xa0] sm:$0xff]
    %v1470 = vld [vmem:[%s1448 + $0xa8] sm:$0xff]
    %v1471 = vld [vmem:[%s1448 + $0xb0] sm:$0xff]
    %v1472 = vld [vmem:[%s1448 + $0xb8] sm:$0xff]
    %v1473 = vld [vmem:[%s1448 + $0xc0] sm:$0xff]
    %v1474 = vld [vmem:[%s1448 + $0xc8] sm:$0xff]
    %v1475 = vld [vmem:[%s1448 + $0xd0] sm:$0xff]
    %v1476 = vld [vmem:[%s1448 + $0xd8] sm:$0xff]
    %v1477 = vld [vmem:[%s1448 + $0xe0] sm:$0xff]
    %v1478 = vld [vmem:[%s1448 + $0xe8] sm:$0xff]
    %v1479 = vld [vmem:[%s1448 + $0xf0] sm:$0xff]
    %v1480 = vld [vmem:[%s1448 + $0xf8] sm:$0xff]
    %1482 = vset.pattern.permute.xlu0 0
    %1483 = vperm.xlu0 %1482, %v1449
    %v1484 = vpop.permute.xlu0 %1483
    %1487 = vset.pattern.permute.xlu0 0
    %1488 = vperm.xlu0 %1487, %v1450
    %v1489 = vpop.permute.xlu0 %1488
    %1492 = vset.pattern.permute.xlu0 0
    %1493 = vperm.xlu0 %1492, %v1451
    %v1494 = vpop.permute.xlu0 %1493
    %1497 = vset.pattern.permute.xlu0 0
    %1498 = vperm.xlu0 %1497, %v1452
    %v1499 = vpop.permute.xlu0 %1498
    %1502 = vset.pattern.permute.xlu0 0
    %1503 = vperm.xlu0 %1502, %v1453
    %v1504 = vpop.permute.xlu0 %1503
    %1507 = vset.pattern.permute.xlu0 0
    %1508 = vperm.xlu0 %1507, %v1454
    %v1509 = vpop.permute.xlu0 %1508
    %1512 = vset.pattern.permute.xlu0 0
    %1513 = vperm.xlu0 %1512, %v1455
    %v1514 = vpop.permute.xlu0 %1513
    %1517 = vset.pattern.permute.xlu0 0
    %1518 = vperm.xlu0 %1517, %v1456
    %v1519 = vpop.permute.xlu0 %1518
    %1522 = vset.pattern.permute.xlu0 0
    %1523 = vperm.xlu0 %1522, %v1457
    %v1524 = vpop.permute.xlu0 %1523
    %1527 = vset.pattern.permute.xlu0 0
    %1528 = vperm.xlu0 %1527, %v1458
    %v1529 = vpop.permute.xlu0 %1528
    %1532 = vset.pattern.permute.xlu0 0
    %1533 = vperm.xlu0 %1532, %v1459
    %v1534 = vpop.permute.xlu0 %1533
    %1537 = vset.pattern.permute.xlu0 0
    %1538 = vperm.xlu0 %1537, %v1460
    %v1539 = vpop.permute.xlu0 %1538
    %1542 = vset.pattern.permute.xlu0 0
    %1543 = vperm.xlu0 %1542, %v1461
    %v1544 = vpop.permute.xlu0 %1543
    %1547 = vset.pattern.permute.xlu0 0
    %1548 = vperm.xlu0 %1547, %v1462
    %v1549 = vpop.permute.xlu0 %1548
    %1552 = vset.pattern.permute.xlu0 0
    %1553 = vperm.xlu0 %1552, %v1463
    %v1554 = vpop.permute.xlu0 %1553
    %1557 = vset.pattern.permute.xlu0 0
    %1558 = vperm.xlu0 %1557, %v1464
    %v1559 = vpop.permute.xlu0 %1558
    %1562 = vset.pattern.permute.xlu0 0
    %1563 = vperm.xlu0 %1562, %v1465
    %v1564 = vpop.permute.xlu0 %1563
    %1567 = vset.pattern.permute.xlu0 0
    %1568 = vperm.xlu0 %1567, %v1466
    %v1569 = vpop.permute.xlu0 %1568
    %1572 = vset.pattern.permute.xlu0 0
    %1573 = vperm.xlu0 %1572, %v1467
    %v1574 = vpop.permute.xlu0 %1573
    %1577 = vset.pattern.permute.xlu0 0
    %1578 = vperm.xlu0 %1577, %v1468
    %v1579 = vpop.permute.xlu0 %1578
    %1582 = vset.pattern.permute.xlu0 0
    %1583 = vperm.xlu0 %1582, %v1469
    %v1584 = vpop.permute.xlu0 %1583
    %1587 = vset.pattern.permute.xlu0 0
    %1588 = vperm.xlu0 %1587, %v1470
    %v1589 = vpop.permute.xlu0 %1588
    %1592 = vset.pattern.permute.xlu0 0
    %1593 = vperm.xlu0 %1592, %v1471
    %v1594 = vpop.permute.xlu0 %1593
    %1597 = vset.pattern.permute.xlu0 0
    %1598 = vperm.xlu0 %1597, %v1472
    %v1599 = vpop.permute.xlu0 %1598
    %1602 = vset.pattern.permute.xlu0 0
    %1603 = vperm.xlu0 %1602, %v1473
    %v1604 = vpop.permute.xlu0 %1603
    %1607 = vset.pattern.permute.xlu0 0
    %1608 = vperm.xlu0 %1607, %v1474
    %v1609 = vpop.permute.xlu0 %1608
    %1612 = vset.pattern.permute.xlu0 0
    %1613 = vperm.xlu0 %1612, %v1475
    %v1614 = vpop.permute.xlu0 %1613
    %1617 = vset.pattern.permute.xlu0 0
    %1618 = vperm.xlu0 %1617, %v1476
    %v1619 = vpop.permute.xlu0 %1618
    %1622 = vset.pattern.permute.xlu0 0
    %1623 = vperm.xlu0 %1622, %v1477
    %v1624 = vpop.permute.xlu0 %1623
    %1627 = vset.pattern.permute.xlu0 0
    %1628 = vperm.xlu0 %1627, %v1478
    %v1629 = vpop.permute.xlu0 %1628
    %1632 = vset.pattern.permute.xlu0 0
    %1633 = vperm.xlu0 %1632, %v1479
    %v1634 = vpop.permute.xlu0 %1633
    %1637 = vset.pattern.permute.xlu0 0
    %1638 = vperm.xlu0 %1637, %v1480
    %v1639 = vpop.permute.xlu0 %1638
    %v1673 = vunpack.c.l.b16 %v1415
    %v1674 = vunpack.c.l.b16 %v1416
    %v1675 = vunpack.c.l.b16 %v1417
    %v1676 = vunpack.c.l.b16 %v1418
    %v1677 = vunpack.c.l.b16 %v1419
    %v1678 = vunpack.c.l.b16 %v1420
    %v1679 = vunpack.c.l.b16 %v1421
    %v1680 = vunpack.c.l.b16 %v1422
    %v1681 = vunpack.c.l.b16 %v1423
    %v1682 = vunpack.c.l.b16 %v1424
    %v1683 = vunpack.c.l.b16 %v1425
    %v1684 = vunpack.c.l.b16 %v1426
    %v1685 = vunpack.c.l.b16 %v1427
    %v1686 = vunpack.c.l.b16 %v1428
    %v1687 = vunpack.c.l.b16 %v1429
    %v1688 = vunpack.c.l.b16 %v1430
    %v1689 = vunpack.c.l.b16 %v1431
    %v1690 = vunpack.c.l.b16 %v1432
    %v1691 = vunpack.c.l.b16 %v1433
    %v1692 = vunpack.c.l.b16 %v1434
    %v1693 = vunpack.c.l.b16 %v1435
    %v1694 = vunpack.c.l.b16 %v1436
    %v1695 = vunpack.c.l.b16 %v1437
    %v1696 = vunpack.c.l.b16 %v1438
    %v1697 = vunpack.c.l.b16 %v1439
    %v1698 = vunpack.c.l.b16 %v1440
    %v1699 = vunpack.c.l.b16 %v1441
    %v1700 = vunpack.c.l.b16 %v1442
    %v1701 = vunpack.c.l.b16 %v1443
    %v1702 = vunpack.c.l.b16 %v1444
    %v1703 = vunpack.c.l.b16 %v1445
    %v1704 = vunpack.c.l.b16 %v1446
    %v1705 = vpack.c.b16 %v1674, %v1673
    %v1706 = vpack.c.b16 %v1676, %v1675
    %v1707 = vpack.c.b16 %v1678, %v1677
    %v1708 = vpack.c.b16 %v1680, %v1679
    %v1709 = vpack.c.b16 %v1682, %v1681
    %v1710 = vpack.c.b16 %v1684, %v1683
    %v1711 = vpack.c.b16 %v1686, %v1685
    %v1712 = vpack.c.b16 %v1688, %v1687
    %v1713 = vpack.c.b16 %v1690, %v1689
    %v1714 = vpack.c.b16 %v1692, %v1691
    %v1715 = vpack.c.b16 %v1694, %v1693
    %v1716 = vpack.c.b16 %v1696, %v1695
    %v1717 = vpack.c.b16 %v1698, %v1697
    %v1718 = vpack.c.b16 %v1700, %v1699
    %v1719 = vpack.c.b16 %v1702, %v1701
    %v1720 = vpack.c.b16 %v1704, %v1703
    %vm1721 = vcmask 523264
    %v1723 = vsel %vm1721, %v1705, 0
    %v1726 = vsel %vm1721, %v1706, 0
    %v1729 = vsel %vm1721, %v1707, 0
    %v1732 = vsel %vm1721, %v1708, 0
    %v1735 = vsel %vm1721, %v1709, 0
    %v1738 = vsel %vm1721, %v1710, 0
    %v1741 = vsel %vm1721, %v1711, 0
    %v1744 = vsel %vm1721, %v1712, 0
    %v1747 = vsel %vm1721, %v1713, 0
    %v1750 = vsel %vm1721, %v1714, 0
    %v1753 = vsel %vm1721, %v1715, 0
    %v1756 = vsel %vm1721, %v1716, 0
    %v1759 = vsel %vm1721, %v1717, 0
    %v1762 = vsel %vm1721, %v1718, 0
    %v1765 = vsel %vm1721, %v1719, 0
    %v1768 = vsel %vm1721, %v1720, 0
    %1770 = vmatprep.subr.bf16.mxu0 0
    %1771 = vmatpush1.bf16.msra.mxu0 %v1409
    %1772 = vmatprep.subr.bf16.mxu0 0
    %1773 = vmatpush1.bf16.msra.mxu0 %v1410
    %1774 = vmatprep.subr.bf16.mxu0 0
    %1775 = vmatpush1.bf16.msra.mxu0 %v1411
    %1776 = vmatprep.subr.bf16.mxu0 0
    %1777 = vmatpush1.bf16.msra.mxu0 %v1412
    %1778 = vmatprep.subr.bf16.mxu0 0
    %1779 = vmatpush1.bf16.msra.mxu0 0
    %1780 = vmatprep.subr.bf16.mxu0 0
    %1781 = vmatpush1.bf16.msra.mxu0 0
    %1782 = vmatprep.subr.bf16.mxu0 0
    %1783 = vmatpush1.bf16.msra.mxu0 0
    %1784 = vmatprep.subr.bf16.mxu0 0
    %1785 = vmatpush1.bf16.msra.mxu0 0
    %1786 = vmatprep.subr.bf16.mxu0 0
    %1787 = vmatpush1.bf16.msra.mxu0 0
    %1788 = vmatprep.subr.bf16.mxu0 0
    %1789 = vmatpush1.bf16.msra.mxu0 0
    %1790 = vmatprep.subr.bf16.mxu0 0
    %1791 = vmatpush1.bf16.msra.mxu0 0
    %1792 = vmatprep.subr.bf16.mxu0 0
    %1793 = vmatpush1.bf16.msra.mxu0 0
    %1794 = vmatprep.subr.bf16.mxu0 0
    %1795 = vmatpush1.bf16.msra.mxu0 0
    %1796 = vmatprep.subr.bf16.mxu0 0
    %1797 = vmatpush1.bf16.msra.mxu0 0
    %1798 = vmatprep.subr.bf16.mxu0 0
    %1799 = vmatpush1.bf16.msra.mxu0 0
    %1800 = vmatprep.subr.bf16.mxu0 0
    %1801 = vmatpush1.bf16.msra.mxu0 0
    %1802 = vmatprep.mubr.bf16.mxu0 0
    %1803 = vmatmul.mubr.bf16.gmra.mrb[0].mxu0 %v1723
    %v1804 = vpop.f32.mrb[0].mxu0
    %v1805 = vadd.f32 %v1484, %v1804
    %v1806 = vpop.f32.mrb[0].mxu0
    %v1807 = vpop.f32.mrb[0].mxu0
    %v1808 = vadd.f32 %v1489, %v1807
    %v1809 = vpop.f32.mrb[0].mxu0
    %1810 = vmatprep.mubr.bf16.mxu0 0
    %1811 = vmatmul.mubr.bf16.gmra.mrb[0].mxu0 %v1726
    %v1812 = vpop.f32.mrb[0].mxu0
    %v1813 = vadd.f32 %v1494, %v1812
    %v1814 = vpop.f32.mrb[0].mxu0
    %v1815 = vpop.f32.mrb[0].mxu0
    %v1816 = vadd.f32 %v1499, %v1815
    %v1817 = vpop.f32.mrb[0].mxu0
    %1818 = vmatprep.mubr.bf16.mxu0 0
    %1819 = vmatmul.mubr.bf16.gmra.mrb[0].mxu0 %v1729
    %v1820 = vpop.f32.mrb[0].mxu0
    %v1821 = vadd.f32 %v1504, %v1820
    %v1822 = vpop.f32.mrb[0].mxu0
    %v1823 = vpop.f32.mrb[0].mxu0
    %v1824 = vadd.f32 %v1509, %v1823
    %v1825 = vpop.f32.mrb[0].mxu0
    %1826 = vmatprep.mubr.bf16.mxu0 0
    %1827 = vmatmul.mubr.bf16.gmra.mrb[0].mxu0 %v1732
    %v1828 = vpop.f32.mrb[0].mxu0
    %v1829 = vadd.f32 %v1514, %v1828
    %v1830 = vpop.f32.mrb[0].mxu0
    %v1831 = vpop.f32.mrb[0].mxu0
    %v1832 = vadd.f32 %v1519, %v1831
    %v1833 = vpop.f32.mrb[0].mxu0
    %1834 = vmatprep.mubr.bf16.mxu0 0
    %1835 = vmatmul.mubr.bf16.gmra.mrb[0].mxu0 %v1735
    %v1836 = vpop.f32.mrb[0].mxu0
    %v1837 = vadd.f32 %v1524, %v1836
    %v1838 = vpop.f32.mrb[0].mxu0
    %v1839 = vpop.f32.mrb[0].mxu0
    %v1840 = vadd.f32 %v1529, %v1839
    %v1841 = vpop.f32.mrb[0].mxu0
    %1842 = vmatprep.mubr.bf16.mxu0 0
    %1843 = vmatmul.mubr.bf16.gmra.mrb[0].mxu0 %v1738
    %v1844 = vpop.f32.mrb[0].mxu0
    %v1845 = vadd.f32 %v1534, %v1844
    %v1846 = vpop.f32.mrb[0].mxu0
    %v1847 = vpop.f32.mrb[0].mxu0
    %v1848 = vadd.f32 %v1539, %v1847
    %v1849 = vpop.f32.mrb[0].mxu0
    %1850 = vmatprep.mubr.bf16.mxu0 0
    %1851 = vmatmul.mubr.bf16.gmra.mrb[0].mxu0 %v1741
    %v1852 = vpop.f32.mrb[0].mxu0
    %v1853 = vadd.f32 %v1544, %v1852
    %v1854 = vpop.f32.mrb[0].mxu0
    %v1855 = vpop.f32.mrb[0].mxu0
    %v1856 = vadd.f32 %v1549, %v1855
    %v1857 = vpop.f32.mrb[0].mxu0
    %1858 = vmatprep.mubr.bf16.mxu0 0
    %1859 = vmatmul.mubr.bf16.gmra.mrb[0].mxu0 %v1744
    %v1860 = vpop.f32.mrb[0].mxu0
    %v1861 = vadd.f32 %v1554, %v1860
    %v1862 = vpop.f32.mrb[0].mxu0
    %v1863 = vpop.f32.mrb[0].mxu0
    %v1864 = vadd.f32 %v1559, %v1863
    %v1865 = vpop.f32.mrb[0].mxu0
    %1866 = vmatprep.mubr.bf16.mxu0 0
    %1867 = vmatmul.mubr.bf16.gmra.mrb[0].mxu0 %v1747
    %v1868 = vpop.f32.mrb[0].mxu0
    %v1869 = vadd.f32 %v1564, %v1868
    %v1870 = vpop.f32.mrb[0].mxu0
    %v1871 = vpop.f32.mrb[0].mxu0
    %v1872 = vadd.f32 %v1569, %v1871
    %v1873 = vpop.f32.mrb[0].mxu0
    %1874 = vmatprep.mubr.bf16.mxu0 0
    %1875 = vmatmul.mubr.bf16.gmra.mrb[0].mxu0 %v1750
    %v1876 = vpop.f32.mrb[0].mxu0
    %v1877 = vadd.f32 %v1574, %v1876
    %v1878 = vpop.f32.mrb[0].mxu0
    %v1879 = vpop.f32.mrb[0].mxu0
    %v1880 = vadd.f32 %v1579, %v1879
    %v1881 = vpop.f32.mrb[0].mxu0
    %1882 = vmatprep.mubr.bf16.mxu0 0
    %1883 = vmatmul.mubr.bf16.gmra.mrb[0].mxu0 %v1753
    %v1884 = vpop.f32.mrb[0].mxu0
    %v1885 = vadd.f32 %v1584, %v1884
    %v1886 = vpop.f32.mrb[0].mxu0
    %v1887 = vpop.f32.mrb[0].mxu0
    %v1888 = vadd.f32 %v1589, %v1887
    %v1889 = vpop.f32.mrb[0].mxu0
    %1890 = vmatprep.mubr.bf16.mxu0 0
    %1891 = vmatmul.mubr.bf16.gmra.mrb[0].mxu0 %v1756
    %v1892 = vpop.f32.mrb[0].mxu0
    %v1893 = vadd.f32 %v1594, %v1892
    %v1894 = vpop.f32.mrb[0].mxu0
    %v1895 = vpop.f32.mrb[0].mxu0
    %v1896 = vadd.f32 %v1599, %v1895
    %v1897 = vpop.f32.mrb[0].mxu0
    %1898 = vmatprep.mubr.bf16.mxu0 0
    %1899 = vmatmul.mubr.bf16.gmra.mrb[0].mxu0 %v1759
    %v1900 = vpop.f32.mrb[0].mxu0
    %v1901 = vadd.f32 %v1604, %v1900
    %v1902 = vpop.f32.mrb[0].mxu0
    %v1903 = vpop.f32.mrb[0].mxu0
    %v1904 = vadd.f32 %v1609, %v1903
    %v1905 = vpop.f32.mrb[0].mxu0
    %1906 = vmatprep.mubr.bf16.mxu0 0
    %1907 = vmatmul.mubr.bf16.gmra.mrb[0].mxu0 %v1762
    %v1908 = vpop.f32.mrb[0].mxu0
    %v1909 = vadd.f32 %v1614, %v1908
    %v1910 = vpop.f32.mrb[0].mxu0
    %v1911 = vpop.f32.mrb[0].mxu0
    %v1912 = vadd.f32 %v1619, %v1911
    %v1913 = vpop.f32.mrb[0].mxu0
    %1914 = vmatprep.mubr.bf16.mxu0 0
    %1915 = vmatmul.mubr.bf16.gmra.mrb[0].mxu0 %v1765
    %v1916 = vpop.f32.mrb[0].mxu0
    %v1917 = vadd.f32 %v1624, %v1916
    %v1918 = vpop.f32.mrb[0].mxu0
    %v1919 = vpop.f32.mrb[0].mxu0
    %v1920 = vadd.f32 %v1629, %v1919
    %v1921 = vpop.f32.mrb[0].mxu0
    %1922 = vmatprep.mubr.bf16.mxu0 0
    %1923 = vmatmul.mubr.bf16.gmra.mrb[0].mxu0 %v1768
    %v1924 = vpop.f32.mrb[0].mxu0
    %v1925 = vadd.f32 %v1634, %v1924
    %v1926 = vpop.f32.mrb[0].mxu0
    %v1927 = vpop.f32.mrb[0].mxu0
    %v1928 = vadd.f32 %v1639, %v1927
    %v1929 = vpop.f32.mrb[0].mxu0
    %1930 = vdwg.mxu0
    %v1931 = vmul.f32 %v1805, 0.5
    %v1932 = vmul.f32 %v1808, 0.5
    %v1933 = vmul.f32 %v1813, 0.5
    %v1934 = vmul.f32 %v1816, 0.5
    %v1935 = vmul.f32 %v1821, 0.5
    %v1936 = vmul.f32 %v1824, 0.5
    %v1937 = vmul.f32 %v1829, 0.5
    %v1938 = vmul.f32 %v1832, 0.5
    %v1939 = vmul.f32 %v1837, 0.5
    %v1940 = vmul.f32 %v1840, 0.5
    %v1941 = vmul.f32 %v1845, 0.5
    %v1942 = vmul.f32 %v1848, 0.5
    %v1943 = vmul.f32 %v1853, 0.5
    %v1944 = vmul.f32 %v1856, 0.5
    %v1945 = vmul.f32 %v1861, 0.5
    %v1946 = vmul.f32 %v1864, 0.5
    %v1947 = vmul.f32 %v1869, 0.5
    %v1948 = vmul.f32 %v1872, 0.5
    %v1949 = vmul.f32 %v1877, 0.5
    %v1950 = vmul.f32 %v1880, 0.5
    %v1951 = vmul.f32 %v1885, 0.5
    %v1952 = vmul.f32 %v1888, 0.5
    %v1953 = vmul.f32 %v1893, 0.5
    %v1954 = vmul.f32 %v1896, 0.5
    %v1955 = vmul.f32 %v1901, 0.5
    %v1956 = vmul.f32 %v1904, 0.5
    %v1957 = vmul.f32 %v1909, 0.5
    %v1958 = vmul.f32 %v1912, 0.5
    %v1959 = vmul.f32 %v1917, 0.5
    %v1960 = vmul.f32 %v1920, 0.5
    %v1961 = vmul.f32 %v1925, 0.5
    %v1962 = vmul.f32 %v1928, 0.5
    %v1963 = vmul.f32 %v1805, 0.044715
    %v1964 = vmul.f32 %v1808, 0.044715
    %v1965 = vmul.f32 %v1813, 0.044715
    %v1966 = vmul.f32 %v1816, 0.044715
    %v1967 = vmul.f32 %v1821, 0.044715
    %v1968 = vmul.f32 %v1824, 0.044715
    %v1969 = vmul.f32 %v1829, 0.044715
    %v1970 = vmul.f32 %v1832, 0.044715
    %v1971 = vmul.f32 %v1837, 0.044715
    %v1972 = vmul.f32 %v1840, 0.044715
    %v1973 = vmul.f32 %v1845, 0.044715
    %v1974 = vmul.f32 %v1848, 0.044715
    %v1975 = vmul.f32 %v1853, 0.044715
    %v1976 = vmul.f32 %v1856, 0.044715
    %v1977 = vmul.f32 %v1861, 0.044715
    %v1978 = vmul.f32 %v1864, 0.044715
    %v1979 = vmul.f32 %v1869, 0.044715
    %v1980 = vmul.f32 %v1872, 0.044715
    %v1981 = vmul.f32 %v1877, 0.044715
    %v1982 = vmul.f32 %v1880, 0.044715
    %v1983 = vmul.f32 %v1885, 0.044715
    %v1984 = vmul.f32 %v1888, 0.044715
    %v1985 = vmul.f32 %v1893, 0.044715
    %v1986 = vmul.f32 %v1896, 0.044715
    %v1987 = vmul.f32 %v1901, 0.044715
    %v1988 = vmul.f32 %v1904, 0.044715
    %v1989 = vmul.f32 %v1909, 0.044715
    %v1990 = vmul.f32 %v1912, 0.044715
    %v1991 = vmul.f32 %v1917, 0.044715
    %v1992 = vmul.f32 %v1920, 0.044715
    %v1993 = vmul.f32 %v1925, 0.044715
    %v1994 = vmul.f32 %v1928, 0.044715
    %v1995 = vmul.f32 %v1963, %v1805
    %v1996 = vmul.f32 %v1964, %v1808
    %v1997 = vmul.f32 %v1965, %v1813
    %v1998 = vmul.f32 %v1966, %v1816
    %v1999 = vmul.f32 %v1967, %v1821
    %v2000 = vmul.f32 %v1968, %v1824
    %v2001 = vmul.f32 %v1969, %v1829
    %v2002 = vmul.f32 %v1970, %v1832
    %v2003 = vmul.f32 %v1971, %v1837
    %v2004 = vmul.f32 %v1972, %v1840
    %v2005 = vmul.f32 %v1973, %v1845
    %v2006 = vmul.f32 %v1974, %v1848
    %v2007 = vmul.f32 %v1975, %v1853
    %v2008 = vmul.f32 %v1976, %v1856
    %v2009 = vmul.f32 %v1977, %v1861
    %v2010 = vmul.f32 %v1978, %v1864
    %v2011 = vmul.f32 %v1979, %v1869
    %v2012 = vmul.f32 %v1980, %v1872
    %v2013 = vmul.f32 %v1981, %v1877
    %v2014 = vmul.f32 %v1982, %v1880
    %v2015 = vmul.f32 %v1983, %v1885
    %v2016 = vmul.f32 %v1984, %v1888
    %v2017 = vmul.f32 %v1985, %v1893
    %v2018 = vmul.f32 %v1986, %v1896
    %v2019 = vmul.f32 %v1987, %v1901
    %v2020 = vmul.f32 %v1988, %v1904
    %v2021 = vmul.f32 %v1989, %v1909
    %v2022 = vmul.f32 %v1990, %v1912
    %v2023 = vmul.f32 %v1991, %v1917
    %v2024 = vmul.f32 %v1992, %v1920
    %v2025 = vmul.f32 %v1993, %v1925
    %v2026 = vmul.f32 %v1994, %v1928
    %v2027 = vmul.f32 %v1995, %v1805
    %v2028 = vmul.f32 %v1996, %v1808
    %v2029 = vmul.f32 %v1997, %v1813
    %v2030 = vmul.f32 %v1998, %v1816
    %v2031 = vmul.f32 %v1999, %v1821
    %v2032 = vmul.f32 %v2000, %v1824
    %v2033 = vmul.f32 %v2001, %v1829
    %v2034 = vmul.f32 %v2002, %v1832
    %v2035 = vmul.f32 %v2003, %v1837
    %v2036 = vmul.f32 %v2004, %v1840
    %v2037 = vmul.f32 %v2005, %v1845
    %v2038 = vmul.f32 %v2006, %v1848
    %v2039 = vmul.f32 %v2007, %v1853
    %v2040 = vmul.f32 %v2008, %v1856
    %v2041 = vmul.f32 %v2009, %v1861
    %v2042 = vmul.f32 %v2010, %v1864
    %v2043 = vmul.f32 %v2011, %v1869
    %v2044 = vmul.f32 %v2012, %v1872
    %v2045 = vmul.f32 %v2013, %v1877
    %v2046 = vmul.f32 %v2014, %v1880
    %v2047 = vmul.f32 %v2015, %v1885
    %v2048 = vmul.f32 %v2016, %v1888
    %v2049 = vmul.f32 %v2017, %v1893
    %v2050 = vmul.f32 %v2018, %v1896
    %v2051 = vmul.f32 %v2019, %v1901
    %v2052 = vmul.f32 %v2020, %v1904
    %v2053 = vmul.f32 %v2021, %v1909
    %v2054 = vmul.f32 %v2022, %v1912
    %v2055 = vmul.f32 %v2023, %v1917
    %v2056 = vmul.f32 %v2024, %v1920
    %v2057 = vmul.f32 %v2025, %v1925
    %v2058 = vmul.f32 %v2026, %v1928
    %v2059 = vadd.f32 %v1805, %v2027
    %v2060 = vadd.f32 %v1808, %v2028
    %v2061 = vadd.f32 %v1813, %v2029
    %v2062 = vadd.f32 %v1816, %v2030
    %v2063 = vadd.f32 %v1821, %v2031
    %v2064 = vadd.f32 %v1824, %v2032
    %v2065 = vadd.f32 %v1829, %v2033
    %v2066 = vadd.f32 %v1832, %v2034
    %v2067 = vadd.f32 %v1837, %v2035
    %v2068 = vadd.f32 %v1840, %v2036
    %v2069 = vadd.f32 %v1845, %v2037
    %v2070 = vadd.f32 %v1848, %v2038
    %v2071 = vadd.f32 %v1853, %v2039
    %v2072 = vadd.f32 %v1856, %v2040
    %v2073 = vadd.f32 %v1861, %v2041
    %v2074 = vadd.f32 %v1864, %v2042
    %v2075 = vadd.f32 %v1869, %v2043
    %v2076 = vadd.f32 %v1872, %v2044
    %v2077 = vadd.f32 %v1877, %v2045
    %v2078 = vadd.f32 %v1880, %v2046
    %v2079 = vadd.f32 %v1885, %v2047
    %v2080 = vadd.f32 %v1888, %v2048
    %v2081 = vadd.f32 %v1893, %v2049
    %v2082 = vadd.f32 %v1896, %v2050
    %v2083 = vadd.f32 %v1901, %v2051
    %v2084 = vadd.f32 %v1904, %v2052
    %v2085 = vadd.f32 %v1909, %v2053
    %v2086 = vadd.f32 %v1912, %v2054
    %v2087 = vadd.f32 %v1917, %v2055
    %v2088 = vadd.f32 %v1920, %v2056
    %v2089 = vadd.f32 %v1925, %v2057
    %v2090 = vadd.f32 %v1928, %v2058
    %v2091 = vmul.f32 %v2059, 0.7978846
    %v2092 = vmul.f32 %v2060, 0.7978846
    %v2093 = vmul.f32 %v2061, 0.7978846
    %v2094 = vmul.f32 %v2062, 0.7978846
    %v2095 = vmul.f32 %v2063, 0.7978846
    %v2096 = vmul.f32 %v2064, 0.7978846
    %v2097 = vmul.f32 %v2065, 0.7978846
    %v2098 = vmul.f32 %v2066, 0.7978846
    %v2099 = vmul.f32 %v2067, 0.7978846
    %v2100 = vmul.f32 %v2068, 0.7978846
    %v2101 = vmul.f32 %v2069, 0.7978846
    %v2102 = vmul.f32 %v2070, 0.7978846
    %v2103 = vmul.f32 %v2071, 0.7978846
    %v2104 = vmul.f32 %v2072, 0.7978846
    %v2105 = vmul.f32 %v2073, 0.7978846
    %v2106 = vmul.f32 %v2074, 0.7978846
    %v2107 = vmul.f32 %v2075, 0.7978846
    %v2108 = vmul.f32 %v2076, 0.7978846
    %v2109 = vmul.f32 %v2077, 0.7978846
    %v2110 = vmul.f32 %v2078, 0.7978846
    %v2111 = vmul.f32 %v2079, 0.7978846
    %v2112 = vmul.f32 %v2080, 0.7978846
    %v2113 = vmul.f32 %v2081, 0.7978846
    %v2114 = vmul.f32 %v2082, 0.7978846
    %v2115 = vmul.f32 %v2083, 0.7978846
    %v2116 = vmul.f32 %v2084, 0.7978846
    %v2117 = vmul.f32 %v2085, 0.7978846
    %v2118 = vmul.f32 %v2086, 0.7978846
    %v2119 = vmul.f32 %v2087, 0.7978846
    %v2120 = vmul.f32 %v2088, 0.7978846
    %v2121 = vmul.f32 %v2089, 0.7978846
    %v2122 = vmul.f32 %v2090, 0.7978846
    %v2123 = vtanh.pop %v2091
    %v2124 = vtanh.pop %v2092
    %v2125 = vtanh.pop %v2093
    %v2126 = vtanh.pop %v2094
    %v2127 = vtanh.pop %v2095
    %v2128 = vtanh.pop %v2096
    %v2129 = vtanh.pop %v2097
    %v2130 = vtanh.pop %v2098
    %v2131 = vtanh.pop %v2099
    %v2132 = vtanh.pop %v2100
    %v2133 = vtanh.pop %v2101
    %v2134 = vtanh.pop %v2102
    %v2135 = vtanh.pop %v2103
    %v2136 = vtanh.pop %v2104
    %v2137 = vtanh.pop %v2105
    %v2138 = vtanh.pop %v2106
    %v2139 = vtanh.pop %v2107
    %v2140 = vtanh.pop %v2108
    %v2141 = vtanh.pop %v2109
    %v2142 = vtanh.pop %v2110
    %v2143 = vtanh.pop %v2111
    %v2144 = vtanh.pop %v2112
    %v2145 = vtanh.pop %v2113
    %v2146 = vtanh.pop %v2114
    %v2147 = vtanh.pop %v2115
    %v2148 = vtanh.pop %v2116
    %v2149 = vtanh.pop %v2117
    %v2150 = vtanh.pop %v2118
    %v2151 = vtanh.pop %v2119
    %v2152 = vtanh.pop %v2120
    %v2153 = vtanh.pop %v2121
    %v2154 = vtanh.pop %v2122
    %v2155 = vadd.f32 %v2123, 1.0
    %v2156 = vadd.f32 %v2124, 1.0
    %v2157 = vadd.f32 %v2125, 1.0
    %v2158 = vadd.f32 %v2126, 1.0
    %v2159 = vadd.f32 %v2127, 1.0
    %v2160 = vadd.f32 %v2128, 1.0
    %v2161 = vadd.f32 %v2129, 1.0
    %v2162 = vadd.f32 %v2130, 1.0
    %v2163 = vadd.f32 %v2131, 1.0
    %v2164 = vadd.f32 %v2132, 1.0
    %v2165 = vadd.f32 %v2133, 1.0
    %v2166 = vadd.f32 %v2134, 1.0
    %v2167 = vadd.f32 %v2135, 1.0
    %v2168 = vadd.f32 %v2136, 1.0
    %v2169 = vadd.f32 %v2137, 1.0
    %v2170 = vadd.f32 %v2138, 1.0
    %v2171 = vadd.f32 %v2139, 1.0
    %v2172 = vadd.f32 %v2140, 1.0
    %v2173 = vadd.f32 %v2141, 1.0
    %v2174 = vadd.f32 %v2142, 1.0
    %v2175 = vadd.f32 %v2143, 1.0
    %v2176 = vadd.f32 %v2144, 1.0
    %v2177 = vadd.f32 %v2145, 1.0
    %v2178 = vadd.f32 %v2146, 1.0
    %v2179 = vadd.f32 %v2147, 1.0
    %v2180 = vadd.f32 %v2148, 1.0
    %v2181 = vadd.f32 %v2149, 1.0
    %v2182 = vadd.f32 %v2150, 1.0
    %v2183 = vadd.f32 %v2151, 1.0
    %v2184 = vadd.f32 %v2152, 1.0
    %v2185 = vadd.f32 %v2153, 1.0
    %v2186 = vadd.f32 %v2154, 1.0
    %v2187 = vmul.f32 %v1931, %v2155
    %v2188 = vmul.f32 %v1932, %v2156
    %v2189 = vmul.f32 %v1933, %v2157
    %v2190 = vmul.f32 %v1934, %v2158
    %v2191 = vmul.f32 %v1935, %v2159
    %v2192 = vmul.f32 %v1936, %v2160
    %v2193 = vmul.f32 %v1937, %v2161
    %v2194 = vmul.f32 %v1938, %v2162
    %v2195 = vmul.f32 %v1939, %v2163
    %v2196 = vmul.f32 %v1940, %v2164
    %v2197 = vmul.f32 %v1941, %v2165
    %v2198 = vmul.f32 %v1942, %v2166
    %v2199 = vmul.f32 %v1943, %v2167
    %v2200 = vmul.f32 %v1944, %v2168
    %v2201 = vmul.f32 %v1945, %v2169
    %v2202 = vmul.f32 %v1946, %v2170
    %v2203 = vmul.f32 %v1947, %v2171
    %v2204 = vmul.f32 %v1948, %v2172
    %v2205 = vmul.f32 %v1949, %v2173
    %v2206 = vmul.f32 %v1950, %v2174
    %v2207 = vmul.f32 %v1951, %v2175
    %v2208 = vmul.f32 %v1952, %v2176
    %v2209 = vmul.f32 %v1953, %v2177
    %v2210 = vmul.f32 %v1954, %v2178
    %v2211 = vmul.f32 %v1955, %v2179
    %v2212 = vmul.f32 %v1956, %v2180
    %v2213 = vmul.f32 %v1957, %v2181
    %v2214 = vmul.f32 %v1958, %v2182
    %v2215 = vmul.f32 %v1959, %v2183
    %v2216 = vmul.f32 %v1960, %v2184
    %v2217 = vmul.f32 %v1961, %v2185
    %v2218 = vmul.f32 %v1962, %v2186
    %s2219 = smul.addr %s415, 4
    %s2220 = scalar_lea.vmem %s16, %s2219
    %v2221 = vld [vmem:[%s2220] sm:$0xff]
    %v2222 = vld [vmem:[%s2220 + $0x8] sm:$0xff]
    %v2223 = vld [vmem:[%s2220 + $0x10] sm:$0xff]
    %v2224 = vld [vmem:[%s2220 + $0x18] sm:$0xff]
    %v2225 = vld [vmem:[%s2220 + $0x20] sm:$0xff]
    %v2226 = vld [vmem:[%s2220 + $0x28] sm:$0xff]
    %v2227 = vld [vmem:[%s2220 + $0x30] sm:$0xff]
    %v2228 = vld [vmem:[%s2220 + $0x38] sm:$0xff]
    %v2229 = vpack.c.bf16 %v2188, %v2187
    %v2230 = vpack.c.bf16 %v2190, %v2189
    %v2231 = vpack.c.bf16 %v2192, %v2191
    %v2232 = vpack.c.bf16 %v2194, %v2193
    %v2233 = vpack.c.bf16 %v2196, %v2195
    %v2234 = vpack.c.bf16 %v2198, %v2197
    %v2235 = vpack.c.bf16 %v2200, %v2199
    %v2236 = vpack.c.bf16 %v2202, %v2201
    %v2237 = vpack.c.bf16 %v2204, %v2203
    %v2238 = vpack.c.bf16 %v2206, %v2205
    %v2239 = vpack.c.bf16 %v2208, %v2207
    %v2240 = vpack.c.bf16 %v2210, %v2209
    %v2241 = vpack.c.bf16 %v2212, %v2211
    %v2242 = vpack.c.bf16 %v2214, %v2213
    %v2243 = vpack.c.bf16 %v2216, %v2215
    %v2244 = vpack.c.bf16 %v2218, %v2217
    %s2245 = smul.u32 %s87, 64
    %s2246 = scalar_lea.vmem %s17, %s2245
    %v2247 = vld [vmem:[%s2246] sm:$0xff]
    %v2248 = vld [vmem:[%s2246 + $0x8] sm:$0xff]
    %v2249 = vld [vmem:[%s2246 + $0x10] sm:$0xff]
    %v2250 = vld [vmem:[%s2246 + $0x18] sm:$0xff]
    %v2251 = vld [vmem:[%s2246 + $0x20] sm:$0xff]
    %v2252 = vld [vmem:[%s2246 + $0x28] sm:$0xff]
    %v2253 = vld [vmem:[%s2246 + $0x30] sm:$0xff]
    %v2254 = vld [vmem:[%s2246 + $0x38] sm:$0xff]
    %2256 = vset.pattern.permute.xlu0 0
    %2257 = vperm.xlu0 %2256, %v2247
    %v2258 = vpop.permute.xlu0 %2257
    %2261 = vset.pattern.permute.xlu0 0
    %2262 = vperm.xlu0 %2261, %v2248
    %v2263 = vpop.permute.xlu0 %2262
    %2266 = vset.pattern.permute.xlu0 0
    %2267 = vperm.xlu0 %2266, %v2249
    %v2268 = vpop.permute.xlu0 %2267
    %2271 = vset.pattern.permute.xlu0 0
    %2272 = vperm.xlu0 %2271, %v2250
    %v2273 = vpop.permute.xlu0 %2272
    %2276 = vset.pattern.permute.xlu0 0
    %2277 = vperm.xlu0 %2276, %v2251
    %v2278 = vpop.permute.xlu0 %2277
    %2281 = vset.pattern.permute.xlu0 0
    %2282 = vperm.xlu0 %2281, %v2252
    %v2283 = vpop.permute.xlu0 %2282
    %2286 = vset.pattern.permute.xlu0 0
    %2287 = vperm.xlu0 %2286, %v2253
    %v2288 = vpop.permute.xlu0 %2287
    %2291 = vset.pattern.permute.xlu0 0
    %2292 = vperm.xlu0 %2291, %v2254
    %v2293 = vpop.permute.xlu0 %2292
    %v2303 = vunpack.c.l.b16 %v2221
    %v2304 = vunpack.c.h.b16 %v2221
    %v2305 = vunpack.c.l.b16 %v2222
    %v2306 = vunpack.c.h.b16 %v2222
    %v2307 = vunpack.c.l.b16 %v2223
    %v2308 = vunpack.c.h.b16 %v2223
    %v2309 = vunpack.c.l.b16 %v2224
    %v2310 = vunpack.c.h.b16 %v2224
    %v2311 = vunpack.c.l.b16 %v2225
    %v2312 = vunpack.c.h.b16 %v2225
    %v2313 = vunpack.c.l.b16 %v2226
    %v2314 = vunpack.c.h.b16 %v2226
    %v2315 = vunpack.c.l.b16 %v2227
    %v2316 = vunpack.c.h.b16 %v2227
    %v2317 = vunpack.c.l.b16 %v2228
    %v2318 = vunpack.c.h.b16 %v2228
    %v2319 = vpack.c.b16 %v2305, %v2303
    %v2320 = vpack.c.b16 %v2306, %v2304
    %v2321 = vpack.c.b16 %v2309, %v2307
    %v2322 = vpack.c.b16 %v2310, %v2308
    %v2323 = vpack.c.b16 %v2313, %v2311
    %v2324 = vpack.c.b16 %v2314, %v2312
    %v2325 = vpack.c.b16 %v2317, %v2315
    %v2326 = vpack.c.b16 %v2318, %v2316
    %2335 = vmatprep.subr.bf16.mxu0 0
    %2336 = vmatpush1.bf16.msra.mxu0 %v2229
    %2337 = vmatprep.subr.bf16.mxu0 0
    %2338 = vmatpush1.bf16.msra.mxu0 %v2230
    %2339 = vmatprep.subr.bf16.mxu0 0
    %2340 = vmatpush1.bf16.msra.mxu0 %v2231
    %2341 = vmatprep.subr.bf16.mxu0 0
    %2342 = vmatpush1.bf16.msra.mxu0 %v2232
    %2343 = vmatprep.subr.bf16.mxu0 0
    %2344 = vmatpush1.bf16.msra.mxu0 %v2233
    %2345 = vmatprep.subr.bf16.mxu0 0
    %2346 = vmatpush1.bf16.msra.mxu0 %v2234
    %2347 = vmatprep.subr.bf16.mxu0 0
    %2348 = vmatpush1.bf16.msra.mxu0 %v2235
    %2349 = vmatprep.subr.bf16.mxu0 0
    %2350 = vmatpush1.bf16.msra.mxu0 %v2236
    %2351 = vmatprep.subr.bf16.mxu0 0
    %2352 = vmatpush1.bf16.msra.mxu0 %v2237
    %2353 = vmatprep.subr.bf16.mxu0 0
    %2354 = vmatpush1.bf16.msra.mxu0 %v2238
    %2355 = vmatprep.subr.bf16.mxu0 0
    %2356 = vmatpush1.bf16.msra.mxu0 %v2239
    %2357 = vmatprep.subr.bf16.mxu0 0
    %2358 = vmatpush1.bf16.msra.mxu0 %v2240
    %2359 = vmatprep.subr.bf16.mxu0 0
    %2360 = vmatpush1.bf16.msra.mxu0 %v2241
    %2361 = vmatprep.subr.bf16.mxu0 0
    %2362 = vmatpush1.bf16.msra.mxu0 %v2242
    %2363 = vmatprep.subr.bf16.mxu0 0
    %2364 = vmatpush1.bf16.msra.mxu0 %v2243
    %2365 = vmatprep.subr.bf16.mxu0 0
    %2366 = vmatpush1.bf16.msra.mxu0 %v2244
    %2367 = vmatprep.mubr.bf16.mxu0 %v2320
    %2368 = vmatmul.mubr.bf16.gmra.mrb[0].mxu0 %v2319
    %v2369 = vpop.f32.mrb[0].mxu0
    %v2370 = vadd.f32 %v2258, %v2369
    %v2371 = vpop.f32.mrb[0].mxu0
    %v2372 = vpop.f32.mrb[0].mxu0
    %v2373 = vadd.f32 %v2263, %v2372
    %v2374 = vpop.f32.mrb[0].mxu0
    %2375 = vmatprep.mubr.bf16.mxu0 %v2322
    %2376 = vmatmul.mubr.bf16.gmra.mrb[0].mxu0 %v2321
    %v2377 = vpop.f32.mrb[0].mxu0
    %v2378 = vadd.f32 %v2268, %v2377
    %v2379 = vpop.f32.mrb[0].mxu0
    %v2380 = vpop.f32.mrb[0].mxu0
    %v2381 = vadd.f32 %v2273, %v2380
    %v2382 = vpop.f32.mrb[0].mxu0
    %2383 = vmatprep.mubr.bf16.mxu0 %v2324
    %2384 = vmatmul.mubr.bf16.gmra.mrb[0].mxu0 %v2323
    %v2385 = vpop.f32.mrb[0].mxu0
    %v2386 = vadd.f32 %v2278, %v2385
    %v2387 = vpop.f32.mrb[0].mxu0
    %v2388 = vpop.f32.mrb[0].mxu0
    %v2389 = vadd.f32 %v2283, %v2388
    %v2390 = vpop.f32.mrb[0].mxu0
    %2391 = vmatprep.mubr.bf16.mxu0 %v2326
    %2392 = vmatmul.mubr.bf16.gmra.mrb[0].mxu0 %v2325
    %v2393 = vpop.f32.mrb[0].mxu0
    %v2394 = vadd.f32 %v2288, %v2393
    %v2395 = vpop.f32.mrb[0].mxu0
    %v2396 = vpop.f32.mrb[0].mxu0
    %v2397 = vadd.f32 %v2293, %v2396
    %v2398 = vpop.f32.mrb[0].mxu0
    %2399 = vdwg.mxu0
    %v2400 = vadd.f32 %v2370, %v1251
    %v2401 = vadd.f32 %v2373, %v1252
    %v2402 = vadd.f32 %v2378, %v1253
    %v2403 = vadd.f32 %v2381, %v1254
    %v2404 = vadd.f32 %v2386, %v1255
    %v2405 = vadd.f32 %v2389, %v1256
    %v2406 = vadd.f32 %v2394, %v1257
    %v2407 = vadd.f32 %v2397, %v1258
  $region86: #{tpu_custom_call.1} parent=0 // loop_footer
    %s91 = sadd.s32 1, %s87
  $region87: #{tpu_custom_call.1} parent=0 // loop_footer_branch
    %86 = sbr.rel target = $region83
  $region88: #{tpu_custom_call.1} parent=0 // loop_exit
    _
  %v2408 = vld [vmem:[%s18] sm:$0xff]
  %v2409 = vld [vmem:[%s18 + $0x8] sm:$0xff]
  %v2410 = vld [vmem:[%s18 + $0x10] sm:$0xff]
  %v2411 = vld [vmem:[%s18 + $0x18] sm:$0xff]
  %v2412 = vld [vmem:[%s19] sm:$0xff]
  %v2413 = vld [vmem:[%s19 + $0x8] sm:$0xff]
  %v2414 = vld [vmem:[%s19 + $0x10] sm:$0xff]
  %v2415 = vld [vmem:[%s19 + $0x18] sm:$0xff]
  %vm2416 = vcmask 130048
  %v2417 = vsel %vm2416, %v92, 0.0
  %v2418 = vsel %vm2416, %v93, 0.0
  %v2419 = vadd.f32 %v2417, %v2418
  %v2420 = vsel %vm2416, %v94, 0.0
  %v2421 = vadd.f32 %v2419, %v2420
  %v2422 = vsel %vm2416, %v95, 0.0
  %v2423 = vadd.f32 %v2421, %v2422
  %v2424 = vrot.slane %v2423, 4
  %v2425 = vadd.f32 %v2423, %v2424
  %v2426 = vrot.slane %v2425, 2
  %v2427 = vadd.f32 %v2425, %v2426
  %v2428 = vrot.slane %v2427, 1
  %v2429 = vadd.f32 %v2427, %v2428
  %v2430 = vsel %vm2416, %v96, 0.0
  %v2431 = vsel %vm2416, %v97, 0.0
  %v2432 = vadd.f32 %v2430, %v2431
  %v2433 = vsel %vm2416, %v98, 0.0
  %v2434 = vadd.f32 %v2432, %v2433
  %v2435 = vsel %vm2416, %v99, 0.0
  %v2436 = vadd.f32 %v2434, %v2435
  %v2437 = vrot.slane %v2436, 4
  %v2438 = vadd.f32 %v2436, %v2437
  %v2439 = vrot.slane %v2438, 2
  %v2440 = vadd.f32 %v2438, %v2439
  %v2441 = vrot.slane %v2440, 1
  %v2442 = vadd.f32 %v2440, %v2441
  %v2443 = vrcp.pop 32.0
  %v2444 = vmul.f32 %v2429, %v2443
  %v2445 = vmul.f32 %v2442, %v2443
  %v2446 = vsub.f32 %v92, %v2444
  %v2447 = vsub.f32 %v93, %v2444
  %v2448 = vsub.f32 %v94, %v2444
  %v2449 = vsub.f32 %v95, %v2444
  %v2450 = vsub.f32 %v96, %v2445
  %v2451 = vsub.f32 %v97, %v2445
  %v2452 = vsub.f32 %v98, %v2445
  %v2453 = vsub.f32 %v99, %v2445
  %v2454 = vmul.f32 %v2446, %v2446
  %v2455 = vmul.f32 %v2447, %v2447
  %v2456 = vmul.f32 %v2448, %v2448
  %v2457 = vmul.f32 %v2449, %v2449
  %v2458 = vmul.f32 %v2450, %v2450
  %v2459 = vmul.f32 %v2451, %v2451
  %v2460 = vmul.f32 %v2452, %v2452
  %v2461 = vmul.f32 %v2453, %v2453
  %v2462 = vsel %vm2416, %v2454, 0.0
  %v2463 = vsel %vm2416, %v2455, 0.0
  %v2464 = vadd.f32 %v2462, %v2463
  %v2465 = vsel %vm2416, %v2456, 0.0
  %v2466 = vadd.f32 %v2464, %v2465
  %v2467 = vsel %vm2416, %v2457, 0.0
  %v2468 = vadd.f32 %v2466, %v2467
  %v2469 = vrot.slane %v2468, 4
  %v2470 = vadd.f32 %v2468, %v2469
  %v2471 = vrot.slane %v2470, 2
  %v2472 = vadd.f32 %v2470, %v2471
  %v2473 = vrot.slane %v2472, 1
  %v2474 = vadd.f32 %v2472, %v2473
  %v2475 = vsel %vm2416, %v2458, 0.0
  %v2476 = vsel %vm2416, %v2459, 0.0
  %v2477 = vadd.f32 %v2475, %v2476
  %v2478 = vsel %vm2416, %v2460, 0.0
  %v2479 = vadd.f32 %v2477, %v2478
  %v2480 = vsel %vm2416, %v2461, 0.0
  %v2481 = vadd.f32 %v2479, %v2480
  %v2482 = vrot.slane %v2481, 4
  %v2483 = vadd.f32 %v2481, %v2482
  %v2484 = vrot.slane %v2483, 2
  %v2485 = vadd.f32 %v2483, %v2484
  %v2486 = vrot.slane %v2485, 1
  %v2487 = vadd.f32 %v2485, %v2486
  %v2488 = vmul.f32 %v2474, %v2443
  %v2489 = vmul.f32 %v2487, %v2443
  %v2490 = vadd.f32 %v2488, 1e-06
  %v2491 = vadd.f32 %v2489, 1e-06
  %v2492 = vrsqrt.pop %v2490
  %v2493 = vrsqrt.pop %v2491
  %v2494 = vmul.f32 %v2446, %v2492
  %v2495 = vmul.f32 %v2447, %v2492
  %v2496 = vmul.f32 %v2448, %v2492
  %v2497 = vmul.f32 %v2449, %v2492
  %v2498 = vmul.f32 %v2450, %v2493
  %v2499 = vmul.f32 %v2451, %v2493
  %v2500 = vmul.f32 %v2452, %v2493
  %v2501 = vmul.f32 %v2453, %v2493
  %2503 = vset.pattern.permute.xlu0 0
  %2504 = vperm.xlu0 %2503, %v2408
  %v2505 = vpop.permute.xlu0 %2504
  %2508 = vset.pattern.permute.xlu0 0
  %2509 = vperm.xlu0 %2508, %v2409
  %v2510 = vpop.permute.xlu0 %2509
  %2513 = vset.pattern.permute.xlu0 0
  %2514 = vperm.xlu0 %2513, %v2410
  %v2515 = vpop.permute.xlu0 %2514
  %2518 = vset.pattern.permute.xlu0 0
  %2519 = vperm.xlu0 %2518, %v2411
  %v2520 = vpop.permute.xlu0 %2519
  %v2522 = vmul.f32 %v2494, %v2505
  %v2523 = vmul.f32 %v2495, %v2510
  %v2524 = vmul.f32 %v2496, %v2515
  %v2525 = vmul.f32 %v2497, %v2520
  %v2526 = vmul.f32 %v2498, %v2505
  %v2527 = vmul.f32 %v2499, %v2510
  %v2528 = vmul.f32 %v2500, %v2515
  %v2529 = vmul.f32 %v2501, %v2520
  %2531 = vset.pattern.permute.xlu0 0
  %2532 = vperm.xlu0 %2531, %v2412
  %v2533 = vpop.permute.xlu0 %2532
  %2536 = vset.pattern.permute.xlu0 0
  %2537 = vperm.xlu0 %2536, %v2413
  %v2538 = vpop.permute.xlu0 %2537
  %2541 = vset.pattern.permute.xlu0 0
  %2542 = vperm.xlu0 %2541, %v2414
  %v2543 = vpop.permute.xlu0 %2542
  %2546 = vset.pattern.permute.xlu0 0
  %2547 = vperm.xlu0 %2546, %v2415
  %v2548 = vpop.permute.xlu0 %2547
  %v2550 = vadd.f32 %v2522, %v2533
  %v2551 = vadd.f32 %v2523, %v2538
  %v2552 = vadd.f32 %v2524, %v2543
  %v2553 = vadd.f32 %v2525, %v2548
  %v2554 = vadd.f32 %v2526, %v2533
  %v2555 = vadd.f32 %v2527, %v2538
  %v2556 = vadd.f32 %v2528, %v2543
  %v2557 = vadd.f32 %v2529, %v2548
  %2558 = vst.msk [vmem:[%s20] sm:$0xff] %vm2416, %v2550
  %2559 = vst.msk [vmem:[%s20 + $0x8] sm:$0xff] %vm2416, %v2551
  %2560 = vst.msk [vmem:[%s20 + $0x10] sm:$0xff] %vm2416, %v2552
  %2561 = vst.msk [vmem:[%s20 + $0x18] sm:$0xff] %vm2416, %v2553
  %2562 = vst.msk [vmem:[%s20 + $0x20] sm:$0xff] %vm2416, %v2554
  %2563 = vst.msk [vmem:[%s20 + $0x28] sm:$0xff] %vm2416, %v2555
  %2564 = vst.msk [vmem:[%s20 + $0x30] sm:$0xff] %vm2416, %v2556
  %2565 = vst.msk [vmem:[%s20 + $0x38] sm:$0xff] %vm2416, %v2557
  // Predicated region
  $region89: #{tpu_custom_call.1} parent=0 // pred_check
    _
  $region90: #{tpu_custom_call.1} parent=0 // pred_check_branch
    %2567 = sbr.rel (0) target = $region92
  $region91: #{tpu_custom_call.1} parent=0 // pred_region
    _
  $region92: #{tpu_custom_call.1} parent=0 // pred_fallthru
    _
  // Predicated region
  $region93: #{tpu_custom_call.1} parent=0 // pred_check
    _
  $region94: #{tpu_custom_call.1} parent=0 // pred_check_branch
    %2569 = sbr.rel (0) target = $region96
  $region95: #{tpu_custom_call.1} parent=0 // pred_region
    _
  $region96: #{tpu_custom_call.1} parent=0 // pred_fallthru
    _

</llo_original>
